<compile_context>
chip_gen: v7x
topology: tpu7x:2x2x1
jax: 0.10.0
libtpu: 0.0.40
codegen_flags: <defaults>
</compile_context>

<pallas_src>
import functools

import jax
import jax.numpy as jnp
from jax import lax
from jax.experimental import pallas as pl
from jax.experimental.pallas import tpu as pltpu


# ----------------------------------------------------------------------------
# helpers
# ----------------------------------------------------------------------------
def _round_up(x, m):
    return ((x + m - 1) // m) * m


def _pick_tile(dim, pref, granule):
    """Largest multiple of `granule` <= pref dividing round_up(dim, granule)."""
    if dim <= granule:
        return dim                       # full-extent block (always legal)
    padded = _round_up(dim, granule)
    t = min(_round_up(pref, granule), padded)
    t = (t // granule) * granule
    while padded % t != 0:
        t -= granule
    return t


def _pick_seq_tile(n, pref):
    """Largest multiple of 8 <= pref dividing n; fall back to the full extent."""
    t = (min(pref, n) // 8) * 8
    while t >= 8:
        if n % t == 0:
            return t
        t -= 8
    return n


def _vmem_cap_bytes():
    # Generation-aware VMEM ceiling (128 MiB on v5e/v6e, 64 MiB on v7x) with headroom.
    try:
        cap = int(pltpu.get_tpu_info().vmem_capacity_bytes)
    except Exception:
        cap = 64 << 20
    return max(cap - (16 << 20), 32 << 20)


# ----------------------------------------------------------------------------
# Pallas kernel 1: tiled linear  y = x @ W + b  (weight pre-transposed to [H, O])
# ----------------------------------------------------------------------------
def _linear_kernel(x_ref, w_ref, b_ref, o_ref, acc_ref):
    k = pl.program_id(2)

    @pl.when(k == 0)
    def _():
        acc_ref[...] = jnp.zeros_like(acc_ref)

    acc_ref[...] += jnp.dot(x_ref[...], w_ref[...],
                            preferred_element_type=jnp.float32)

    @pl.when(k == pl.num_programs(2) - 1)
    def _():
        o_ref[...] = (acc_ref[...] + b_ref[...]).astype(o_ref.dtype)


def linear_pallas(x, weight_t, bias, *, compute_dtype=jnp.bfloat16,
                  row_tile=None, col_tile=512, k_tile=512):
    """x: [R, H]; weight_t: [H, O] (pre-transposed at load time); bias: [O]."""
    R, H = x.shape
    O = weight_t.shape[1]
    out_dtype = x.dtype

    if compute_dtype is None:
        compute_dtype = x.dtype
    if row_tile is None:
        row_tile = 512 if jnp.dtype(compute_dtype).itemsize < 4 else 256

    x = x.astype(compute_dtype)
    weight_t = weight_t.astype(compute_dtype)

    tm = _pick_tile(R, row_tile, 8)
    tn = _pick_tile(O, col_tile, 128)
    tk = _pick_tile(H, k_tile, 128)
    Rp, Op, Hp = _round_up(R, tm), _round_up(O, tn), _round_up(H, tk)

    if (Rp, Hp) != (R, H):
        x = jnp.pad(x, ((0, Rp - R), (0, Hp - H)))
    if (Hp, Op) != (H, O):
        weight_t = jnp.pad(weight_t, ((0, Hp - H), (0, Op - O)))
    b2 = bias.astype(jnp.float32)
    if Op != O:
        b2 = jnp.pad(b2, (0, Op - O))
    b2 = b2.reshape(1, Op)

    in_sz = jnp.dtype(compute_dtype).itemsize
    out_sz = jnp.dtype(out_dtype).itemsize
    vmem_est = (2 * (tm * tk + tk * tn) * in_sz + 2 * tn * 4
                + 2 * tm * tn * out_sz + tm * tn * 4 + (2 << 20))
    vmem_limit = int(min(max(vmem_est, 32 << 20), _vmem_cap_bytes()))

    out = pl.pallas_call(
        _linear_kernel,
        out_shape=jax.ShapeDtypeStruct((Rp, Op), out_dtype),
        grid_spec=pltpu.PrefetchScalarGridSpec(
            num_scalar_prefetch=0,
            grid=(Rp // tm, Op // tn, Hp // tk),
            in_specs=[
                pl.BlockSpec((tm, tk), lambda i, j, k: (i, k)),
                pl.BlockSpec((tk, tn), lambda i, j, k: (k, j)),
                pl.BlockSpec((1, tn), lambda i, j, k: (0, j)),
            ],
            out_specs=pl.BlockSpec((tm, tn), lambda i, j, k: (i, j)),
            scratch_shapes=[pltpu.VMEM((tm, tn), jnp.float32)],
        ),
        compiler_params=pltpu.CompilerParams(
            dimension_semantics=("parallel", "parallel", "arbitrary"),
            vmem_limit_bytes=vmem_limit,
        ),
        cost_estimate=pl.CostEstimate(
            flops=2 * R * H * O,
            transcendentals=0,
            bytes_accessed=(R * H + H * O) * in_sz + O * 4 + R * O * out_sz,
        ),
    )(x, weight_t, b2)

    if (Rp, Op) != (R, O):
        out = out[:R, :O]
    return out


# ----------------------------------------------------------------------------
# RoPE: position ids + f32 cos / sign-folded-sin tables (HF tile-by-2 layout)
# ----------------------------------------------------------------------------
def get_position_ids(token_size, grid_size, position_mask=None):
    tokens_per_frame = grid_size * grid_size
    if position_mask is not None:
        # HF repeats the mask over heads but the values are identical per head.
        ids = position_mask.astype(jnp.int32)            # [B, N]
    else:
        ids = jnp.arange(token_size, dtype=jnp.int32)    # [N]
    frame_ids = ids // tokens_per_frame
    rem = ids - tokens_per_frame * frame_ids
    height_ids = rem // grid_size
    width_ids = rem - grid_size * height_ids
    return frame_ids, height_ids, width_ids


def build_rope_tables(pos_ids, d_dim, h_dim, w_dim, head_dim):
    """Per-token cos / sign-folded sin tables, f32, shape [Bt, N, head_dim]."""
    frame_ids, height_ids, width_ids = pos_ids

    def seg(pos, dim):
        half = dim // 2
        omega = 1.0 / (10000.0 ** (jnp.arange(half, dtype=jnp.float32) / float(half)))
        freq = pos.astype(jnp.float32)[..., None] * omega             # [..., half]
        freq = jnp.tile(freq, (1,) * (freq.ndim - 1) + (2,))          # HF tile-by-2 layout
        # pair rotation y[2i] = -x[2i+1], y[2i+1] = x[2i]: fold the sign into sin
        sign = jnp.where(jnp.arange(dim) % 2 == 0, -1.0, 1.0)
        return jnp.cos(freq), jnp.sin(freq) * sign

    cd, sd = seg(frame_ids, d_dim)
    ch, sh = seg(height_ids, h_dim)
    cw, sw = seg(width_ids, w_dim)
    cos_parts, sin_parts = [cd, ch, cw], [sd, sh, sw]
    rem = head_dim - (d_dim + h_dim + w_dim)
    if rem > 0:   # un-rotated remainder channels: cos=1, sin=0
        cos_parts.append(jnp.ones(frame_ids.shape + (rem,), jnp.float32))
        sin_parts.append(jnp.zeros(frame_ids.shape + (rem,), jnp.float32))
    cos = jnp.concatenate(cos_parts, axis=-1)
    sin = jnp.concatenate(sin_parts, axis=-1)
    if cos.ndim == 2:             # no position mask -> shared across batch
        cos, sin = cos[None], sin[None]      # [1, N, D]
    return cos, sin


def _rope_rotate(x, cos, sin_signed):
    """x: (..., T, D) f32; cos/sin_signed: (T, D) f32 (rotation sign pre-folded)."""
    d = x.shape[-1]
    parity = lax.broadcasted_iota(jnp.int32, x.shape, x.ndim - 1) % 2
    swapped = jnp.where(parity == 0,
                        pltpu.roll(x, d - 1, x.ndim - 1),   # even lane j -> x[j+1]
                        pltpu.roll(x, 1, x.ndim - 1))       # odd  lane j -> x[j-1]
    return x * cos + swapped * sin_signed


# ----------------------------------------------------------------------------
# Pallas kernel 2: flash-style multi-head attention with fused RoPE
#   grid = (batch, head_group, q_tiles, kv_tiles);   out layout [B, N, hidden]
# ----------------------------------------------------------------------------
def _flash_attn_kernel(q_ref, k_ref, v_ref, cos_q_ref, sin_q_ref,
                       cos_k_ref, sin_k_ref, o_ref,
                       q_s, m_s, l_s, acc_s,
                       *, scaling, compute_dtype, approx_recip):
    ki = pl.program_id(3)

    @pl.when(ki == 0)
    def _init():
        # RoPE + softmax scale folded into q once per (batch, head_group, q_tile).
        q = q_ref[0, 0].astype(jnp.float32)                         # (G, tq, D)
        q = _rope_rotate(q, cos_q_ref[0], sin_q_ref[0]) * scaling
        q_s[...] = q.astype(compute_dtype)
        m_s[...] = jnp.full_like(m_s, -jnp.inf)
        l_s[...] = jnp.zeros_like(l_s)
        acc_s[...] = jnp.zeros_like(acc_s)

    k = k_ref[0, 0].astype(jnp.float32)                             # (G, tk, D)
    k = _rope_rotate(k, cos_k_ref[0], sin_k_ref[0]).astype(compute_dtype)
    v = v_ref[0, 0].astype(compute_dtype)                           # (G, tk, D)

    s = lax.dot_general(q_s[...], k, (((2,), (2,)), ((0,), (0,))),
                        preferred_element_type=jnp.float32)         # (G, tq, tk)
    m_prev = m_s[...]
    m_new = jnp.maximum(m_prev, jnp.max(s, axis=-1, keepdims=True))
    alpha = jnp.exp(m_prev - m_new)
    p = jnp.exp(s - m_new)
    l_s[...] = alpha * l_s[...] + jnp.sum(p, axis=-1, keepdims=True)
    pv = lax.dot_general(p.astype(compute_dtype), v, (((2,), (1,)), ((0,), (0,))),
                         preferred_element_type=jnp.float32)        # (G, tq, D)
    acc_s[...] = alpha * acc_s[...] + pv
    m_s[...] = m_new

    @pl.when(ki == pl.num_programs(3) - 1)
    def _finalize():
        inv_l = pl.reciprocal(l_s[...], approx=approx_recip)        # (G, tq, 1)
        num_g, _, d = acc_s.shape
        for g in range(num_g):       # tiny static loop: heads packed along lanes
            o_ref[0, :, g * d:(g + 1) * d] = (acc_s[g] * inv_l[g]).astype(o_ref.dtype)


def flash_attention_pallas(qkv_t, cos_tab, sin_tab, *, scaling,
                           compute_dtype=jnp.bfloat16, q_tile=128, kv_tile=256):
    """qkv_t: [3, B, Hh, N, D]; cos/sin: [Bt, N, D] -> context [B, N, Hh*D]."""
    _, B, Hh, N, D = qkv_t.shape
    hidden = Hh * D
    if compute_dtype is None:
        compute_dtype = qkv_t.dtype
    out_dtype = qkv_t.dtype

    # Head-group size so the output block is lane-dense (G*D multiple of 128).
    G = min(max(1, 128 // D), Hh)
    while Hh % G != 0:
        G -= 1
    if (G * D) % 128 != 0 and G * D != hidden:
        G = Hh
    HG = Hh // G
    tq = _pick_seq_tile(N, q_tile)
    tk = _pick_seq_tile(N, kv_tile)
    bmul = 1 if cos_tab.shape[0] == B else 0
    approx = jnp.dtype(compute_dtype) != jnp.dtype(jnp.float32)

    kernel = functools.partial(_flash_attn_kernel, scaling=scaling,
                               compute_dtype=compute_dtype, approx_recip=approx)

    def q_map(b, hg, qi, ki): return (0, b, hg, qi, 0)
    def k_map(b, hg, qi, ki): return (1, b, hg, ki, 0)
    def v_map(b, hg, qi, ki): return (2, b, hg, ki, 0)
    def tq_map(b, hg, qi, ki): return (b * bmul, qi, 0)
    def tk_map(b, hg, qi, ki): return (b * bmul, ki, 0)
    def o_map(b, hg, qi, ki): return (b, qi, hg)

    itemsize = jnp.dtype(out_dtype).itemsize
    return pl.pallas_call(
        kernel,
        out_shape=jax.ShapeDtypeStruct((B, N, hidden), out_dtype),
        grid_spec=pltpu.PrefetchScalarGridSpec(
            num_scalar_prefetch=0,
            grid=(B, HG, N // tq, N // tk),
            in_specs=[
                pl.BlockSpec((1, 1, G, tq, D), q_map),
                pl.BlockSpec((1, 1, G, tk, D), k_map),
                pl.BlockSpec((1, 1, G, tk, D), v_map),
                pl.BlockSpec((1, tq, D), tq_map),
                pl.BlockSpec((1, tq, D), tq_map),
                pl.BlockSpec((1, tk, D), tk_map),
                pl.BlockSpec((1, tk, D), tk_map),
            ],
            out_specs=pl.BlockSpec((1, tq, G * D), o_map),
            scratch_shapes=[
                pltpu.VMEM((G, tq, D), compute_dtype),   # rotated+scaled q
                pltpu.VMEM((G, tq, 1), jnp.float32),     # running max
                pltpu.VMEM((G, tq, 1), jnp.float32),     # running sum
                pltpu.VMEM((G, tq, D), jnp.float32),     # accumulator
            ],
        ),
        compiler_params=pltpu.CompilerParams(
            dimension_semantics=("parallel", "parallel", "parallel", "arbitrary"),
        ),
        cost_estimate=pl.CostEstimate(
            flops=4 * B * Hh * N * N * D,
            transcendentals=B * Hh * N * N,
            bytes_accessed=(3 * B * Hh * N * D + B * N * hidden) * itemsize
            + 2 * cos_tab.size * 4,
        ),
    )(qkv_t, qkv_t, qkv_t, cos_tab, sin_tab, cos_tab, sin_tab)


# ----------------------------------------------------------------------------
# Full VJEPA2RopeAttention forward
# ----------------------------------------------------------------------------
def vjepa2_rope_attention_forward(hidden_states, params, *, num_heads, grid_size,
                                  position_mask=None, compute_dtype=jnp.bfloat16):
    B, N, hidden = hidden_states.shape
    head_dim = hidden // num_heads
    rot_dim = int(2 * (head_dim // 3 // 2))
    scaling = float(head_dim) ** -0.5

    # Fused QKV projection (single tiled Pallas matmul).
    x2d = hidden_states.reshape(B * N, hidden)
    qkv = linear_pallas(x2d, params["w_qkv_t"], params["b_qkv"],
                        compute_dtype=compute_dtype)
    # One XLA transpose to [3, B, Hh, N, D]; RoPE + scaling + head-merge happen
    # inside the flash attention kernel (no separate RoPE HBM passes).
    qkv_t = jnp.transpose(qkv.reshape(B, N, 3, num_heads, head_dim), (2, 0, 3, 1, 4))

    pos_ids = get_position_ids(N, grid_size, position_mask)
    cos_tab, sin_tab = build_rope_tables(pos_ids, rot_dim, rot_dim, rot_dim, head_dim)

    context = flash_attention_pallas(qkv_t, cos_tab, sin_tab, scaling=scaling,
                                     compute_dtype=compute_dtype)   # [B, N, hidden]

    out = linear_pallas(context.reshape(B * N, hidden), params["w_proj_t"],
                        params["b_proj"], compute_dtype=compute_dtype)
    return out.reshape(B, N, hidden)


# ----------------------------------------------------------------------------
# Pure-JAX reference (mirrors the PyTorch eager path)
# ----------------------------------------------------------------------------
def _ref_rotate(x, pos):
    D = x.shape[-1]
    omega = jnp.arange(D // 2, dtype=jnp.float32) / (D / 2.0)
    omega = 1.0 / (10000.0 ** omega)
    freq = pos.astype(jnp.float32)[..., None] * omega
    emb_sin = jnp.tile(jnp.sin(freq), (1,) * (freq.ndim - 1) + (2,))
    emb_cos = jnp.tile(jnp.cos(freq), (1,) * (freq.ndim - 1) + (2,))
    y = x.reshape(x.shape[:-1] + (D // 2, 2))
    y1, y2 = y[..., 0], y[..., 1]
    y = jnp.stack((-y2, y1), axis=-1).reshape(x.shape)
    return x * emb_cos + y * emb_sin


def _ref_apply_rope(qk, pos_ids, d_dim, h_dim, w_dim, head_dim):
    d_mask, h_mask, w_mask = pos_ids
    s = 0
    qkd = _ref_rotate(qk[..., s:s + d_dim], d_mask); s += d_dim
    qkh = _ref_rotate(qk[..., s:s + h_dim], h_mask); s += h_dim
    qkw = _ref_rotate(qk[..., s:s + w_dim], w_mask); s += w_dim
    if s < head_dim:
        return jnp.concatenate([qkd, qkh, qkw, qk[..., s:]], axis=-1)
    return jnp.concatenate([qkd, qkh, qkw], axis=-1)


def reference_forward(hidden_states, Wq, bq, Wk, bk, Wv, bv, Wp, bp, *,
                      num_heads, grid_size):
    B, N, hidden = hidden_states.shape
    head_dim = hidden // num_heads
    rot = int(2 * (head_dim // 3 // 2))
    scaling = float(head_dim) ** -0.5
    hi = lax.Precision.HIGHEST

    def proj(x, W, b):
        return jnp.einsum("bnh,oh->bno", x, W, precision=hi) + b

    def t4s(x):
        return jnp.transpose(x.reshape(B, N, num_heads, head_dim), (0, 2, 1, 3))

    q = t4s(proj(hidden_states, Wq, bq))
    k = t4s(proj(hidden_states, Wk, bk))
    v = t4s(proj(hidden_states, Wv, bv))
    pos_ids = get_position_ids(N, grid_size)
    k = _ref_apply_rope(k, pos_ids, rot, rot, rot, head_dim)
    q = _ref_apply_rope(q, pos_ids, rot, rot, rot, head_dim)
    s = jnp.einsum("bhqd,bhkd->bhqk", q, k, precision=hi) * scaling
    p = jax.nn.softmax(s.astype(jnp.float32), axis=-1).astype(q.dtype)
    ctx = jnp.einsum("bhqk,bhkd->bhqd", p, v, precision=hi)
    ctx = jnp.transpose(ctx, (0, 2, 1, 3)).reshape(B, N, hidden)
    return jnp.einsum("bnh,oh->bno", ctx, Wp, precision=hi) + bp


# ----------------------------------------------------------------------------
# Main
# ----------------------------------------------------------------------------
if __name__ == "__main__":
    # Small config consistent with VJEPA2RopeAttention:
    #   hidden_size=128, heads=2 (head_dim=64), crop=32/patch=8 -> grid_size=4,
    #   frames=8/tubelet=2 -> grid_depth=4, N = 4*4*4 = 64 tokens, batch=2.
    hidden_size = 128
    num_heads = 2
    crop_size, patch_size = 32, 8
    frames_per_clip, tubelet_size = 8, 2
    grid_size = crop_size // patch_size
    grid_depth = frames_per_clip // tubelet_size
    B = 2
    N = grid_depth * grid_size * grid_size  # 64

    key = jax.random.PRNGKey(0)
    ks = jax.random.split(key, 9)
    hidden_states = jax.random.normal(ks[0], (B, N, hidden_size), jnp.float32)
    Wq = jax.random.normal(ks[1], (hidden_size, hidden_size), jnp.float32) * 0.02
    Wk = jax.random.normal(ks[2], (hidden_size, hidden_size), jnp.float32) * 0.02
    Wv = jax.random.normal(ks[3], (hidden_size, hidden_size), jnp.float32) * 0.02
    Wp = jax.random.normal(ks[4], (hidden_size, hidden_size), jnp.float32) * 0.02
    bq = jax.random.normal(ks[5], (hidden_size,), jnp.float32) * 0.02
    bk = jax.random.normal(ks[6], (hidden_size,), jnp.float32) * 0.02
    bv = jax.random.normal(ks[7], (hidden_size,), jnp.float32) * 0.02
    bp = jax.random.normal(ks[8], (hidden_size,), jnp.float32) * 0.02

    # Fuse + transpose parameters once at "load time" ([H, O] layout, no per-call work).
    params = {
        "w_qkv_t": jnp.concatenate([Wq, Wk, Wv], axis=0).T,   # [hidden, 3*hidden]
        "b_qkv": jnp.concatenate([bq, bk, bv], axis=0),        # [3*hidden]
        "w_proj_t": Wp.T,                                       # [hidden, hidden]
        "b_proj": bp,                                           # [hidden]
    }

    fwd_bf16 = jax.jit(functools.partial(
        vjepa2_rope_attention_forward, num_heads=num_heads, grid_size=grid_size,
        compute_dtype=jnp.bfloat16))
    fwd_f32 = jax.jit(functools.partial(
        vjepa2_rope_attention_forward, num_heads=num_heads, grid_size=grid_size,
        compute_dtype=jnp.float32))

    out_bf16 = jax.block_until_ready(fwd_bf16(hidden_states, params))
    out_f32 = jax.block_until_ready(fwd_f32(hidden_states, params))

    ref = jax.block_until_ready(reference_forward(
        hidden_states, Wq, bq, Wk, bk, Wv, bv, Wp, bp,
        num_heads=num_heads, grid_size=grid_size))

    assert out_bf16.shape == (B, N, hidden_size), out_bf16.shape
    assert out_f32.shape == (B, N, hidden_size), out_f32.shape

    err32 = float(jnp.max(jnp.abs(out_f32 - ref)))
    assert jnp.allclose(out_f32, ref, atol=2e-3, rtol=2e-3), f"f32 max abs err {err32}"
    err16 = float(jnp.max(jnp.abs(out_bf16 - ref)))
    assert jnp.allclose(out_bf16, ref, atol=2e-2, rtol=2e-2), f"bf16 max abs err {err16}"

    print("KERNEL_OK")
</pallas_src>

<mosaic_0001>
module attributes {stable_mosaic.version = 11 : i64} {
  func.func @_linear_kernel(%arg0: i32, %arg1: i32, %arg2: i32, %arg3: memref<128x128xbf16, #tpu.memory_space<vmem>>, %arg4: memref<128x384xbf16, #tpu.memory_space<vmem>>, %arg5: memref<1x384xf32, #tpu.memory_space<vmem>>, %arg6: memref<128x384xf32, #tpu.memory_space<vmem>>, %arg7: memref<128x384xf32, #tpu.memory_space<vmem>>) attributes {dimension_semantics = [#tpu.dimension_semantics<parallel>, #tpu.dimension_semantics<parallel>, #tpu.dimension_semantics<arbitrary>], iteration_bounds = array<i64: 1, 1, 1>, scalar_prefetch = 0 : i64, scratch_operands = 1 : i64, tpu.core_type = #tpu.core_type<tc>, window_params = [{transform_indices = @transform_0, window_bounds = array<i64: 128, 128>}, {transform_indices = @transform_1, window_bounds = array<i64: 128, 384>}, {transform_indices = @transform_2, window_bounds = array<i64: 1, 384>}, {transform_indices = @transform_3, window_bounds = array<i64: 128, 384>}]} {
    %c0_i32 = arith.constant 0 : i32
    %0 = arith.cmpi eq, %arg2, %c0_i32 : i32
    %1 = arith.extui %0 : i1 to i32
    %c0_i32_0 = arith.constant 0 : i32
    %2 = arith.cmpi ne, %1, %c0_i32_0 : i32
    scf.if %2 {
      %cst_10 = arith.constant 0.000000e+00 : f32
      %12 = vector.broadcast %cst_10 : f32 to vector<128x384xf32>
      %c0_11 = arith.constant 0 : index
      %c0_12 = arith.constant 0 : index
      %13 = vector.load %arg7[%c0_11, %c0_12] : memref<128x384xf32, #tpu.memory_space<vmem>>, vector<128x384xf32>
      tpu.vector_store %arg7[%c0_11, %c0_12], %12 {strides = array<i32>} : memref<128x384xf32, #tpu.memory_space<vmem>>, vector<128x384xf32>,
    } else {
    }
    %c0 = arith.constant 0 : index
    %c0_1 = arith.constant 0 : index
    %3 = vector.load %arg7[%c0, %c0_1] : memref<128x384xf32, #tpu.memory_space<vmem>>, vector<128x384xf32>
    %c0_2 = arith.constant 0 : index
    %c0_3 = arith.constant 0 : index
    %4 = vector.load %arg3[%c0_2, %c0_3] : memref<128x128xbf16, #tpu.memory_space<vmem>>, vector<128x128xbf16>
    %c0_4 = arith.constant 0 : index
    %c0_5 = arith.constant 0 : index
    %5 = vector.load %arg4[%c0_4, %c0_5] : memref<128x384xbf16, #tpu.memory_space<vmem>>, vector<128x384xbf16>
    %cst = arith.constant dense<0.000000e+00> : vector<128x384xf32>
    %6 = tpu.matmul %4, %5, %cst {dimension_numbers = #tpu.dot_dimension_numbers<[1], [0], [0], [1], [0, 0, 1, 1], [], []>} : vector<128x128xbf16>, vector<128x384xbf16>, vector<128x384xf32> -> vector<128x384xf32>
    %7 = arith.addf %3, %6 : vector<128x384xf32>
    %c0_6 = arith.constant 0 : index
    %c0_7 = arith.constant 0 : index
    %8 = vector.load %arg7[%c0_6, %c0_7] : memref<128x384xf32, #tpu.memory_space<vmem>>, vector<128x384xf32>
    tpu.vector_store %arg7[%c0_6, %c0_7], %7 {strides = array<i32>} : memref<128x384xf32, #tpu.memory_space<vmem>>, vector<128x384xf32>,
    %c0_i32_8 = arith.constant 0 : i32
    %9 = arith.cmpi eq, %arg2, %c0_i32_8 : i32
    %10 = arith.extui %9 : i1 to i32
    %c0_i32_9 = arith.constant 0 : i32
    %11 = arith.cmpi ne, %10, %c0_i32_9 : i32
    scf.if %11 {
      %c0_10 = arith.constant 0 : index
      %c0_11 = arith.constant 0 : index
      %12 = vector.load %arg7[%c0_10, %c0_11] : memref<128x384xf32, #tpu.memory_space<vmem>>, vector<128x384xf32>
      %c0_12 = arith.constant 0 : index
      %c0_13 = arith.constant 0 : index
      %13 = vector.load %arg5[%c0_12, %c0_13] : memref<1x384xf32, #tpu.memory_space<vmem>>, vector<1x384xf32>
      %14 = vector.broadcast %13 : vector<1x384xf32> to vector<128x384xf32>
      %15 = arith.addf %12, %14 : vector<128x384xf32>
      %c0_14 = arith.constant 0 : index
      %c0_15 = arith.constant 0 : index
      %16 = vector.load %arg6[%c0_14, %c0_15] : memref<128x384xf32, #tpu.memory_space<vmem>>, vector<128x384xf32>
      tpu.vector_store %arg6[%c0_14, %c0_15], %15 {strides = array<i32>} : memref<128x384xf32, #tpu.memory_space<vmem>>, vector<128x384xf32>,
    } else {
    }
    return
  }
  func.func @transform_0(%arg0: i32, %arg1: i32, %arg2: i32) -> (i32, i32) {
    %c0_i32 = arith.constant 0 : i32
    return %arg0, %arg2 : i32, i32
  }
  func.func @transform_1(%arg0: i32, %arg1: i32, %arg2: i32) -> (i32, i32) {
    %c0_i32 = arith.constant 0 : i32
    return %arg2, %arg1 : i32, i32
  }
  func.func @transform_2(%arg0: i32, %arg1: i32, %arg2: i32) -> (i32, i32) {
    %c0_i32 = arith.constant 0 : i32
    %c0_i32_0 = arith.constant 0 : i32
    return %c0_i32, %arg1 : i32, i32
  }
  func.func @transform_3(%arg0: i32, %arg1: i32, %arg2: i32) -> (i32, i32) {
    %c0_i32 = arith.constant 0 : i32
    return %arg0, %arg1 : i32, i32
  }
}

module attributes {stable_mosaic.version = 11 : i64} {
  func.func @_flash_attn_kernel(%arg0: i32, %arg1: i32, %arg2: i32, %arg3: i32, %arg4: memref<1x1x2x64x64xf32, #tpu.memory_space<vmem>>, %arg5: memref<1x1x2x64x64xf32, #tpu.memory_space<vmem>>, %arg6: memref<1x1x2x64x64xf32, #tpu.memory_space<vmem>>, %arg7: memref<1x64x64xf32, #tpu.memory_space<vmem>>, %arg8: memref<1x64x64xf32, #tpu.memory_space<vmem>>, %arg9: memref<1x64x64xf32, #tpu.memory_space<vmem>>, %arg10: memref<1x64x64xf32, #tpu.memory_space<vmem>>, %arg11: memref<1x64x128xf32, #tpu.memory_space<vmem>>, %arg12: memref<2x64x64xbf16, #tpu.memory_space<vmem>>, %arg13: memref<2x64x1xf32, #tpu.memory_space<vmem>>, %arg14: memref<2x64x1xf32, #tpu.memory_space<vmem>>, %arg15: memref<2x64x64xf32, #tpu.memory_space<vmem>>) attributes {dimension_semantics = [#tpu.dimension_semantics<parallel>, #tpu.dimension_semantics<parallel>, #tpu.dimension_semantics<parallel>, #tpu.dimension_semantics<arbitrary>], iteration_bounds = array<i64: 2, 1, 1, 1>, scalar_prefetch = 0 : i64, scratch_operands = 4 : i64, tpu.core_type = #tpu.core_type<tc>, window_params = [{transform_indices = @transform_0, window_bounds = array<i64: 1, 1, 2, 64, 64>}, {transform_indices = @transform_1, window_bounds = array<i64: 1, 1, 2, 64, 64>}, {transform_indices = @transform_2, window_bounds = array<i64: 1, 1, 2, 64, 64>}, {transform_indices = @transform_3, window_bounds = array<i64: 1, 64, 64>}, {transform_indices = @transform_4, window_bounds = array<i64: 1, 64, 64>}, {transform_indices = @transform_5, window_bounds = array<i64: 1, 64, 64>}, {transform_indices = @transform_6, window_bounds = array<i64: 1, 64, 64>}, {transform_indices = @transform_7, window_bounds = array<i64: 1, 64, 128>}]} {
    %c0_i32 = arith.constant 0 : i32
    %0 = arith.cmpi eq, %arg3, %c0_i32 : i32
    %1 = arith.extui %0 : i1 to i32
    %c0_i32_0 = arith.constant 0 : i32
    %2 = arith.cmpi ne, %1, %c0_i32_0 : i32
    scf.if %2 {
      %c0_48 = arith.constant 0 : index
      %c0_49 = arith.constant 0 : index
      %c0_50 = arith.constant 0 : index
      %c0_51 = arith.constant 0 : index
      %c0_52 = arith.constant 0 : index
      %70 = vector.load %arg4[%c0_48, %c0_49, %c0_50, %c0_51, %c0_52] : memref<1x1x2x64x64xf32, #tpu.memory_space<vmem>>, vector<1x1x2x64x64xf32>
      %71 = vector.shape_cast %70 : vector<1x1x2x64x64xf32> to vector<2x64x64xf32>
      %c0_53 = arith.constant 0 : index
      %c0_54 = arith.constant 0 : index
      %c0_55 = arith.constant 0 : index
      %72 = vector.load %arg7[%c0_53, %c0_54, %c0_55] : memref<1x64x64xf32, #tpu.memory_space<vmem>>, vector<1x64x64xf32>
      %73 = vector.shape_cast %72 : vector<1x64x64xf32> to vector<64x64xf32>
      %c0_56 = arith.constant 0 : index
      %c0_57 = arith.constant 0 : index
      %c0_58 = arith.constant 0 : index
      %74 = vector.load %arg8[%c0_56, %c0_57, %c0_58] : memref<1x64x64xf32, #tpu.memory_space<vmem>>, vector<1x64x64xf32>
      %75 = vector.shape_cast %74 : vector<1x64x64xf32> to vector<64x64xf32>
      %76 = tpu.iota {dimensions = array<i32: 2>} : vector<2x64x64xi32>
      %c2_i32_59 = arith.constant 2 : i32
      %c0_i32_60 = arith.constant 0 : i32
      %77 = arith.cmpi eq, %c2_i32_59, %c0_i32_60 : i32
      %c1_i32_61 = arith.constant 1 : i32
      %78 = arith.select %77, %c1_i32_61, %c2_i32_59 : i32
      %79 = vector.broadcast %78 : i32 to vector<2x64x64xi32>
      %80 = arith.remsi %76, %79 : vector<2x64x64xi32>
      %c0_i32_62 = arith.constant 0 : i32
      %81 = vector.broadcast %c0_i32_62 : i32 to vector<2x64x64xi32>
      %82 = arith.cmpi ne, %80, %81 : vector<2x64x64xi32>
      %c0_i32_63 = arith.constant 0 : i32
      %83 = vector.broadcast %c0_i32_63 : i32 to vector<2x64x64xi32>
      %84 = arith.cmpi slt, %80, %83 : vector<2x64x64xi32>
      %c0_i32_64 = arith.constant 0 : i32
      %85 = arith.cmpi slt, %78, %c0_i32_64 : i32
      %86 = vector.broadcast %85 : i1 to vector<2x64x64xi1>
      %87 = vector.broadcast %86 : vector<2x64x64xi1> to vector<2x64x64xi1>
      %88 = arith.xori %84, %87 : vector<2x64x64xi1>
      %89 = arith.andi %88, %82 : vector<2x64x64xi1>
      %90 = vector.broadcast %78 : i32 to vector<2x64x64xi32>
      %91 = arith.addi %80, %90 : vector<2x64x64xi32>
      %92 = arith.select %89, %91, %80 : vector<2x64x64xi1>, vector<2x64x64xi32>
      %c0_i32_65 = arith.constant 0 : i32
      %93 = vector.broadcast %c0_i32_65 : i32 to vector<2x64x64xi32>
      %94 = arith.cmpi eq, %92, %93 : vector<2x64x64xi32>
      %c63_i32_66 = arith.constant 63 : i32
      %95 = tpu.dynamic_rotate %71 by %c63_i32_66 dim 2 : vector<2x64x64xf32>, i32 -> vector<2x64x64xf32>
      %c1_i32_67 = arith.constant 1 : i32
      %96 = tpu.dynamic_rotate %71 by %c1_i32_67 dim 2 : vector<2x64x64xf32>, i32 -> vector<2x64x64xf32>
      %97 = arith.select %94, %95, %96 : vector<2x64x64xi1>, vector<2x64x64xf32>
      %98 = vector.shape_cast %73 : vector<64x64xf32> to vector<1x64x64xf32>
      %99 = vector.broadcast %98 : vector<1x64x64xf32> to vector<2x64x64xf32>
      %100 = arith.mulf %71, %99 : vector<2x64x64xf32>
      %101 = vector.shape_cast %75 : vector<64x64xf32> to vector<1x64x64xf32>
      %102 = vector.broadcast %101 : vector<1x64x64xf32> to vector<2x64x64xf32>
      %103 = arith.mulf %97, %102 : vector<2x64x64xf32>
      %104 = arith.addf %100, %103 : vector<2x64x64xf32>
      %cst_68 = arith.constant 1.250000e-01 : f32
      %105 = vector.broadcast %cst_68 : f32 to vector<2x64x64xf32>
      %106 = arith.mulf %104, %105 : vector<2x64x64xf32>
      %107 = arith.truncf %106 : vector<2x64x64xf32> to vector<2x64x64xbf16>
      %c0_69 = arith.constant 0 : index
      %c0_70 = arith.constant 0 : index
      %c0_71 = arith.constant 0 : index
      %108 = vector.load %arg12[%c0_69, %c0_70, %c0_71] : memref<2x64x64xbf16, #tpu.memory_space<vmem>>, vector<2x64x64xbf16>
      tpu.vector_store %arg12[%c0_69, %c0_70, %c0_71], %107 {strides = array<i32>} : memref<2x64x64xbf16, #tpu.memory_space<vmem>>, vector<2x64x64xbf16>,
      %cst_72 = arith.constant 0xFF800000 : f32
      %109 = vector.broadcast %cst_72 : f32 to vector<2x64x1xf32>
      %c0_73 = arith.constant 0 : index
      %c0_74 = arith.constant 0 : index
      %c0_75 = arith.constant 0 : index
      %110 = vector.load %arg13[%c0_73, %c0_74, %c0_75] : memref<2x64x1xf32, #tpu.memory_space<vmem>>, vector<2x64x1xf32>
      tpu.vector_store %arg13[%c0_73, %c0_74, %c0_75], %109 {strides = array<i32>} : memref<2x64x1xf32, #tpu.memory_space<vmem>>, vector<2x64x1xf32>,
      %cst_76 = arith.constant 0.000000e+00 : f32
      %111 = vector.broadcast %cst_76 : f32 to vector<2x64x1xf32>
      %c0_77 = arith.constant 0 : index
      %c0_78 = arith.constant 0 : index
      %c0_79 = arith.constant 0 : index
      %112 = vector.load %arg14[%c0_77, %c0_78, %c0_79] : memref<2x64x1xf32, #tpu.memory_space<vmem>>, vector<2x64x1xf32>
      tpu.vector_store %arg14[%c0_77, %c0_78, %c0_79], %111 {strides = array<i32>} : memref<2x64x1xf32, #tpu.memory_space<vmem>>, vector<2x64x1xf32>,
      %cst_80 = arith.constant 0.000000e+00 : f32
      %113 = vector.broadcast %cst_80 : f32 to vector<2x64x64xf32>
      %c0_81 = arith.constant 0 : index
      %c0_82 = arith.constant 0 : index
      %c0_83 = arith.constant 0 : index
      %114 = vector.load %arg15[%c0_81, %c0_82, %c0_83] : memref<2x64x64xf32, #tpu.memory_space<vmem>>, vector<2x64x64xf32>
      tpu.vector_store %arg15[%c0_81, %c0_82, %c0_83], %113 {strides = array<i32>} : memref<2x64x64xf32, #tpu.memory_space<vmem>>, vector<2x64x64xf32>,
    } else {
    }
    %c0 = arith.constant 0 : index
    %c0_1 = arith.constant 0 : index
    %c0_2 = arith.constant 0 : index
    %c0_3 = arith.constant 0 : index
    %c0_4 = arith.constant 0 : index
    %3 = vector.load %arg5[%c0, %c0_1, %c0_2, %c0_3, %c0_4] : memref<1x1x2x64x64xf32, #tpu.memory_space<vmem>>, vector<1x1x2x64x64xf32>
    %4 = vector.shape_cast %3 : vector<1x1x2x64x64xf32> to vector<2x64x64xf32>
    %c0_5 = arith.constant 0 : index
    %c0_6 = arith.constant 0 : index
    %c0_7 = arith.constant 0 : index
    %5 = vector.load %arg9[%c0_5, %c0_6, %c0_7] : memref<1x64x64xf32, #tpu.memory_space<vmem>>, vector<1x64x64xf32>
    %6 = vector.shape_cast %5 : vector<1x64x64xf32> to vector<64x64xf32>
    %c0_8 = arith.constant 0 : index
    %c0_9 = arith.constant 0 : index
    %c0_10 = arith.constant 0 : index
    %7 = vector.load %arg10[%c0_8, %c0_9, %c0_10] : memref<1x64x64xf32, #tpu.memory_space<vmem>>, vector<1x64x64xf32>
    %8 = vector.shape_cast %7 : vector<1x64x64xf32> to vector<64x64xf32>
    %9 = tpu.iota {dimensions = array<i32: 2>} : vector<2x64x64xi32>
    %c2_i32 = arith.constant 2 : i32
    %c0_i32_11 = arith.constant 0 : i32
    %10 = arith.cmpi eq, %c2_i32, %c0_i32_11 : i32
    %c1_i32 = arith.constant 1 : i32
    %11 = arith.select %10, %c1_i32, %c2_i32 : i32
    %12 = vector.broadcast %11 : i32 to vector<2x64x64xi32>
    %13 = arith.remsi %9, %12 : vector<2x64x64xi32>
    %c0_i32_12 = arith.constant 0 : i32
    %14 = vector.broadcast %c0_i32_12 : i32 to vector<2x64x64xi32>
    %15 = arith.cmpi ne, %13, %14 : vector<2x64x64xi32>
    %c0_i32_13 = arith.constant 0 : i32
    %16 = vector.broadcast %c0_i32_13 : i32 to vector<2x64x64xi32>
    %17 = arith.cmpi slt, %13, %16 : vector<2x64x64xi32>
    %c0_i32_14 = arith.constant 0 : i32
    %18 = arith.cmpi slt, %11, %c0_i32_14 : i32
    %19 = vector.broadcast %18 : i1 to vector<2x64x64xi1>
    %20 = vector.broadcast %19 : vector<2x64x64xi1> to vector<2x64x64xi1>
    %21 = arith.xori %17, %20 : vector<2x64x64xi1>
    %22 = arith.andi %21, %15 : vector<2x64x64xi1>
    %23 = vector.broadcast %11 : i32 to vector<2x64x64xi32>
    %24 = arith.addi %13, %23 : vector<2x64x64xi32>
    %25 = arith.select %22, %24, %13 : vector<2x64x64xi1>, vector<2x64x64xi32>
    %c0_i32_15 = arith.constant 0 : i32
    %26 = vector.broadcast %c0_i32_15 : i32 to vector<2x64x64xi32>
    %27 = arith.cmpi eq, %25, %26 : vector<2x64x64xi32>
    %c63_i32 = arith.constant 63 : i32
    %28 = tpu.dynamic_rotate %4 by %c63_i32 dim 2 : vector<2x64x64xf32>, i32 -> vector<2x64x64xf32>
    %c1_i32_16 = arith.constant 1 : i32
    %29 = tpu.dynamic_rotate %4 by %c1_i32_16 dim 2 : vector<2x64x64xf32>, i32 -> vector<2x64x64xf32>
    %30 = arith.select %27, %28, %29 : vector<2x64x64xi1>, vector<2x64x64xf32>
    %31 = vector.shape_cast %6 : vector<64x64xf32> to vector<1x64x64xf32>
    %32 = vector.broadcast %31 : vector<1x64x64xf32> to vector<2x64x64xf32>
    %33 = arith.mulf %4, %32 : vector<2x64x64xf32>
    %34 = vector.shape_cast %8 : vector<64x64xf32> to vector<1x64x64xf32>
    %35 = vector.broadcast %34 : vector<1x64x64xf32> to vector<2x64x64xf32>
    %36 = arith.mulf %30, %35 : vector<2x64x64xf32>
    %37 = arith.addf %33, %36 : vector<2x64x64xf32>
    %38 = arith.truncf %37 : vector<2x64x64xf32> to vector<2x64x64xbf16>
    %c0_17 = arith.constant 0 : index
    %c0_18 = arith.constant 0 : index
    %c0_19 = arith.constant 0 : index
    %c0_20 = arith.constant 0 : index
    %c0_21 = arith.constant 0 : index
    %39 = vector.load %arg6[%c0_17, %c0_18, %c0_19, %c0_20, %c0_21] : memref<1x1x2x64x64xf32, #tpu.memory_space<vmem>>, vector<1x1x2x64x64xf32>
    %40 = vector.shape_cast %39 : vector<1x1x2x64x64xf32> to vector<2x64x64xf32>
    %41 = arith.truncf %40 : vector<2x64x64xf32> to vector<2x64x64xbf16>
    %c0_22 = arith.constant 0 : index
    %c0_23 = arith.constant 0 : index
    %c0_24 = arith.constant 0 : index
    %42 = vector.load %arg12[%c0_22, %c0_23, %c0_24] : memref<2x64x64xbf16, #tpu.memory_space<vmem>>, vector<2x64x64xbf16>
    %cst = arith.constant dense<0.000000e+00> : vector<2x64x64xf32>
    %43 = tpu.matmul %42, %38, %cst {dimension_numbers = #tpu.dot_dimension_numbers<[2], [2], [1], [1], [0, 0, 0, 1, 1, 1], [0], [0]>} : vector<2x64x64xbf16>, vector<2x64x64xbf16>, vector<2x64x64xf32> -> vector<2x64x64xf32>
    %c0_25 = arith.constant 0 : index
    %c0_26 = arith.constant 0 : index
    %c0_27 = arith.constant 0 : index
    %44 = vector.load %arg13[%c0_25, %c0_26, %c0_27] : memref<2x64x1xf32, #tpu.memory_space<vmem>>, vector<2x64x1xf32>
    %cst_28 = arith.constant dense<0xFF800000> : vector<2x64xf32>
    %45 = vector.multi_reduction <maximumf>, %43, %cst_28 [2] : vector<2x64x64xf32> to vector<2x64xf32>
    %46 = vector.shape_cast %45 : vector<2x64xf32> to vector<2x64x1xf32>
    %47 = arith.maximumf %44, %46 : vector<2x64x1xf32>
    %48 = arith.subf %44, %47 : vector<2x64x1xf32>
    %49 = math.exp %48 : vector<2x64x1xf32>
    %50 = vector.broadcast %47 : vector<2x64x1xf32> to vector<2x64x64xf32>
    %51 = arith.subf %43, %50 : vector<2x64x64xf32>
    %52 = math.exp %51 : vector<2x64x64xf32>
    %c0_29 = arith.constant 0 : index
    %c0_30 = arith.constant 0 : index
    %c0_31 = arith.constant 0 : index
    %53 = vector.load %arg14[%c0_29, %c0_30, %c0_31] : memref<2x64x1xf32, #tpu.memory_space<vmem>>, vector<2x64x1xf32>
    %54 = arith.mulf %49, %53 : vector<2x64x1xf32>
    %cst_32 = arith.constant dense<0.000000e+00> : vector<2x64xf32>
    %55 = vector.multi_reduction <add>, %52, %cst_32 [2] : vector<2x64x64xf32> to vector<2x64xf32>
    %56 = vector.shape_cast %55 : vector<2x64xf32> to vector<2x64x1xf32>
    %57 = arith.addf %54, %56 : vector<2x64x1xf32>
    %c0_33 = arith.constant 0 : index
    %c0_34 = arith.constant 0 : index
    %c0_35 = arith.constant 0 : index
    %58 = vector.load %arg14[%c0_33, %c0_34, %c0_35] : memref<2x64x1xf32, #tpu.memory_space<vmem>>, vector<2x64x1xf32>
    tpu.vector_store %arg14[%c0_33, %c0_34, %c0_35], %57 {strides = array<i32>} : memref<2x64x1xf32, #tpu.memory_space<vmem>>, vector<2x64x1xf32>,
    %59 = arith.truncf %52 : vector<2x64x64xf32> to vector<2x64x64xbf16>
    %cst_36 = arith.constant dense<0.000000e+00> : vector<2x64x64xf32>
    %60 = tpu.matmul %59, %41, %cst_36 {dimension_numbers = #tpu.dot_dimension_numbers<[2], [1], [1], [2], [0, 0, 0, 1, 1, 2], [0], [0]>} : vector<2x64x64xbf16>, vector<2x64x64xbf16>, vector<2x64x64xf32> -> vector<2x64x64xf32>
    %c0_37 = arith.constant 0 : index
    %c0_38 = arith.constant 0 : index
    %c0_39 = arith.constant 0 : index
    %61 = vector.load %arg15[%c0_37, %c0_38, %c0_39] : memref<2x64x64xf32, #tpu.memory_space<vmem>>, vector<2x64x64xf32>
    %62 = vector.broadcast %49 : vector<2x64x1xf32> to vector<2x64x64xf32>
    %63 = arith.mulf %62, %61 : vector<2x64x64xf32>
    %64 = arith.addf %63, %60 : vector<2x64x64xf32>
    %c0_40 = arith.constant 0 : index
    %c0_41 = arith.constant 0 : index
    %c0_42 = arith.constant 0 : index
    %65 = vector.load %arg15[%c0_40, %c0_41, %c0_42] : memref<2x64x64xf32, #tpu.memory_space<vmem>>, vector<2x64x64xf32>
    tpu.vector_store %arg15[%c0_40, %c0_41, %c0_42], %64 {strides = array<i32>} : memref<2x64x64xf32, #tpu.memory_space<vmem>>, vector<2x64x64xf32>,
    %c0_43 = arith.constant 0 : index
    %c0_44 = arith.constant 0 : index
    %c0_45 = arith.constant 0 : index
    %66 = vector.load %arg13[%c0_43, %c0_44, %c0_45] : memref<2x64x1xf32, #tpu.memory_space<vmem>>, vector<2x64x1xf32>
    tpu.vector_store %arg13[%c0_43, %c0_44, %c0_45], %47 {strides = array<i32>} : memref<2x64x1xf32, #tpu.memory_space<vmem>>, vector<2x64x1xf32>,
    %c0_i32_46 = arith.constant 0 : i32
    %67 = arith.cmpi eq, %arg3, %c0_i32_46 : i32
    %68 = arith.extui %67 : i1 to i32
    %c0_i32_47 = arith.constant 0 : i32
    %69 = arith.cmpi ne, %68, %c0_i32_47 : i32
    scf.if %69 {
      %c0_48 = arith.constant 0 : index
      %c0_49 = arith.constant 0 : index
      %c0_50 = arith.constant 0 : index
      %70 = vector.load %arg14[%c0_48, %c0_49, %c0_50] : memref<2x64x1xf32, #tpu.memory_space<vmem>>, vector<2x64x1xf32>
      %71 = tpu.reciprocal %70 {approx = true} : vector<2x64x1xf32> -> vector<2x64x1xf32>
      %c0_51 = arith.constant 0 : index
      %c0_52 = arith.constant 0 : index
      %c0_53 = arith.constant 0 : index
      %72 = vector.load %arg15[%c0_51, %c0_52, %c0_53] : memref<2x64x64xf32, #tpu.memory_space<vmem>>, vector<1x64x64xf32>
      %73 = vector.shape_cast %72 : vector<1x64x64xf32> to vector<64x64xf32>
      %74 = vector.extract_strided_slice %71 {offsets = [0, 0, 0], sizes = [1, 64, 1], strides = [1, 1, 1]} : vector<2x64x1xf32> to vector<1x64x1xf32>
      %75 = vector.shape_cast %74 : vector<1x64x1xf32> to vector<64x1xf32>
      %76 = vector.broadcast %75 : vector<64x1xf32> to vector<64x64xf32>
      %77 = arith.mulf %73, %76 : vector<64x64xf32>
      %c0_54 = arith.constant 0 : index
      %c0_55 = arith.constant 0 : index
      %c0_56 = arith.constant 0 : index
      %78 = vector.load %arg11[%c0_54, %c0_55, %c0_56] : memref<1x64x128xf32, #tpu.memory_space<vmem>>, vector<1x64x64xf32>
      %79 = vector.shape_cast %78 : vector<1x64x64xf32> to vector<64x64xf32>
      %80 = vector.shape_cast %77 : vector<64x64xf32> to vector<1x64x64xf32>
      tpu.vector_store %arg11[%c0_54, %c0_55, %c0_56], %80 {strides = array<i32>} : memref<1x64x128xf32, #tpu.memory_space<vmem>>, vector<1x64x64xf32>,
      %c1 = arith.constant 1 : index
      %c0_57 = arith.constant 0 : index
      %c0_58 = arith.constant 0 : index
      %81 = vector.load %arg15[%c1, %c0_57, %c0_58] : memref<2x64x64xf32, #tpu.memory_space<vmem>>, vector<1x64x64xf32>
      %82 = vector.shape_cast %81 : vector<1x64x64xf32> to vector<64x64xf32>
      %83 = vector.extract_strided_slice %71 {offsets = [1, 0, 0], sizes = [1, 64, 1], strides = [1, 1, 1]} : vector<2x64x1xf32> to vector<1x64x1xf32>
      %84 = vector.shape_cast %83 : vector<1x64x1xf32> to vector<64x1xf32>
      %85 = vector.broadcast %84 : vector<64x1xf32> to vector<64x64xf32>
      %86 = arith.mulf %82, %85 : vector<64x64xf32>
      %c0_59 = arith.constant 0 : index
      %c0_60 = arith.constant 0 : index
      %c64 = arith.constant 64 : index
      %87 = vector.load %arg11[%c0_59, %c0_60, %c64] : memref<1x64x128xf32, #tpu.memory_space<vmem>>, vector<1x64x64xf32>
      %88 = vector.shape_cast %87 : vector<1x64x64xf32> to vector<64x64xf32>
      %89 = vector.shape_cast %86 : vector<64x64xf32> to vector<1x64x64xf32>
      tpu.vector_store %arg11[%c0_59, %c0_60, %c64], %89 {strides = array<i32>} : memref<1x64x128xf32, #tpu.memory_space<vmem>>, vector<1x64x64xf32>,
    } else {
    }
    return
  }
  func.func @transform_0(%arg0: i32, %arg1: i32, %arg2: i32, %arg3: i32) -> (i32, i32, i32, i32, i32) {
    %c0_i32 = arith.constant 0 : i32
    %c0_i32_0 = arith.constant 0 : i32
    %c0_i32_1 = arith.constant 0 : i32
    return %c0_i32, %arg0, %arg1, %arg2, %c0_i32_0 : i32, i32, i32, i32, i32
  }
  func.func @transform_1(%arg0: i32, %arg1: i32, %arg2: i32, %arg3: i32) -> (i32, i32, i32, i32, i32) {
    %c1_i32 = arith.constant 1 : i32
    %c0_i32 = arith.constant 0 : i32
    %c0_i32_0 = arith.constant 0 : i32
    return %c1_i32, %arg0, %arg1, %arg3, %c0_i32 : i32, i32, i32, i32, i32
  }
  func.func @transform_2(%arg0: i32, %arg1: i32, %arg2: i32, %arg3: i32) -> (i32, i32, i32, i32, i32) {
    %c2_i32 = arith.constant 2 : i32
    %c0_i32 = arith.constant 0 : i32
    %c0_i32_0 = arith.constant 0 : i32
    return %c2_i32, %arg0, %arg1, %arg3, %c0_i32 : i32, i32, i32, i32, i32
  }
  func.func @transform_3(%arg0: i32, %arg1: i32, %arg2: i32, %arg3: i32) -> (i32, i32, i32) {
    %c0_i32 = arith.constant 0 : i32
    %0 = arith.muli %arg0, %c0_i32 : i32
    %c0_i32_0 = arith.constant 0 : i32
    %c0_i32_1 = arith.constant 0 : i32
    return %0, %arg2, %c0_i32_0 : i32, i32, i32
  }
  func.func @transform_4(%arg0: i32, %arg1: i32, %arg2: i32, %arg3: i32) -> (i32, i32, i32) {
    %c0_i32 = arith.constant 0 : i32
    %0 = arith.muli %arg0, %c0_i32 : i32
    %c0_i32_0 = arith.constant 0 : i32
    %c0_i32_1 = arith.constant 0 : i32
    return %0, %arg2, %c0_i32_0 : i32, i32, i32
  }
  func.func @transform_5(%arg0: i32, %arg1: i32, %arg2: i32, %arg3: i32) -> (i32, i32, i32) {
    %c0_i32 = arith.constant 0 : i32
    %0 = arith.muli %arg0, %c0_i32 : i32
    %c0_i32_0 = arith.constant 0 : i32
    %c0_i32_1 = arith.constant 0 : i32
    return %0, %arg3, %c0_i32_0 : i32, i32, i32
  }
  func.func @transform_6(%arg0: i32, %arg1: i32, %arg2: i32, %arg3: i32) -> (i32, i32, i32) {
    %c0_i32 = arith.constant 0 : i32
    %0 = arith.muli %arg0, %c0_i32 : i32
    %c0_i32_0 = arith.constant 0 : i32
    %c0_i32_1 = arith.constant 0 : i32
    return %0, %arg3, %c0_i32_0 : i32, i32, i32
  }
  func.func @transform_7(%arg0: i32, %arg1: i32, %arg2: i32, %arg3: i32) -> (i32, i32, i32) {
    %c0_i32 = arith.constant 0 : i32
    return %arg0, %arg2, %arg1 : i32, i32, i32
  }
}

module attributes {stable_mosaic.version = 11 : i64} {
  func.func @_linear_kernel(%arg0: i32, %arg1: i32, %arg2: i32, %arg3: memref<128x128xbf16, #tpu.memory_space<vmem>>, %arg4: memref<128x128xbf16, #tpu.memory_space<vmem>>, %arg5: memref<1x128xf32, #tpu.memory_space<vmem>>, %arg6: memref<128x128xf32, #tpu.memory_space<vmem>>, %arg7: memref<128x128xf32, #tpu.memory_space<vmem>>) attributes {dimension_semantics = [#tpu.dimension_semantics<parallel>, #tpu.dimension_semantics<parallel>, #tpu.dimension_semantics<arbitrary>], iteration_bounds = array<i64: 1, 1, 1>, scalar_prefetch = 0 : i64, scratch_operands = 1 : i64, tpu.core_type = #tpu.core_type<tc>, window_params = [{transform_indices = @transform_0, window_bounds = array<i64: 128, 128>}, {transform_indices = @transform_1, window_bounds = array<i64: 128, 128>}, {transform_indices = @transform_2, window_bounds = array<i64: 1, 128>}, {transform_indices = @transform_3, window_bounds = array<i64: 128, 128>}]} {
    %c0_i32 = arith.constant 0 : i32
    %0 = arith.cmpi eq, %arg2, %c0_i32 : i32
    %1 = arith.extui %0 : i1 to i32
    %c0_i32_0 = arith.constant 0 : i32
    %2 = arith.cmpi ne, %1, %c0_i32_0 : i32
    scf.if %2 {
      %cst_10 = arith.constant 0.000000e+00 : f32
      %12 = vector.broadcast %cst_10 : f32 to vector<128x128xf32>
      %c0_11 = arith.constant 0 : index
      %c0_12 = arith.constant 0 : index
      %13 = vector.load %arg7[%c0_11, %c0_12] : memref<128x128xf32, #tpu.memory_space<vmem>>, vector<128x128xf32>
      tpu.vector_store %arg7[%c0_11, %c0_12], %12 {strides = array<i32>} : memref<128x128xf32, #tpu.memory_space<vmem>>, vector<128x128xf32>,
    } else {
    }
    %c0 = arith.constant 0 : index
    %c0_1 = arith.constant 0 : index
    %3 = vector.load %arg7[%c0, %c0_1] : memref<128x128xf32, #tpu.memory_space<vmem>>, vector<128x128xf32>
    %c0_2 = arith.constant 0 : index
    %c0_3 = arith.constant 0 : index
    %4 = vector.load %arg3[%c0_2, %c0_3] : memref<128x128xbf16, #tpu.memory_space<vmem>>, vector<128x128xbf16>
    %c0_4 = arith.constant 0 : index
    %c0_5 = arith.constant 0 : index
    %5 = vector.load %arg4[%c0_4, %c0_5] : memref<128x128xbf16, #tpu.memory_space<vmem>>, vector<128x128xbf16>
    %cst = arith.constant dense<0.000000e+00> : vector<128x128xf32>
    %6 = tpu.matmul %4, %5, %cst {dimension_numbers = #tpu.dot_dimension_numbers<[1], [0], [0], [1], [0, 0, 1, 1], [], []>} : vector<128x128xbf16>, vector<128x128xbf16>, vector<128x128xf32> -> vector<128x128xf32>
    %7 = arith.addf %3, %6 : vector<128x128xf32>
    %c0_6 = arith.constant 0 : index
    %c0_7 = arith.constant 0 : index
    %8 = vector.load %arg7[%c0_6, %c0_7] : memref<128x128xf32, #tpu.memory_space<vmem>>, vector<128x128xf32>
    tpu.vector_store %arg7[%c0_6, %c0_7], %7 {strides = array<i32>} : memref<128x128xf32, #tpu.memory_space<vmem>>, vector<128x128xf32>,
    %c0_i32_8 = arith.constant 0 : i32
    %9 = arith.cmpi eq, %arg2, %c0_i32_8 : i32
    %10 = arith.extui %9 : i1 to i32
    %c0_i32_9 = arith.constant 0 : i32
    %11 = arith.cmpi ne, %10, %c0_i32_9 : i32
    scf.if %11 {
      %c0_10 = arith.constant 0 : index
      %c0_11 = arith.constant 0 : index
      %12 = vector.load %arg7[%c0_10, %c0_11] : memref<128x128xf32, #tpu.memory_space<vmem>>, vector<128x128xf32>
      %c0_12 = arith.constant 0 : index
      %c0_13 = arith.constant 0 : index
      %13 = vector.load %arg5[%c0_12, %c0_13] : memref<1x128xf32, #tpu.memory_space<vmem>>, vector<1x128xf32>
      %14 = vector.broadcast %13 : vector<1x128xf32> to vector<128x128xf32>
      %15 = arith.addf %12, %14 : vector<128x128xf32>
      %c0_14 = arith.constant 0 : index
      %c0_15 = arith.constant 0 : index
      %16 = vector.load %arg6[%c0_14, %c0_15] : memref<128x128xf32, #tpu.memory_space<vmem>>, vector<128x128xf32>
      tpu.vector_store %arg6[%c0_14, %c0_15], %15 {strides = array<i32>} : memref<128x128xf32, #tpu.memory_space<vmem>>, vector<128x128xf32>,
    } else {
    }
    return
  }
  func.func @transform_0(%arg0: i32, %arg1: i32, %arg2: i32) -> (i32, i32) {
    %c0_i32 = arith.constant 0 : i32
    return %arg0, %arg2 : i32, i32
  }
  func.func @transform_1(%arg0: i32, %arg1: i32, %arg2: i32) -> (i32, i32) {
    %c0_i32 = arith.constant 0 : i32
    return %arg2, %arg1 : i32, i32
  }
  func.func @transform_2(%arg0: i32, %arg1: i32, %arg2: i32) -> (i32, i32) {
    %c0_i32 = arith.constant 0 : i32
    %c0_i32_0 = arith.constant 0 : i32
    return %c0_i32, %arg1 : i32, i32
  }
  func.func @transform_3(%arg0: i32, %arg1: i32, %arg2: i32) -> (i32, i32) {
    %c0_i32 = arith.constant 0 : i32
    return %arg0, %arg1 : i32, i32
  }
}

</mosaic_0001>

<llo_original>
// kernel: vjepa2_rope_attention_forward.3
$region0: #{vjepa2_rope_attention_forward.3}
  #allocation0 [shape = 'u32[]', space=smem, size = 0x4, offset = 0x4, fixed_abs, tag = 'smem constant byte address 0x4 - core index']
  #allocation1 [shape = 'u32[144,128]{1,0:T(1,128)}', space=vmem, size = 0x12000, scoped, tag = 'internal scratch']
  #allocation2 [shape = 'f32[128,384]{1,0:T(8,128)}', space=vmem, size = 0x30000, scoped, tag = 'scratch operand']
  %s0 = inlined_call_operand.vmem [shape: bf16[128,128], index: 0, kind: input, shape index: {}]
  %s1 = inlined_call_operand.vmem [shape: bf16[128,384], index: 1, kind: input, shape index: {}]
  %s2 = inlined_call_operand.vmem [shape: f32[1,384], index: 2, kind: input, shape index: {}]
  %s3 = inlined_call_operand.vmem [shape: f32[128,384], index: 3, kind: output, shape index: {}]
  %s4 = sld [smem:[#allocation0]]
  $region30: #{vjepa2_rope_attention_forward.3} parent=0
    _
  %s6 = ssub.s32 1, %s4
  %s7 = scalar_select 0, %s6, %s4
  // Predicated region
  $region2: #{vjepa2_rope_attention_forward.3} parent=0 // pred_check
    _
  $region3: #{vjepa2_rope_attention_forward.3} parent=0 // pred_check_branch
    %9 = sbr.rel (0) target = $region5
  $region4: #{vjepa2_rope_attention_forward.3} parent=0 // pred_region
    _
  $region5: #{vjepa2_rope_attention_forward.3} parent=0 // pred_fallthru
    _
  // Predicated region
  $region6: #{vjepa2_rope_attention_forward.3} parent=0 // pred_check
    _
  $region7: #{vjepa2_rope_attention_forward.3} parent=0 // pred_check_branch
    %11 = sbr.rel (0) target = $region9
  $region8: #{vjepa2_rope_attention_forward.3} parent=0 // pred_region
    _
  $region9: #{vjepa2_rope_attention_forward.3} parent=0 // pred_fallthru
    _
  // Predicated region
  $region10: #{vjepa2_rope_attention_forward.3} parent=0 // pred_check
    _
  $region11: #{vjepa2_rope_attention_forward.3} parent=0 // pred_check_branch
    %13 = sbr.rel (0) target = $region13
  $region12: #{vjepa2_rope_attention_forward.3} parent=0 // pred_region
    _
  $region13: #{vjepa2_rope_attention_forward.3} parent=0 // pred_fallthru
    _
  %p15 = scmp.eq.s32.totalorder 0, 0
  // Predicated region
  $region14: #{vjepa2_rope_attention_forward.3} parent=0 // pred_check
    %p16 = pneg %p15
  $region15: #{vjepa2_rope_attention_forward.3} parent=0 // pred_check_branch
    %18 = sbr.rel (%p16) target = $region17
  $region16: #{vjepa2_rope_attention_forward.3} parent=0 // pred_region
    %19 = vst [vmem:[#allocation2] sm:$0xff] 0.0
    %20 = vst [vmem:[#allocation2 + $0x8] sm:$0xff] 0.0
    %21 = vst [vmem:[#allocation2 + $0x10] sm:$0xff] 0.0
    %22 = vst [vmem:[#allocation2 + $0x18] sm:$0xff] 0.0
    %23 = vst [vmem:[#allocation2 + $0x20] sm:$0xff] 0.0
    %24 = vst [vmem:[#allocation2 + $0x28] sm:$0xff] 0.0
    %25 = vst [vmem:[#allocation2 + $0x30] sm:$0xff] 0.0
    %26 = vst [vmem:[#allocation2 + $0x38] sm:$0xff] 0.0
    %27 = vst [vmem:[#allocation2 + $0x40] sm:$0xff] 0.0
    %28 = vst [vmem:[#allocation2 + $0x48] sm:$0xff] 0.0
    %29 = vst [vmem:[#allocation2 + $0x50] sm:$0xff] 0.0
    %30 = vst [vmem:[#allocation2 + $0x58] sm:$0xff] 0.0
    %31 = vst [vmem:[#allocation2 + $0x60] sm:$0xff] 0.0
    %32 = vst [vmem:[#allocation2 + $0x68] sm:$0xff] 0.0
    %33 = vst [vmem:[#allocation2 + $0x70] sm:$0xff] 0.0
    %34 = vst [vmem:[#allocation2 + $0x78] sm:$0xff] 0.0
    %35 = vst [vmem:[#allocation2 + $0x80] sm:$0xff] 0.0
    %36 = vst [vmem:[#allocation2 + $0x88] sm:$0xff] 0.0
    %37 = vst [vmem:[#allocation2 + $0x90] sm:$0xff] 0.0
    %38 = vst [vmem:[#allocation2 + $0x98] sm:$0xff] 0.0
    %39 = vst [vmem:[#allocation2 + $0xa0] sm:$0xff] 0.0
    %40 = vst [vmem:[#allocation2 + $0xa8] sm:$0xff] 0.0
    %41 = vst [vmem:[#allocation2 + $0xb0] sm:$0xff] 0.0
    %42 = vst [vmem:[#allocation2 + $0xb8] sm:$0xff] 0.0
    %43 = vst [vmem:[#allocation2 + $0xc0] sm:$0xff] 0.0
    %44 = vst [vmem:[#allocation2 + $0xc8] sm:$0xff] 0.0
    %45 = vst [vmem:[#allocation2 + $0xd0] sm:$0xff] 0.0
    %46 = vst [vmem:[#allocation2 + $0xd8] sm:$0xff] 0.0
    %47 = vst [vmem:[#allocation2 + $0xe0] sm:$0xff] 0.0
    %48 = vst [vmem:[#allocation2 + $0xe8] sm:$0xff] 0.0
    %49 = vst [vmem:[#allocation2 + $0xf0] sm:$0xff] 0.0
    %50 = vst [vmem:[#allocation2 + $0xf8] sm:$0xff] 0.0
    %51 = vst [vmem:[#allocation2 + $0x100] sm:$0xff] 0.0
    %52 = vst [vmem:[#allocation2 + $0x108] sm:$0xff] 0.0
    %53 = vst [vmem:[#allocation2 + $0x110] sm:$0xff] 0.0
    %54 = vst [vmem:[#allocation2 + $0x118] sm:$0xff] 0.0
    %55 = vst [vmem:[#allocation2 + $0x120] sm:$0xff] 0.0
    %56 = vst [vmem:[#allocation2 + $0x128] sm:$0xff] 0.0
    %57 = vst [vmem:[#allocation2 + $0x130] sm:$0xff] 0.0
    %58 = vst [vmem:[#allocation2 + $0x138] sm:$0xff] 0.0
    %59 = vst [vmem:[#allocation2 + $0x140] sm:$0xff] 0.0
    %60 = vst [vmem:[#allocation2 + $0x148] sm:$0xff] 0.0
    %61 = vst [vmem:[#allocation2 + $0x150] sm:$0xff] 0.0
    %62 = vst [vmem:[#allocation2 + $0x158] sm:$0xff] 0.0
    %63 = vst [vmem:[#allocation2 + $0x160] sm:$0xff] 0.0
    %64 = vst [vmem:[#allocation2 + $0x168] sm:$0xff] 0.0
    %65 = vst [vmem:[#allocation2 + $0x170] sm:$0xff] 0.0
    %66 = vst [vmem:[#allocation2 + $0x178] sm:$0xff] 0.0
  $region17: #{vjepa2_rope_attention_forward.3} parent=0 // pred_fallthru
    _
  %v67 = vld [vmem:[#allocation2] sm:$0xff]
  %v68 = vld [vmem:[#allocation2 + $0x8] sm:$0xff]
  %v69 = vld [vmem:[#allocation2 + $0x10] sm:$0xff]
  %v70 = vld [vmem:[#allocation2 + $0x18] sm:$0xff]
  %v71 = vld [vmem:[#allocation2 + $0x20] sm:$0xff]
  %v72 = vld [vmem:[#allocation2 + $0x28] sm:$0xff]
  %v73 = vld [vmem:[#allocation2 + $0x30] sm:$0xff]
  %v74 = vld [vmem:[#allocation2 + $0x38] sm:$0xff]
  %v75 = vld [vmem:[#allocation2 + $0x40] sm:$0xff]
  %v76 = vld [vmem:[#allocation2 + $0x48] sm:$0xff]
  %v77 = vld [vmem:[#allocation2 + $0x50] sm:$0xff]
  %v78 = vld [vmem:[#allocation2 + $0x58] sm:$0xff]
  %v79 = vld [vmem:[#allocation2 + $0x60] sm:$0xff]
  %v80 = vld [vmem:[#allocation2 + $0x68] sm:$0xff]
  %v81 = vld [vmem:[#allocation2 + $0x70] sm:$0xff]
  %v82 = vld [vmem:[#allocation2 + $0x78] sm:$0xff]
  %v83 = vld [vmem:[#allocation2 + $0x80] sm:$0xff]
  %v84 = vld [vmem:[#allocation2 + $0x88] sm:$0xff]
  %v85 = vld [vmem:[#allocation2 + $0x90] sm:$0xff]
  %v86 = vld [vmem:[#allocation2 + $0x98] sm:$0xff]
  %v87 = vld [vmem:[#allocation2 + $0xa0] sm:$0xff]
  %v88 = vld [vmem:[#allocation2 + $0xa8] sm:$0xff]
  %v89 = vld [vmem:[#allocation2 + $0xb0] sm:$0xff]
  %v90 = vld [vmem:[#allocation2 + $0xb8] sm:$0xff]
  %v91 = vld [vmem:[#allocation2 + $0xc0] sm:$0xff]
  %v92 = vld [vmem:[#allocation2 + $0xc8] sm:$0xff]
  %v93 = vld [vmem:[#allocation2 + $0xd0] sm:$0xff]
  %v94 = vld [vmem:[#allocation2 + $0xd8] sm:$0xff]
  %v95 = vld [vmem:[#allocation2 + $0xe0] sm:$0xff]
  %v96 = vld [vmem:[#allocation2 + $0xe8] sm:$0xff]
  %v97 = vld [vmem:[#allocation2 + $0xf0] sm:$0xff]
  %v98 = vld [vmem:[#allocation2 + $0xf8] sm:$0xff]
  %v99 = vld [vmem:[#allocation2 + $0x100] sm:$0xff]
  %v100 = vld [vmem:[#allocation2 + $0x108] sm:$0xff]
  %v101 = vld [vmem:[#allocation2 + $0x110] sm:$0xff]
  %v102 = vld [vmem:[#allocation2 + $0x118] sm:$0xff]
  %v103 = vld [vmem:[#allocation2 + $0x120] sm:$0xff]
  %v104 = vld [vmem:[#allocation2 + $0x128] sm:$0xff]
  %v105 = vld [vmem:[#allocation2 + $0x130] sm:$0xff]
  %v106 = vld [vmem:[#allocation2 + $0x138] sm:$0xff]
  %v107 = vld [vmem:[#allocation2 + $0x140] sm:$0xff]
  %v108 = vld [vmem:[#allocation2 + $0x148] sm:$0xff]
  %v109 = vld [vmem:[#allocation2 + $0x150] sm:$0xff]
  %v110 = vld [vmem:[#allocation2 + $0x158] sm:$0xff]
  %v111 = vld [vmem:[#allocation2 + $0x160] sm:$0xff]
  %v112 = vld [vmem:[#allocation2 + $0x168] sm:$0xff]
  %v113 = vld [vmem:[#allocation2 + $0x170] sm:$0xff]
  %v114 = vld [vmem:[#allocation2 + $0x178] sm:$0xff]
  %v115 = vld [vmem:[%s0] sm:$0xf]
  %v116 = vld [vmem:[%s0 + $0x4] sm:$0xf]
  %v117 = vld [vmem:[%s0 + $0x8] sm:$0xf]
  %v118 = vld [vmem:[%s0 + $0xc] sm:$0xf]
  %v119 = vld [vmem:[%s0 + $0x10] sm:$0xf]
  %v120 = vld [vmem:[%s0 + $0x14] sm:$0xf]
  %v121 = vld [vmem:[%s0 + $0x18] sm:$0xf]
  %v122 = vld [vmem:[%s0 + $0x1c] sm:$0xf]
  %v123 = vld [vmem:[%s0 + $0x20] sm:$0xf]
  %v124 = vld [vmem:[%s0 + $0x24] sm:$0xf]
  %v125 = vld [vmem:[%s0 + $0x28] sm:$0xf]
  %v126 = vld [vmem:[%s0 + $0x2c] sm:$0xf]
  %v127 = vld [vmem:[%s0 + $0x30] sm:$0xf]
  %v128 = vld [vmem:[%s0 + $0x34] sm:$0xf]
  %v129 = vld [vmem:[%s0 + $0x38] sm:$0xf]
  %v130 = vld [vmem:[%s0 + $0x3c] sm:$0xf]
  %v131 = vld [vmem:[%s1] sm:$0xff]
  %v132 = vld [vmem:[%s1 + $0x8] sm:$0xf]
  %v133 = vld [vmem:[%s1 + $0xc] sm:$0xff]
  %v134 = vld [vmem:[%s1 + $0x14] sm:$0xf]
  %v135 = vld [vmem:[%s1 + $0x18] sm:$0xff]
  %v136 = vld [vmem:[%s1 + $0x20] sm:$0xf]
  %v137 = vld [vmem:[%s1 + $0x24] sm:$0xff]
  %v138 = vld [vmem:[%s1 + $0x2c] sm:$0xf]
  %v139 = vld [vmem:[%s1 + $0x30] sm:$0xff]
  %v140 = vld [vmem:[%s1 + $0x38] sm:$0xf]
  %v141 = vld [vmem:[%s1 + $0x3c] sm:$0xff]
  %v142 = vld [vmem:[%s1 + $0x44] sm:$0xf]
  %v143 = vld [vmem:[%s1 + $0x48] sm:$0xff]
  %v144 = vld [vmem:[%s1 + $0x50] sm:$0xf]
  %v145 = vld [vmem:[%s1 + $0x54] sm:$0xff]
  %v146 = vld [vmem:[%s1 + $0x5c] sm:$0xf]
  %v147 = vld [vmem:[%s1 + $0x60] sm:$0xff]
  %v148 = vld [vmem:[%s1 + $0x68] sm:$0xf]
  %v149 = vld [vmem:[%s1 + $0x6c] sm:$0xff]
  %v150 = vld [vmem:[%s1 + $0x74] sm:$0xf]
  %v151 = vld [vmem:[%s1 + $0x78] sm:$0xff]
  %v152 = vld [vmem:[%s1 + $0x80] sm:$0xf]
  %v153 = vld [vmem:[%s1 + $0x84] sm:$0xff]
  %v154 = vld [vmem:[%s1 + $0x8c] sm:$0xf]
  %v155 = vld [vmem:[%s1 + $0x90] sm:$0xff]
  %v156 = vld [vmem:[%s1 + $0x98] sm:$0xf]
  %v157 = vld [vmem:[%s1 + $0x9c] sm:$0xff]
  %v158 = vld [vmem:[%s1 + $0xa4] sm:$0xf]
  %v159 = vld [vmem:[%s1 + $0xa8] sm:$0xff]
  %v160 = vld [vmem:[%s1 + $0xb0] sm:$0xf]
  %v161 = vld [vmem:[%s1 + $0xb4] sm:$0xff]
  %v162 = vld [vmem:[%s1 + $0xbc] sm:$0xf]
  %v179 = vunpack.c.l.b16 %v115
  %v180 = vunpack.c.l.b16 %v116
  %v181 = vunpack.c.l.b16 %v117
  %v182 = vunpack.c.l.b16 %v118
  %v183 = vunpack.c.l.b16 %v119
  %v184 = vunpack.c.l.b16 %v120
  %v185 = vunpack.c.l.b16 %v121
  %v186 = vunpack.c.l.b16 %v122
  %v187 = vunpack.c.l.b16 %v123
  %v188 = vunpack.c.l.b16 %v124
  %v189 = vunpack.c.l.b16 %v125
  %v190 = vunpack.c.l.b16 %v126
  %v191 = vunpack.c.l.b16 %v127
  %v192 = vunpack.c.l.b16 %v128
  %v193 = vunpack.c.l.b16 %v129
  %v194 = vunpack.c.l.b16 %v130
  %v195 = vpack.c.b16 %v180, %v179
  %v196 = vpack.c.b16 %v182, %v181
  %v197 = vpack.c.b16 %v184, %v183
  %v198 = vpack.c.b16 %v186, %v185
  %v199 = vpack.c.b16 %v188, %v187
  %v200 = vpack.c.b16 %v190, %v189
  %v201 = vpack.c.b16 %v192, %v191
  %v202 = vpack.c.b16 %v194, %v193
  %v243 = vunpack.c.l.b16 %v131
  %v244 = vunpack.c.h.b16 %v131
  %v245 = vunpack.c.l.b16 %v132
  %v246 = vunpack.c.l.b16 %v133
  %v247 = vunpack.c.h.b16 %v133
  %v248 = vunpack.c.l.b16 %v134
  %v249 = vunpack.c.l.b16 %v135
  %v250 = vunpack.c.h.b16 %v135
  %v251 = vunpack.c.l.b16 %v136
  %v252 = vunpack.c.l.b16 %v137
  %v253 = vunpack.c.h.b16 %v137
  %v254 = vunpack.c.l.b16 %v138
  %v255 = vunpack.c.l.b16 %v139
  %v256 = vunpack.c.h.b16 %v139
  %v257 = vunpack.c.l.b16 %v140
  %v258 = vunpack.c.l.b16 %v141
  %v259 = vunpack.c.h.b16 %v141
  %v260 = vunpack.c.l.b16 %v142
  %v261 = vunpack.c.l.b16 %v143
  %v262 = vunpack.c.h.b16 %v143
  %v263 = vunpack.c.l.b16 %v144
  %v264 = vunpack.c.l.b16 %v145
  %v265 = vunpack.c.h.b16 %v145
  %v266 = vunpack.c.l.b16 %v146
  %v267 = vunpack.c.l.b16 %v147
  %v268 = vunpack.c.h.b16 %v147
  %v269 = vunpack.c.l.b16 %v148
  %v270 = vunpack.c.l.b16 %v149
  %v271 = vunpack.c.h.b16 %v149
  %v272 = vunpack.c.l.b16 %v150
  %v273 = vunpack.c.l.b16 %v151
  %v274 = vunpack.c.h.b16 %v151
  %v275 = vunpack.c.l.b16 %v152
  %v276 = vunpack.c.l.b16 %v153
  %v277 = vunpack.c.h.b16 %v153
  %v278 = vunpack.c.l.b16 %v154
  %v279 = vunpack.c.l.b16 %v155
  %v280 = vunpack.c.h.b16 %v155
  %v281 = vunpack.c.l.b16 %v156
  %v282 = vunpack.c.l.b16 %v157
  %v283 = vunpack.c.h.b16 %v157
  %v284 = vunpack.c.l.b16 %v158
  %v285 = vunpack.c.l.b16 %v159
  %v286 = vunpack.c.h.b16 %v159
  %v287 = vunpack.c.l.b16 %v160
  %v288 = vunpack.c.l.b16 %v161
  %v289 = vunpack.c.h.b16 %v161
  %v290 = vunpack.c.l.b16 %v162
  %v291 = vpack.c.b16 %v246, %v243
  %v292 = vpack.c.b16 %v247, %v244
  %v293 = vpack.c.b16 %v248, %v245
  %v294 = vpack.c.b16 %v252, %v249
  %v295 = vpack.c.b16 %v253, %v250
  %v296 = vpack.c.b16 %v254, %v251
  %v297 = vpack.c.b16 %v258, %v255
  %v298 = vpack.c.b16 %v259, %v256
  %v299 = vpack.c.b16 %v260, %v257
  %v300 = vpack.c.b16 %v264, %v261
  %v301 = vpack.c.b16 %v265, %v262
  %v302 = vpack.c.b16 %v266, %v263
  %v303 = vpack.c.b16 %v270, %v267
  %v304 = vpack.c.b16 %v271, %v268
  %v305 = vpack.c.b16 %v272, %v269
  %v306 = vpack.c.b16 %v276, %v273
  %v307 = vpack.c.b16 %v277, %v274
  %v308 = vpack.c.b16 %v278, %v275
  %v309 = vpack.c.b16 %v282, %v279
  %v310 = vpack.c.b16 %v283, %v280
  %v311 = vpack.c.b16 %v284, %v281
  %v312 = vpack.c.b16 %v288, %v285
  %v313 = vpack.c.b16 %v289, %v286
  %v314 = vpack.c.b16 %v290, %v287
  %339 = vmatprep.subr.bf16.mxu0 %v292
  %340 = vmatpush1.bf16.msra.mxu0 %v291
  %341 = vmatprep.subr.bf16.mxu0 %v295
  %342 = vmatpush1.bf16.msra.mxu0 %v294
  %343 = vmatprep.subr.bf16.mxu0 %v298
  %344 = vmatpush1.bf16.msra.mxu0 %v297
  %345 = vmatprep.subr.bf16.mxu0 %v301
  %346 = vmatpush1.bf16.msra.mxu0 %v300
  %347 = vmatprep.subr.bf16.mxu0 %v304
  %348 = vmatpush1.bf16.msra.mxu0 %v303
  %349 = vmatprep.subr.bf16.mxu0 %v307
  %350 = vmatpush1.bf16.msra.mxu0 %v306
  %351 = vmatprep.subr.bf16.mxu0 %v310
  %352 = vmatpush1.bf16.msra.mxu0 %v309
  %353 = vmatprep.subr.bf16.mxu0 %v313
  %354 = vmatpush1.bf16.msra.mxu0 %v312
  %355 = vmatprep.subr.bf16.mxu0 0
  %356 = vmatpush1.bf16.msra.mxu0 0
  %357 = vmatprep.subr.bf16.mxu0 0
  %358 = vmatpush1.bf16.msra.mxu0 0
  %359 = vmatprep.subr.bf16.mxu0 0
  %360 = vmatpush1.bf16.msra.mxu0 0
  %361 = vmatprep.subr.bf16.mxu0 0
  %362 = vmatpush1.bf16.msra.mxu0 0
  %363 = vmatprep.subr.bf16.mxu0 0
  %364 = vmatpush1.bf16.msra.mxu0 0
  %365 = vmatprep.subr.bf16.mxu0 0
  %366 = vmatpush1.bf16.msra.mxu0 0
  %367 = vmatprep.subr.bf16.mxu0 0
  %368 = vmatpush1.bf16.msra.mxu0 0
  %369 = vmatprep.subr.bf16.mxu0 0
  %370 = vmatpush1.bf16.msra.mxu0 0
  %371 = vmatprep.mubr.bf16.mxu0 0
  %372 = vmatmul.mubr.bf16.gmra.mrb[0].mxu0 %v195
  %v373 = vpop.f32.mrb[0].mxu0
  %v374 = vadd.f32 0.0, %v373
  %v375 = vpop.f32.mrb[0].mxu0
  %v376 = vadd.f32 0.0, %v375
  %v377 = vpop.f32.mrb[0].mxu0
  %v378 = vadd.f32 0.0, %v377
  %v379 = vpop.f32.mrb[0].mxu0
  %v380 = vadd.f32 0.0, %v379
  %381 = vmatprep.mubr.bf16.mxu0 0
  %382 = vmatmul.mubr.bf16.gmra.mrb[0].mxu0 %v196
  %v383 = vpop.f32.mrb[0].mxu0
  %v384 = vadd.f32 0.0, %v383
  %v385 = vpop.f32.mrb[0].mxu0
  %v386 = vadd.f32 0.0, %v385
  %v387 = vpop.f32.mrb[0].mxu0
  %v388 = vadd.f32 0.0, %v387
  %v389 = vpop.f32.mrb[0].mxu0
  %v390 = vadd.f32 0.0, %v389
  %391 = vmatprep.mubr.bf16.mxu0 0
  %392 = vmatmul.mubr.bf16.gmra.mrb[0].mxu0 %v197
  %v393 = vpop.f32.mrb[0].mxu0
  %v394 = vadd.f32 0.0, %v393
  %v395 = vpop.f32.mrb[0].mxu0
  %v396 = vadd.f32 0.0, %v395
  %v397 = vpop.f32.mrb[0].mxu0
  %v398 = vadd.f32 0.0, %v397
  %v399 = vpop.f32.mrb[0].mxu0
  %v400 = vadd.f32 0.0, %v399
  %401 = vmatprep.mubr.bf16.mxu0 0
  %402 = vmatmul.mubr.bf16.gmra.mrb[0].mxu0 %v198
  %v403 = vpop.f32.mrb[0].mxu0
  %v404 = vadd.f32 0.0, %v403
  %v405 = vpop.f32.mrb[0].mxu0
  %v406 = vadd.f32 0.0, %v405
  %v407 = vpop.f32.mrb[0].mxu0
  %v408 = vadd.f32 0.0, %v407
  %v409 = vpop.f32.mrb[0].mxu0
  %v410 = vadd.f32 0.0, %v409
  %411 = vmatprep.mubr.bf16.mxu0 0
  %412 = vmatmul.mubr.bf16.gmra.mrb[0].mxu0 %v199
  %v413 = vpop.f32.mrb[0].mxu0
  %v414 = vadd.f32 0.0, %v413
  %v415 = vpop.f32.mrb[0].mxu0
  %v416 = vadd.f32 0.0, %v415
  %v417 = vpop.f32.mrb[0].mxu0
  %v418 = vadd.f32 0.0, %v417
  %v419 = vpop.f32.mrb[0].mxu0
  %v420 = vadd.f32 0.0, %v419
  %421 = vmatprep.mubr.bf16.mxu0 0
  %422 = vmatmul.mubr.bf16.gmra.mrb[0].mxu0 %v200
  %v423 = vpop.f32.mrb[0].mxu0
  %v424 = vadd.f32 0.0, %v423
  %v425 = vpop.f32.mrb[0].mxu0
  %v426 = vadd.f32 0.0, %v425
  %v427 = vpop.f32.mrb[0].mxu0
  %v428 = vadd.f32 0.0, %v427
  %v429 = vpop.f32.mrb[0].mxu0
  %v430 = vadd.f32 0.0, %v429
  %431 = vmatprep.mubr.bf16.mxu0 0
  %432 = vmatmul.mubr.bf16.gmra.mrb[0].mxu0 %v201
  %v433 = vpop.f32.mrb[0].mxu0
  %v434 = vadd.f32 0.0, %v433
  %v435 = vpop.f32.mrb[0].mxu0
  %v436 = vadd.f32 0.0, %v435
  %v437 = vpop.f32.mrb[0].mxu0
  %v438 = vadd.f32 0.0, %v437
  %v439 = vpop.f32.mrb[0].mxu0
  %v440 = vadd.f32 0.0, %v439
  %441 = vmatprep.mubr.bf16.mxu0 0
  %442 = vmatmul.mubr.bf16.gmra.mrb[0].mxu0 %v202
  %v443 = vpop.f32.mrb[0].mxu0
  %v444 = vadd.f32 0.0, %v443
  %v445 = vpop.f32.mrb[0].mxu0
  %v446 = vadd.f32 0.0, %v445
  %v447 = vpop.f32.mrb[0].mxu0
  %v448 = vadd.f32 0.0, %v447
  %v449 = vpop.f32.mrb[0].mxu0
  %v450 = vadd.f32 0.0, %v449
  %451 = vdwg.mxu0
  %452 = vmatprep.subr.bf16.mxu0 0
  %453 = vmatpush1.bf16.msra.mxu0 %v293
  %454 = vmatprep.subr.bf16.mxu0 0
  %455 = vmatpush1.bf16.msra.mxu0 %v296
  %456 = vmatprep.subr.bf16.mxu0 0
  %457 = vmatpush1.bf16.msra.mxu0 %v299
  %458 = vmatprep.subr.bf16.mxu0 0
  %459 = vmatpush1.bf16.msra.mxu0 %v302
  %460 = vmatprep.subr.bf16.mxu0 0
  %461 = vmatpush1.bf16.msra.mxu0 %v305
  %462 = vmatprep.subr.bf16.mxu0 0
  %463 = vmatpush1.bf16.msra.mxu0 %v308
  %464 = vmatprep.subr.bf16.mxu0 0
  %465 = vmatpush1.bf16.msra.mxu0 %v311
  %466 = vmatprep.subr.bf16.mxu0 0
  %467 = vmatpush1.bf16.msra.mxu0 %v314
  %468 = vmatprep.subr.bf16.mxu0 0
  %469 = vmatpush1.bf16.msra.mxu0 0
  %470 = vmatprep.subr.bf16.mxu0 0
  %471 = vmatpush1.bf16.msra.mxu0 0
  %472 = vmatprep.subr.bf16.mxu0 0
  %473 = vmatpush1.bf16.msra.mxu0 0
  %474 = vmatprep.subr.bf16.mxu0 0
  %475 = vmatpush1.bf16.msra.mxu0 0
  %476 = vmatprep.subr.bf16.mxu0 0
  %477 = vmatpush1.bf16.msra.mxu0 0
  %478 = vmatprep.subr.bf16.mxu0 0
  %479 = vmatpush1.bf16.msra.mxu0 0
  %480 = vmatprep.subr.bf16.mxu0 0
  %481 = vmatpush1.bf16.msra.mxu0 0
  %482 = vmatprep.subr.bf16.mxu0 0
  %483 = vmatpush1.bf16.msra.mxu0 0
  %484 = vmatprep.mubr.bf16.mxu0 0
  %485 = vmatmul.mubr.bf16.gmra.mrb[0].mxu0 %v195
  %v486 = vpop.f32.mrb[0].mxu0
  %v487 = vadd.f32 0.0, %v486
  %v488 = vpop.f32.mrb[0].mxu0
  %v489 = vpop.f32.mrb[0].mxu0
  %v490 = vadd.f32 0.0, %v489
  %v491 = vpop.f32.mrb[0].mxu0
  %492 = vmatprep.mubr.bf16.mxu0 0
  %493 = vmatmul.mubr.bf16.gmra.mrb[0].mxu0 %v196
  %v494 = vpop.f32.mrb[0].mxu0
  %v495 = vadd.f32 0.0, %v494
  %v496 = vpop.f32.mrb[0].mxu0
  %v497 = vpop.f32.mrb[0].mxu0
  %v498 = vadd.f32 0.0, %v497
  %v499 = vpop.f32.mrb[0].mxu0
  %500 = vmatprep.mubr.bf16.mxu0 0
  %501 = vmatmul.mubr.bf16.gmra.mrb[0].mxu0 %v197
  %v502 = vpop.f32.mrb[0].mxu0
  %v503 = vadd.f32 0.0, %v502
  %v504 = vpop.f32.mrb[0].mxu0
  %v505 = vpop.f32.mrb[0].mxu0
  %v506 = vadd.f32 0.0, %v505
  %v507 = vpop.f32.mrb[0].mxu0
  %508 = vmatprep.mubr.bf16.mxu0 0
  %509 = vmatmul.mubr.bf16.gmra.mrb[0].mxu0 %v198
  %v510 = vpop.f32.mrb[0].mxu0
  %v511 = vadd.f32 0.0, %v510
  %v512 = vpop.f32.mrb[0].mxu0
  %v513 = vpop.f32.mrb[0].mxu0
  %v514 = vadd.f32 0.0, %v513
  %v515 = vpop.f32.mrb[0].mxu0
  %516 = vmatprep.mubr.bf16.mxu0 0
  %517 = vmatmul.mubr.bf16.gmra.mrb[0].mxu0 %v199
  %v518 = vpop.f32.mrb[0].mxu0
  %v519 = vadd.f32 0.0, %v518
  %v520 = vpop.f32.mrb[0].mxu0
  %v521 = vpop.f32.mrb[0].mxu0
  %v522 = vadd.f32 0.0, %v521
  %v523 = vpop.f32.mrb[0].mxu0
  %524 = vmatprep.mubr.bf16.mxu0 0
  %525 = vmatmul.mubr.bf16.gmra.mrb[0].mxu0 %v200
  %v526 = vpop.f32.mrb[0].mxu0
  %v527 = vadd.f32 0.0, %v526
  %v528 = vpop.f32.mrb[0].mxu0
  %v529 = vpop.f32.mrb[0].mxu0
  %v530 = vadd.f32 0.0, %v529
  %v531 = vpop.f32.mrb[0].mxu0
  %532 = vmatprep.mubr.bf16.mxu0 0
  %533 = vmatmul.mubr.bf16.gmra.mrb[0].mxu0 %v201
  %v534 = vpop.f32.mrb[0].mxu0
  %v535 = vadd.f32 0.0, %v534
  %v536 = vpop.f32.mrb[0].mxu0
  %v537 = vpop.f32.mrb[0].mxu0
  %v538 = vadd.f32 0.0, %v537
  %v539 = vpop.f32.mrb[0].mxu0
  %540 = vmatprep.mubr.bf16.mxu0 0
  %541 = vmatmul.mubr.bf16.gmra.mrb[0].mxu0 %v202
  %v542 = vpop.f32.mrb[0].mxu0
  %v543 = vadd.f32 0.0, %v542
  %v544 = vpop.f32.mrb[0].mxu0
  %v545 = vpop.f32.mrb[0].mxu0
  %v546 = vadd.f32 0.0, %v545
  %v547 = vpop.f32.mrb[0].mxu0
  %548 = vdwg.mxu0
  %v549 = vadd.f32 %v67, %v374
  %v550 = vadd.f32 %v68, %v376
  %v551 = vadd.f32 %v69, %v487
  %v552 = vadd.f32 %v70, %v378
  %v553 = vadd.f32 %v71, %v380
  %v554 = vadd.f32 %v72, %v490
  %v555 = vadd.f32 %v73, %v384
  %v556 = vadd.f32 %v74, %v386
  %v557 = vadd.f32 %v75, %v495
  %v558 = vadd.f32 %v76, %v388
  %v559 = vadd.f32 %v77, %v390
  %v560 = vadd.f32 %v78, %v498
  %v561 = vadd.f32 %v79, %v394
  %v562 = vadd.f32 %v80, %v396
  %v563 = vadd.f32 %v81, %v503
  %v564 = vadd.f32 %v82, %v398
  %v565 = vadd.f32 %v83, %v400
  %v566 = vadd.f32 %v84, %v506
  %v567 = vadd.f32 %v85, %v404
  %v568 = vadd.f32 %v86, %v406
  %v569 = vadd.f32 %v87, %v511
  %v570 = vadd.f32 %v88, %v408
  %v571 = vadd.f32 %v89, %v410
  %v572 = vadd.f32 %v90, %v514
  %v573 = vadd.f32 %v91, %v414
  %v574 = vadd.f32 %v92, %v416
  %v575 = vadd.f32 %v93, %v519
  %v576 = vadd.f32 %v94, %v418
  %v577 = vadd.f32 %v95, %v420
  %v578 = vadd.f32 %v96, %v522
  %v579 = vadd.f32 %v97, %v424
  %v580 = vadd.f32 %v98, %v426
  %v581 = vadd.f32 %v99, %v527
  %v582 = vadd.f32 %v100, %v428
  %v583 = vadd.f32 %v101, %v430
  %v584 = vadd.f32 %v102, %v530
  %v585 = vadd.f32 %v103, %v434
  %v586 = vadd.f32 %v104, %v436
  %v587 = vadd.f32 %v105, %v535
  %v588 = vadd.f32 %v106, %v438
  %v589 = vadd.f32 %v107, %v440
  %v590 = vadd.f32 %v108, %v538
  %v591 = vadd.f32 %v109, %v444
  %v592 = vadd.f32 %v110, %v446
  %v593 = vadd.f32 %v111, %v543
  %v594 = vadd.f32 %v112, %v448
  %v595 = vadd.f32 %v113, %v450
  %v596 = vadd.f32 %v114, %v546
  %597 = vst [vmem:[#allocation2] sm:$0xff] %v549
  %598 = vst [vmem:[#allocation2 + $0x8] sm:$0xff] %v550
  %599 = vst [vmem:[#allocation2 + $0x10] sm:$0xff] %v551
  %600 = vst [vmem:[#allocation2 + $0x18] sm:$0xff] %v552
  %601 = vst [vmem:[#allocation2 + $0x20] sm:$0xff] %v553
  %602 = vst [vmem:[#allocation2 + $0x28] sm:$0xff] %v554
  %603 = vst [vmem:[#allocation2 + $0x30] sm:$0xff] %v555
  %604 = vst [vmem:[#allocation2 + $0x38] sm:$0xff] %v556
  %605 = vst [vmem:[#allocation2 + $0x40] sm:$0xff] %v557
  %606 = vst [vmem:[#allocation2 + $0x48] sm:$0xff] %v558
  %607 = vst [vmem:[#allocation2 + $0x50] sm:$0xff] %v559
  %608 = vst [vmem:[#allocation2 + $0x58] sm:$0xff] %v560
  %609 = vst [vmem:[#allocation2 + $0x60] sm:$0xff] %v561
  %610 = vst [vmem:[#allocation2 + $0x68] sm:$0xff] %v562
  %611 = vst [vmem:[#allocation2 + $0x70] sm:$0xff] %v563
  %612 = vst [vmem:[#allocation2 + $0x78] sm:$0xff] %v564
  %613 = vst [vmem:[#allocation2 + $0x80] sm:$0xff] %v565
  %614 = vst [vmem:[#allocation2 + $0x88] sm:$0xff] %v566
  %615 = vst [vmem:[#allocation2 + $0x90] sm:$0xff] %v567
  %616 = vst [vmem:[#allocation2 + $0x98] sm:$0xff] %v568
  %617 = vst [vmem:[#allocation2 + $0xa0] sm:$0xff] %v569
  %618 = vst [vmem:[#allocation2 + $0xa8] sm:$0xff] %v570
  %619 = vst [vmem:[#allocation2 + $0xb0] sm:$0xff] %v571
  %620 = vst [vmem:[#allocation2 + $0xb8] sm:$0xff] %v572
  %621 = vst [vmem:[#allocation2 + $0xc0] sm:$0xff] %v573
  %622 = vst [vmem:[#allocation2 + $0xc8] sm:$0xff] %v574
  %623 = vst [vmem:[#allocation2 + $0xd0] sm:$0xff] %v575
  %624 = vst [vmem:[#allocation2 + $0xd8] sm:$0xff] %v576
  %625 = vst [vmem:[#allocation2 + $0xe0] sm:$0xff] %v577
  %626 = vst [vmem:[#allocation2 + $0xe8] sm:$0xff] %v578
  %627 = vst [vmem:[#allocation2 + $0xf0] sm:$0xff] %v579
  %628 = vst [vmem:[#allocation2 + $0xf8] sm:$0xff] %v580
  %629 = vst [vmem:[#allocation2 + $0x100] sm:$0xff] %v581
  %630 = vst [vmem:[#allocation2 + $0x108] sm:$0xff] %v582
  %631 = vst [vmem:[#allocation2 + $0x110] sm:$0xff] %v583
  %632 = vst [vmem:[#allocation2 + $0x118] sm:$0xff] %v584
  %633 = vst [vmem:[#allocation2 + $0x120] sm:$0xff] %v585
  %634 = vst [vmem:[#allocation2 + $0x128] sm:$0xff] %v586
  %635 = vst [vmem:[#allocation2 + $0x130] sm:$0xff] %v587
  %636 = vst [vmem:[#allocation2 + $0x138] sm:$0xff] %v588
  %637 = vst [vmem:[#allocation2 + $0x140] sm:$0xff] %v589
  %638 = vst [vmem:[#allocation2 + $0x148] sm:$0xff] %v590
  %639 = vst [vmem:[#allocation2 + $0x150] sm:$0xff] %v591
  %640 = vst [vmem:[#allocation2 + $0x158] sm:$0xff] %v592
  %641 = vst [vmem:[#allocation2 + $0x160] sm:$0xff] %v593
  %642 = vst [vmem:[#allocation2 + $0x168] sm:$0xff] %v594
  %643 = vst [vmem:[#allocation2 + $0x170] sm:$0xff] %v595
  %644 = vst [vmem:[#allocation2 + $0x178] sm:$0xff] %v596
  // Predicated region
  $region18: #{vjepa2_rope_attention_forward.3} parent=0 // pred_check
    %p645 = pneg %p15
  $region19: #{vjepa2_rope_attention_forward.3} parent=0 // pred_check_branch
    %647 = sbr.rel (%p645) target = $region21
  $region20: #{vjepa2_rope_attention_forward.3} parent=0 // pred_region
    %v648 = vld [vmem:[#allocation2] sm:$0xff]
    %v649 = vld [vmem:[#allocation2 + $0x8] sm:$0xff]
    %v650 = vld [vmem:[#allocation2 + $0x10] sm:$0xff]
    %v651 = vld [vmem:[#allocation2 + $0x18] sm:$0xff]
    %v652 = vld [vmem:[#allocation2 + $0x20] sm:$0xff]
    %v653 = vld [vmem:[#allocation2 + $0x28] sm:$0xff]
    %v654 = vld [vmem:[#allocation2 + $0x30] sm:$0xff]
    %v655 = vld [vmem:[#allocation2 + $0x38] sm:$0xff]
    %v656 = vld [vmem:[#allocation2 + $0x40] sm:$0xff]
    %v657 = vld [vmem:[#allocation2 + $0x48] sm:$0xff]
    %v658 = vld [vmem:[#allocation2 + $0x50] sm:$0xff]
    %v659 = vld [vmem:[#allocation2 + $0x58] sm:$0xff]
    %v660 = vld [vmem:[#allocation2 + $0x60] sm:$0xff]
    %v661 = vld [vmem:[#allocation2 + $0x68] sm:$0xff]
    %v662 = vld [vmem:[#allocation2 + $0x70] sm:$0xff]
    %v663 = vld [vmem:[#allocation2 + $0x78] sm:$0xff]
    %v664 = vld [vmem:[#allocation2 + $0x80] sm:$0xff]
    %v665 = vld [vmem:[#allocation2 + $0x88] sm:$0xff]
    %v666 = vld [vmem:[#allocation2 + $0x90] sm:$0xff]
    %v667 = vld [vmem:[#allocation2 + $0x98] sm:$0xff]
    %v668 = vld [vmem:[#allocation2 + $0xa0] sm:$0xff]
    %v669 = vld [vmem:[#allocation2 + $0xa8] sm:$0xff]
    %v670 = vld [vmem:[#allocation2 + $0xb0] sm:$0xff]
    %v671 = vld [vmem:[#allocation2 + $0xb8] sm:$0xff]
    %v672 = vld [vmem:[#allocation2 + $0xc0] sm:$0xff]
    %v673 = vld [vmem:[#allocation2 + $0xc8] sm:$0xff]
    %v674 = vld [vmem:[#allocation2 + $0xd0] sm:$0xff]
    %v675 = vld [vmem:[#allocation2 + $0xd8] sm:$0xff]
    %v676 = vld [vmem:[#allocation2 + $0xe0] sm:$0xff]
    %v677 = vld [vmem:[#allocation2 + $0xe8] sm:$0xff]
    %v678 = vld [vmem:[#allocation2 + $0xf0] sm:$0xff]
    %v679 = vld [vmem:[#allocation2 + $0xf8] sm:$0xff]
    %v680 = vld [vmem:[#allocation2 + $0x100] sm:$0xff]
    %v681 = vld [vmem:[#allocation2 + $0x108] sm:$0xff]
    %v682 = vld [vmem:[#allocation2 + $0x110] sm:$0xff]
    %v683 = vld [vmem:[#allocation2 + $0x118] sm:$0xff]
    %v684 = vld [vmem:[#allocation2 + $0x120] sm:$0xff]
    %v685 = vld [vmem:[#allocation2 + $0x128] sm:$0xff]
    %v686 = vld [vmem:[#allocation2 + $0x130] sm:$0xff]
    %v687 = vld [vmem:[#allocation2 + $0x138] sm:$0xff]
    %v688 = vld [vmem:[#allocation2 + $0x140] sm:$0xff]
    %v689 = vld [vmem:[#allocation2 + $0x148] sm:$0xff]
    %v690 = vld [vmem:[#allocation2 + $0x150] sm:$0xff]
    %v691 = vld [vmem:[#allocation2 + $0x158] sm:$0xff]
    %v692 = vld [vmem:[#allocation2 + $0x160] sm:$0xff]
    %v693 = vld [vmem:[#allocation2 + $0x168] sm:$0xff]
    %v694 = vld [vmem:[#allocation2 + $0x170] sm:$0xff]
    %v695 = vld [vmem:[#allocation2 + $0x178] sm:$0xff]
    %v696 = vld [vmem:[%s2] sm:$0x7]
    %v698 = vlaneseq
    %v699 = vshrl.u32 %v698, 7
    %v700 = vsub.s32 0, %v699
    %v701 = vrot.slane %v696, %v700
    %v702 = vlaneseq
    %v703 = vshrl.u32 %v702, 7
    %v704 = vsub.s32 1, %v703
    %v705 = vrot.slane %v696, %v704
    %v706 = vlaneseq
    %v707 = vshrl.u32 %v706, 7
    %v708 = vsub.s32 2, %v707
    %v709 = vrot.slane %v696, %v708
    %v713 = vadd.f32 %v648, %v701
    %v714 = vadd.f32 %v649, %v705
    %v715 = vadd.f32 %v650, %v709
    %v716 = vadd.f32 %v651, %v701
    %v717 = vadd.f32 %v652, %v705
    %v718 = vadd.f32 %v653, %v709
    %v719 = vadd.f32 %v654, %v701
    %v720 = vadd.f32 %v655, %v705
    %v721 = vadd.f32 %v656, %v709
    %v722 = vadd.f32 %v657, %v701
    %v723 = vadd.f32 %v658, %v705
    %v724 = vadd.f32 %v659, %v709
    %v725 = vadd.f32 %v660, %v701
    %v726 = vadd.f32 %v661, %v705
    %v727 = vadd.f32 %v662, %v709
    %v728 = vadd.f32 %v663, %v701
    %v729 = vadd.f32 %v664, %v705
    %v730 = vadd.f32 %v665, %v709
    %v731 = vadd.f32 %v666, %v701
    %v732 = vadd.f32 %v667, %v705
    %v733 = vadd.f32 %v668, %v709
    %v734 = vadd.f32 %v669, %v701
    %v735 = vadd.f32 %v670, %v705
    %v736 = vadd.f32 %v671, %v709
    %v737 = vadd.f32 %v672, %v701
    %v738 = vadd.f32 %v673, %v705
    %v739 = vadd.f32 %v674, %v709
    %v740 = vadd.f32 %v675, %v701
    %v741 = vadd.f32 %v676, %v705
    %v742 = vadd.f32 %v677, %v709
    %v743 = vadd.f32 %v678, %v701
    %v744 = vadd.f32 %v679, %v705
    %v745 = vadd.f32 %v680, %v709
    %v746 = vadd.f32 %v681, %v701
    %v747 = vadd.f32 %v682, %v705
    %v748 = vadd.f32 %v683, %v709
    %v749 = vadd.f32 %v684, %v701
    %v750 = vadd.f32 %v685, %v705
    %v751 = vadd.f32 %v686, %v709
    %v752 = vadd.f32 %v687, %v701
    %v753 = vadd.f32 %v688, %v705
    %v754 = vadd.f32 %v689, %v709
    %v755 = vadd.f32 %v690, %v701
    %v756 = vadd.f32 %v691, %v705
    %v757 = vadd.f32 %v692, %v709
    %v758 = vadd.f32 %v693, %v701
    %v759 = vadd.f32 %v694, %v705
    %v760 = vadd.f32 %v695, %v709
    %761 = vst [vmem:[%s3] sm:$0xff] %v713
    %762 = vst [vmem:[%s3 + $0x8] sm:$0xff] %v714
    %763 = vst [vmem:[%s3 + $0x10] sm:$0xff] %v715
    %764 = vst [vmem:[%s3 + $0x18] sm:$0xff] %v716
    %765 = vst [vmem:[%s3 + $0x20] sm:$0xff] %v717
    %766 = vst [vmem:[%s3 + $0x28] sm:$0xff] %v718
    %767 = vst [vmem:[%s3 + $0x30] sm:$0xff] %v719
    %768 = vst [vmem:[%s3 + $0x38] sm:$0xff] %v720
    %769 = vst [vmem:[%s3 + $0x40] sm:$0xff] %v721
    %770 = vst [vmem:[%s3 + $0x48] sm:$0xff] %v722
    %771 = vst [vmem:[%s3 + $0x50] sm:$0xff] %v723
    %772 = vst [vmem:[%s3 + $0x58] sm:$0xff] %v724
    %773 = vst [vmem:[%s3 + $0x60] sm:$0xff] %v725
    %774 = vst [vmem:[%s3 + $0x68] sm:$0xff] %v726
    %775 = vst [vmem:[%s3 + $0x70] sm:$0xff] %v727
    %776 = vst [vmem:[%s3 + $0x78] sm:$0xff] %v728
    %777 = vst [vmem:[%s3 + $0x80] sm:$0xff] %v729
    %778 = vst [vmem:[%s3 + $0x88] sm:$0xff] %v730
    %779 = vst [vmem:[%s3 + $0x90] sm:$0xff] %v731
    %780 = vst [vmem:[%s3 + $0x98] sm:$0xff] %v732
    %781 = vst [vmem:[%s3 + $0xa0] sm:$0xff] %v733
    %782 = vst [vmem:[%s3 + $0xa8] sm:$0xff] %v734
    %783 = vst [vmem:[%s3 + $0xb0] sm:$0xff] %v735
    %784 = vst [vmem:[%s3 + $0xb8] sm:$0xff] %v736
    %785 = vst [vmem:[%s3 + $0xc0] sm:$0xff] %v737
    %786 = vst [vmem:[%s3 + $0xc8] sm:$0xff] %v738
    %787 = vst [vmem:[%s3 + $0xd0] sm:$0xff] %v739
    %788 = vst [vmem:[%s3 + $0xd8] sm:$0xff] %v740
    %789 = vst [vmem:[%s3 + $0xe0] sm:$0xff] %v741
    %790 = vst [vmem:[%s3 + $0xe8] sm:$0xff] %v742
    %791 = vst [vmem:[%s3 + $0xf0] sm:$0xff] %v743
    %792 = vst [vmem:[%s3 + $0xf8] sm:$0xff] %v744
    %793 = vst [vmem:[%s3 + $0x100] sm:$0xff] %v745
    %794 = vst [vmem:[%s3 + $0x108] sm:$0xff] %v746
    %795 = vst [vmem:[%s3 + $0x110] sm:$0xff] %v747
    %796 = vst [vmem:[%s3 + $0x118] sm:$0xff] %v748
    %797 = vst [vmem:[%s3 + $0x120] sm:$0xff] %v749
    %798 = vst [vmem:[%s3 + $0x128] sm:$0xff] %v750
    %799 = vst [vmem:[%s3 + $0x130] sm:$0xff] %v751
    %800 = vst [vmem:[%s3 + $0x138] sm:$0xff] %v752
    %801 = vst [vmem:[%s3 + $0x140] sm:$0xff] %v753
    %802 = vst [vmem:[%s3 + $0x148] sm:$0xff] %v754
    %803 = vst [vmem:[%s3 + $0x150] sm:$0xff] %v755
    %804 = vst [vmem:[%s3 + $0x158] sm:$0xff] %v756
    %805 = vst [vmem:[%s3 + $0x160] sm:$0xff] %v757
    %806 = vst [vmem:[%s3 + $0x168] sm:$0xff] %v758
    %807 = vst [vmem:[%s3 + $0x170] sm:$0xff] %v759
    %808 = vst [vmem:[%s3 + $0x178] sm:$0xff] %v760
  $region21: #{vjepa2_rope_attention_forward.3} parent=0 // pred_fallthru
    _
  // Predicated region
  $region22: #{vjepa2_rope_attention_forward.3} parent=0 // pred_check
    _
  $region23: #{vjepa2_rope_attention_forward.3} parent=0 // pred_check_branch
    %810 = sbr.rel (0) target = $region25
  $region24: #{vjepa2_rope_attention_forward.3} parent=0 // pred_region
    _
  $region25: #{vjepa2_rope_attention_forward.3} parent=0 // pred_fallthru
    _
  // Predicated region
  $region26: #{vjepa2_rope_attention_forward.3} parent=0 // pred_check
    _
  $region27: #{vjepa2_rope_attention_forward.3} parent=0 // pred_check_branch
    %812 = sbr.rel (0) target = $region29
  $region28: #{vjepa2_rope_attention_forward.3} parent=0 // pred_region
    _
  $region29: #{vjepa2_rope_attention_forward.3} parent=0 // pred_fallthru
    _

// kernel: vjepa2_rope_attention_forward.5
$region0: #{vjepa2_rope_attention_forward.5}
  #allocation0 [shape = 'u32[]', space=smem, size = 0x4, offset = 0x4, fixed_abs, tag = 'smem constant byte address 0x4 - core index']
  #allocation1 [shape = 'u32[144,128]{1,0:T(1,128)}', space=vmem, size = 0x12000, scoped, tag = 'internal scratch']
  #allocation2 [shape = 'f32[128,128]{1,0:T(8,128)}', space=vmem, size = 0x10000, scoped, tag = 'scratch operand']
  %s0 = inlined_call_operand.vmem [shape: bf16[128,128], index: 0, kind: input, shape index: {}]
  %s1 = inlined_call_operand.vmem [shape: bf16[128,128], index: 1, kind: input, shape index: {}]
  %s2 = inlined_call_operand.vmem [shape: f32[1,128], index: 2, kind: input, shape index: {}]
  %s3 = inlined_call_operand.hbm [shape: f32[128,128], index: 3, kind: output, shape index: {}]
  %s4 = sld [smem:[#allocation0]]
  $region30: #{vjepa2_rope_attention_forward.5} parent=0
    _
  %s6 = ssub.s32 1, %s4
  %s7 = scalar_select 0, %s6, %s4
  $region1: #{vjepa2_rope_attention_forward.5} parent=0
    #allocation3 [shape = 'u8[65536]{0}', space=vmem, size = 0x10000, scoped, tag = 'output window, operand 0, single buffered']
    #allocation4 [shape = 's32[1]{0}', space=sflag, size = 0x4, scoped, tag = 'scoped memory for vjepa2_rope_attention_forward.5']
    %8 = vsyncpa [#allocation4], 0
    // Predicated region
    $region2: #{vjepa2_rope_attention_forward.5} parent=1 // pred_check
      _
    $region3: #{vjepa2_rope_attention_forward.5} parent=1 // pred_check_branch
      %10 = sbr.rel (0) target = $region5
    $region4: #{vjepa2_rope_attention_forward.5} parent=1 // pred_region
      _
    $region5: #{vjepa2_rope_attention_forward.5} parent=1 // pred_fallthru
      _
    // Predicated region
    $region6: #{vjepa2_rope_attention_forward.5} parent=1 // pred_check
      _
    $region7: #{vjepa2_rope_attention_forward.5} parent=1 // pred_check_branch
      %12 = sbr.rel (0) target = $region9
    $region8: #{vjepa2_rope_attention_forward.5} parent=1 // pred_region
      _
    $region9: #{vjepa2_rope_attention_forward.5} parent=1 // pred_fallthru
      _
    // Predicated region
    $region10: #{vjepa2_rope_attention_forward.5} parent=1 // pred_check
      _
    $region11: #{vjepa2_rope_attention_forward.5} parent=1 // pred_check_branch
      %14 = sbr.rel (0) target = $region13
    $region12: #{vjepa2_rope_attention_forward.5} parent=1 // pred_region
      _
    $region13: #{vjepa2_rope_attention_forward.5} parent=1 // pred_fallthru
      _
    %p16 = scmp.eq.s32.totalorder 0, 0
    // Predicated region
    $region14: #{vjepa2_rope_attention_forward.5} parent=1 // pred_check
      %p17 = pneg %p16
    $region15: #{vjepa2_rope_attention_forward.5} parent=1 // pred_check_branch
      %19 = sbr.rel (%p17) target = $region17
    $region16: #{vjepa2_rope_attention_forward.5} parent=1 // pred_region
      %20 = vst [vmem:[#allocation2] sm:$0xff] 0.0
      %21 = vst [vmem:[#allocation2 + $0x8] sm:$0xff] 0.0
      %22 = vst [vmem:[#allocation2 + $0x10] sm:$0xff] 0.0
      %23 = vst [vmem:[#allocation2 + $0x18] sm:$0xff] 0.0
      %24 = vst [vmem:[#allocation2 + $0x20] sm:$0xff] 0.0
      %25 = vst [vmem:[#allocation2 + $0x28] sm:$0xff] 0.0
      %26 = vst [vmem:[#allocation2 + $0x30] sm:$0xff] 0.0
      %27 = vst [vmem:[#allocation2 + $0x38] sm:$0xff] 0.0
      %28 = vst [vmem:[#allocation2 + $0x40] sm:$0xff] 0.0
      %29 = vst [vmem:[#allocation2 + $0x48] sm:$0xff] 0.0
      %30 = vst [vmem:[#allocation2 + $0x50] sm:$0xff] 0.0
      %31 = vst [vmem:[#allocation2 + $0x58] sm:$0xff] 0.0
      %32 = vst [vmem:[#allocation2 + $0x60] sm:$0xff] 0.0
      %33 = vst [vmem:[#allocation2 + $0x68] sm:$0xff] 0.0
      %34 = vst [vmem:[#allocation2 + $0x70] sm:$0xff] 0.0
      %35 = vst [vmem:[#allocation2 + $0x78] sm:$0xff] 0.0
    $region17: #{vjepa2_rope_attention_forward.5} parent=1 // pred_fallthru
      _
    %v36 = vld [vmem:[#allocation2] sm:$0xff]
    %v37 = vld [vmem:[#allocation2 + $0x8] sm:$0xff]
    %v38 = vld [vmem:[#allocation2 + $0x10] sm:$0xff]
    %v39 = vld [vmem:[#allocation2 + $0x18] sm:$0xff]
    %v40 = vld [vmem:[#allocation2 + $0x20] sm:$0xff]
    %v41 = vld [vmem:[#allocation2 + $0x28] sm:$0xff]
    %v42 = vld [vmem:[#allocation2 + $0x30] sm:$0xff]
    %v43 = vld [vmem:[#allocation2 + $0x38] sm:$0xff]
    %v44 = vld [vmem:[#allocation2 + $0x40] sm:$0xff]
    %v45 = vld [vmem:[#allocation2 + $0x48] sm:$0xff]
    %v46 = vld [vmem:[#allocation2 + $0x50] sm:$0xff]
    %v47 = vld [vmem:[#allocation2 + $0x58] sm:$0xff]
    %v48 = vld [vmem:[#allocation2 + $0x60] sm:$0xff]
    %v49 = vld [vmem:[#allocation2 + $0x68] sm:$0xff]
    %v50 = vld [vmem:[#allocation2 + $0x70] sm:$0xff]
    %v51 = vld [vmem:[#allocation2 + $0x78] sm:$0xff]
    %v52 = vld [vmem:[%s0] sm:$0xf]
    %v53 = vld [vmem:[%s0 + $0x4] sm:$0xf]
    %v54 = vld [vmem:[%s0 + $0x8] sm:$0xf]
    %v55 = vld [vmem:[%s0 + $0xc] sm:$0xf]
    %v56 = vld [vmem:[%s0 + $0x10] sm:$0xf]
    %v57 = vld [vmem:[%s0 + $0x14] sm:$0xf]
    %v58 = vld [vmem:[%s0 + $0x18] sm:$0xf]
    %v59 = vld [vmem:[%s0 + $0x1c] sm:$0xf]
    %v60 = vld [vmem:[%s0 + $0x20] sm:$0xf]
    %v61 = vld [vmem:[%s0 + $0x24] sm:$0xf]
    %v62 = vld [vmem:[%s0 + $0x28] sm:$0xf]
    %v63 = vld [vmem:[%s0 + $0x2c] sm:$0xf]
    %v64 = vld [vmem:[%s0 + $0x30] sm:$0xf]
    %v65 = vld [vmem:[%s0 + $0x34] sm:$0xf]
    %v66 = vld [vmem:[%s0 + $0x38] sm:$0xf]
    %v67 = vld [vmem:[%s0 + $0x3c] sm:$0xf]
    %v68 = vld [vmem:[%s1] sm:$0xf]
    %v69 = vld [vmem:[%s1 + $0x4] sm:$0xf]
    %v70 = vld [vmem:[%s1 + $0x8] sm:$0xf]
    %v71 = vld [vmem:[%s1 + $0xc] sm:$0xf]
    %v72 = vld [vmem:[%s1 + $0x10] sm:$0xf]
    %v73 = vld [vmem:[%s1 + $0x14] sm:$0xf]
    %v74 = vld [vmem:[%s1 + $0x18] sm:$0xf]
    %v75 = vld [vmem:[%s1 + $0x1c] sm:$0xf]
    %v76 = vld [vmem:[%s1 + $0x20] sm:$0xf]
    %v77 = vld [vmem:[%s1 + $0x24] sm:$0xf]
    %v78 = vld [vmem:[%s1 + $0x28] sm:$0xf]
    %v79 = vld [vmem:[%s1 + $0x2c] sm:$0xf]
    %v80 = vld [vmem:[%s1 + $0x30] sm:$0xf]
    %v81 = vld [vmem:[%s1 + $0x34] sm:$0xf]
    %v82 = vld [vmem:[%s1 + $0x38] sm:$0xf]
    %v83 = vld [vmem:[%s1 + $0x3c] sm:$0xf]
    %v100 = vunpack.c.l.b16 %v52
    %v101 = vunpack.c.l.b16 %v53
    %v102 = vunpack.c.l.b16 %v54
    %v103 = vunpack.c.l.b16 %v55
    %v104 = vunpack.c.l.b16 %v56
    %v105 = vunpack.c.l.b16 %v57
    %v106 = vunpack.c.l.b16 %v58
    %v107 = vunpack.c.l.b16 %v59
    %v108 = vunpack.c.l.b16 %v60
    %v109 = vunpack.c.l.b16 %v61
    %v110 = vunpack.c.l.b16 %v62
    %v111 = vunpack.c.l.b16 %v63
    %v112 = vunpack.c.l.b16 %v64
    %v113 = vunpack.c.l.b16 %v65
    %v114 = vunpack.c.l.b16 %v66
    %v115 = vunpack.c.l.b16 %v67
    %v116 = vpack.c.b16 %v101, %v100
    %v117 = vpack.c.b16 %v103, %v102
    %v118 = vpack.c.b16 %v105, %v104
    %v119 = vpack.c.b16 %v107, %v106
    %v120 = vpack.c.b16 %v109, %v108
    %v121 = vpack.c.b16 %v111, %v110
    %v122 = vpack.c.b16 %v113, %v112
    %v123 = vpack.c.b16 %v115, %v114
    %v148 = vunpack.c.l.b16 %v68
    %v149 = vunpack.c.l.b16 %v69
    %v150 = vunpack.c.l.b16 %v70
    %v151 = vunpack.c.l.b16 %v71
    %v152 = vunpack.c.l.b16 %v72
    %v153 = vunpack.c.l.b16 %v73
    %v154 = vunpack.c.l.b16 %v74
    %v155 = vunpack.c.l.b16 %v75
    %v156 = vunpack.c.l.b16 %v76
    %v157 = vunpack.c.l.b16 %v77
    %v158 = vunpack.c.l.b16 %v78
    %v159 = vunpack.c.l.b16 %v79
    %v160 = vunpack.c.l.b16 %v80
    %v161 = vunpack.c.l.b16 %v81
    %v162 = vunpack.c.l.b16 %v82
    %v163 = vunpack.c.l.b16 %v83
    %v164 = vpack.c.b16 %v149, %v148
    %v165 = vpack.c.b16 %v151, %v150
    %v166 = vpack.c.b16 %v153, %v152
    %v167 = vpack.c.b16 %v155, %v154
    %v168 = vpack.c.b16 %v157, %v156
    %v169 = vpack.c.b16 %v159, %v158
    %v170 = vpack.c.b16 %v161, %v160
    %v171 = vpack.c.b16 %v163, %v162
    %180 = vmatprep.subr.bf16.mxu0 0
    %181 = vmatpush1.bf16.msra.mxu0 %v164
    %182 = vmatprep.subr.bf16.mxu0 0
    %183 = vmatpush1.bf16.msra.mxu0 %v165
    %184 = vmatprep.subr.bf16.mxu0 0
    %185 = vmatpush1.bf16.msra.mxu0 %v166
    %186 = vmatprep.subr.bf16.mxu0 0
    %187 = vmatpush1.bf16.msra.mxu0 %v167
    %188 = vmatprep.subr.bf16.mxu0 0
    %189 = vmatpush1.bf16.msra.mxu0 %v168
    %190 = vmatprep.subr.bf16.mxu0 0
    %191 = vmatpush1.bf16.msra.mxu0 %v169
    %192 = vmatprep.subr.bf16.mxu0 0
    %193 = vmatpush1.bf16.msra.mxu0 %v170
    %194 = vmatprep.subr.bf16.mxu0 0
    %195 = vmatpush1.bf16.msra.mxu0 %v171
    %196 = vmatprep.subr.bf16.mxu0 0
    %197 = vmatpush1.bf16.msra.mxu0 0
    %198 = vmatprep.subr.bf16.mxu0 0
    %199 = vmatpush1.bf16.msra.mxu0 0
    %200 = vmatprep.subr.bf16.mxu0 0
    %201 = vmatpush1.bf16.msra.mxu0 0
    %202 = vmatprep.subr.bf16.mxu0 0
    %203 = vmatpush1.bf16.msra.mxu0 0
    %204 = vmatprep.subr.bf16.mxu0 0
    %205 = vmatpush1.bf16.msra.mxu0 0
    %206 = vmatprep.subr.bf16.mxu0 0
    %207 = vmatpush1.bf16.msra.mxu0 0
    %208 = vmatprep.subr.bf16.mxu0 0
    %209 = vmatpush1.bf16.msra.mxu0 0
    %210 = vmatprep.subr.bf16.mxu0 0
    %211 = vmatpush1.bf16.msra.mxu0 0
    %212 = vmatprep.mubr.bf16.mxu0 0
    %213 = vmatmul.mubr.bf16.gmra.mrb[0].mxu0 %v116
    %v214 = vpop.f32.mrb[0].mxu0
    %v215 = vadd.f32 0.0, %v214
    %v216 = vpop.f32.mrb[0].mxu0
    %v217 = vpop.f32.mrb[0].mxu0
    %v218 = vadd.f32 0.0, %v217
    %v219 = vpop.f32.mrb[0].mxu0
    %220 = vmatprep.mubr.bf16.mxu0 0
    %221 = vmatmul.mubr.bf16.gmra.mrb[0].mxu0 %v117
    %v222 = vpop.f32.mrb[0].mxu0
    %v223 = vadd.f32 0.0, %v222
    %v224 = vpop.f32.mrb[0].mxu0
    %v225 = vpop.f32.mrb[0].mxu0
    %v226 = vadd.f32 0.0, %v225
    %v227 = vpop.f32.mrb[0].mxu0
    %228 = vmatprep.mubr.bf16.mxu0 0
    %229 = vmatmul.mubr.bf16.gmra.mrb[0].mxu0 %v118
    %v230 = vpop.f32.mrb[0].mxu0
    %v231 = vadd.f32 0.0, %v230
    %v232 = vpop.f32.mrb[0].mxu0
    %v233 = vpop.f32.mrb[0].mxu0
    %v234 = vadd.f32 0.0, %v233
    %v235 = vpop.f32.mrb[0].mxu0
    %236 = vmatprep.mubr.bf16.mxu0 0
    %237 = vmatmul.mubr.bf16.gmra.mrb[0].mxu0 %v119
    %v238 = vpop.f32.mrb[0].mxu0
    %v239 = vadd.f32 0.0, %v238
    %v240 = vpop.f32.mrb[0].mxu0
    %v241 = vpop.f32.mrb[0].mxu0
    %v242 = vadd.f32 0.0, %v241
    %v243 = vpop.f32.mrb[0].mxu0
    %244 = vmatprep.mubr.bf16.mxu0 0
    %245 = vmatmul.mubr.bf16.gmra.mrb[0].mxu0 %v120
    %v246 = vpop.f32.mrb[0].mxu0
    %v247 = vadd.f32 0.0, %v246
    %v248 = vpop.f32.mrb[0].mxu0
    %v249 = vpop.f32.mrb[0].mxu0
    %v250 = vadd.f32 0.0, %v249
    %v251 = vpop.f32.mrb[0].mxu0
    %252 = vmatprep.mubr.bf16.mxu0 0
    %253 = vmatmul.mubr.bf16.gmra.mrb[0].mxu0 %v121
    %v254 = vpop.f32.mrb[0].mxu0
    %v255 = vadd.f32 0.0, %v254
    %v256 = vpop.f32.mrb[0].mxu0
    %v257 = vpop.f32.mrb[0].mxu0
    %v258 = vadd.f32 0.0, %v257
    %v259 = vpop.f32.mrb[0].mxu0
    %260 = vmatprep.mubr.bf16.mxu0 0
    %261 = vmatmul.mubr.bf16.gmra.mrb[0].mxu0 %v122
    %v262 = vpop.f32.mrb[0].mxu0
    %v263 = vadd.f32 0.0, %v262
    %v264 = vpop.f32.mrb[0].mxu0
    %v265 = vpop.f32.mrb[0].mxu0
    %v266 = vadd.f32 0.0, %v265
    %v267 = vpop.f32.mrb[0].mxu0
    %268 = vmatprep.mubr.bf16.mxu0 0
    %269 = vmatmul.mubr.bf16.gmra.mrb[0].mxu0 %v123
    %v270 = vpop.f32.mrb[0].mxu0
    %v271 = vadd.f32 0.0, %v270
    %v272 = vpop.f32.mrb[0].mxu0
    %v273 = vpop.f32.mrb[0].mxu0
    %v274 = vadd.f32 0.0, %v273
    %v275 = vpop.f32.mrb[0].mxu0
    %276 = vdwg.mxu0
    %v277 = vadd.f32 %v36, %v215
    %v278 = vadd.f32 %v37, %v218
    %v279 = vadd.f32 %v38, %v223
    %v280 = vadd.f32 %v39, %v226
    %v281 = vadd.f32 %v40, %v231
    %v282 = vadd.f32 %v41, %v234
    %v283 = vadd.f32 %v42, %v239
    %v284 = vadd.f32 %v43, %v242
    %v285 = vadd.f32 %v44, %v247
    %v286 = vadd.f32 %v45, %v250
    %v287 = vadd.f32 %v46, %v255
    %v288 = vadd.f32 %v47, %v258
    %v289 = vadd.f32 %v48, %v263
    %v290 = vadd.f32 %v49, %v266
    %v291 = vadd.f32 %v50, %v271
    %v292 = vadd.f32 %v51, %v274
    %293 = vst [vmem:[#allocation2] sm:$0xff] %v277
    %294 = vst [vmem:[#allocation2 + $0x8] sm:$0xff] %v278
    %295 = vst [vmem:[#allocation2 + $0x10] sm:$0xff] %v279
    %296 = vst [vmem:[#allocation2 + $0x18] sm:$0xff] %v280
    %297 = vst [vmem:[#allocation2 + $0x20] sm:$0xff] %v281
    %298 = vst [vmem:[#allocation2 + $0x28] sm:$0xff] %v282
    %299 = vst [vmem:[#allocation2 + $0x30] sm:$0xff] %v283
    %300 = vst [vmem:[#allocation2 + $0x38] sm:$0xff] %v284
    %301 = vst [vmem:[#allocation2 + $0x40] sm:$0xff] %v285
    %302 = vst [vmem:[#allocation2 + $0x48] sm:$0xff] %v286
    %303 = vst [vmem:[#allocation2 + $0x50] sm:$0xff] %v287
    %304 = vst [vmem:[#allocation2 + $0x58] sm:$0xff] %v288
    %305 = vst [vmem:[#allocation2 + $0x60] sm:$0xff] %v289
    %306 = vst [vmem:[#allocation2 + $0x68] sm:$0xff] %v290
    %307 = vst [vmem:[#allocation2 + $0x70] sm:$0xff] %v291
    %308 = vst [vmem:[#allocation2 + $0x78] sm:$0xff] %v292
    // Predicated region
    $region18: #{vjepa2_rope_attention_forward.5} parent=1 // pred_check
      %p309 = pneg %p16
    $region19: #{vjepa2_rope_attention_forward.5} parent=1 // pred_check_branch
      %311 = sbr.rel (%p309) target = $region21
    $region20: #{vjepa2_rope_attention_forward.5} parent=1 // pred_region
      %v312 = vld [vmem:[#allocation2] sm:$0xff]
      %v313 = vld [vmem:[#allocation2 + $0x8] sm:$0xff]
      %v314 = vld [vmem:[#allocation2 + $0x10] sm:$0xff]
      %v315 = vld [vmem:[#allocation2 + $0x18] sm:$0xff]
      %v316 = vld [vmem:[#allocation2 + $0x20] sm:$0xff]
      %v317 = vld [vmem:[#allocation2 + $0x28] sm:$0xff]
      %v318 = vld [vmem:[#allocation2 + $0x30] sm:$0xff]
      %v319 = vld [vmem:[#allocation2 + $0x38] sm:$0xff]
      %v320 = vld [vmem:[#allocation2 + $0x40] sm:$0xff]
      %v321 = vld [vmem:[#allocation2 + $0x48] sm:$0xff]
      %v322 = vld [vmem:[#allocation2 + $0x50] sm:$0xff]
      %v323 = vld [vmem:[#allocation2 + $0x58] sm:$0xff]
      %v324 = vld [vmem:[#allocation2 + $0x60] sm:$0xff]
      %v325 = vld [vmem:[#allocation2 + $0x68] sm:$0xff]
      %v326 = vld [vmem:[#allocation2 + $0x70] sm:$0xff]
      %v327 = vld [vmem:[#allocation2 + $0x78] sm:$0xff]
      %v328 = vld [vmem:[%s2] sm:$0x1]
      %v330 = vlaneseq
      %v331 = vshrl.u32 %v330, 7
      %v332 = vsub.s32 0, %v331
      %v333 = vrot.slane %v328, %v332
      %v335 = vadd.f32 %v312, %v333
      %v336 = vadd.f32 %v313, %v333
      %v337 = vadd.f32 %v314, %v333
      %v338 = vadd.f32 %v315, %v333
      %v339 = vadd.f32 %v316, %v333
      %v340 = vadd.f32 %v317, %v333
      %v341 = vadd.f32 %v318, %v333
      %v342 = vadd.f32 %v319, %v333
      %v343 = vadd.f32 %v320, %v333
      %v344 = vadd.f32 %v321, %v333
      %v345 = vadd.f32 %v322, %v333
      %v346 = vadd.f32 %v323, %v333
      %v347 = vadd.f32 %v324, %v333
      %v348 = vadd.f32 %v325, %v333
      %v349 = vadd.f32 %v326, %v333
      %v350 = vadd.f32 %v327, %v333
      %351 = vst [vmem:[#allocation3] sm:$0xff] %v335
      %352 = vst [vmem:[#allocation3 + $0x8] sm:$0xff] %v336
      %353 = vst [vmem:[#allocation3 + $0x10] sm:$0xff] %v337
      %354 = vst [vmem:[#allocation3 + $0x18] sm:$0xff] %v338
      %355 = vst [vmem:[#allocation3 + $0x20] sm:$0xff] %v339
      %356 = vst [vmem:[#allocation3 + $0x28] sm:$0xff] %v340
      %357 = vst [vmem:[#allocation3 + $0x30] sm:$0xff] %v341
      %358 = vst [vmem:[#allocation3 + $0x38] sm:$0xff] %v342
      %359 = vst [vmem:[#allocation3 + $0x40] sm:$0xff] %v343
      %360 = vst [vmem:[#allocation3 + $0x48] sm:$0xff] %v344
      %361 = vst [vmem:[#allocation3 + $0x50] sm:$0xff] %v345
      %362 = vst [vmem:[#allocation3 + $0x58] sm:$0xff] %v346
      %363 = vst [vmem:[#allocation3 + $0x60] sm:$0xff] %v347
      %364 = vst [vmem:[#allocation3 + $0x68] sm:$0xff] %v348
      %365 = vst [vmem:[#allocation3 + $0x70] sm:$0xff] %v349
      %366 = vst [vmem:[#allocation3 + $0x78] sm:$0xff] %v350
    $region21: #{vjepa2_rope_attention_forward.5} parent=1 // pred_fallthru
      _
    // Predicated region
    $region22: #{vjepa2_rope_attention_forward.5} parent=1 // pred_check
      _
    $region23: #{vjepa2_rope_attention_forward.5} parent=1 // pred_check_branch
      %368 = sbr.rel (0) target = $region25
    $region24: #{vjepa2_rope_attention_forward.5} parent=1 // pred_region
      %s370 = ssub.s32 2048, 2048
      %371 = vsyncadd [#allocation4], %s370
      %s372 = sshll.u32 [#allocation3], 4
      %s373 = int_to_ptr.vmem [resolvable:$true] %s372
      %378 = dma.vmem_to_hbm [thread:$0]  %s373, 2048, %s3, [#allocation4], 128, 128, 8
    $region25: #{vjepa2_rope_attention_forward.5} parent=1 // pred_fallthru
      _
    // Predicated region
    $region26: #{vjepa2_rope_attention_forward.5} parent=1 // pred_check
      _
    $region27: #{vjepa2_rope_attention_forward.5} parent=1 // pred_check_branch
      %380 = sbr.rel (0) target = $region29
    $region28: #{vjepa2_rope_attention_forward.5} parent=1 // pred_region
      %381 = dma.done [#allocation4], 2048
    $region29: #{vjepa2_rope_attention_forward.5} parent=1 // pred_fallthru
      _
    %382 = vsyncpa [#allocation4], 1

// kernel: vjepa2_rope_attention_forward.4
$region0: #{vjepa2_rope_attention_forward.4}
  #allocation0 [shape = 'u32[]', space=smem, size = 0x4, offset = 0x4, fixed_abs, tag = 'smem constant byte address 0x4 - core index']
  #allocation1 [shape = 'u32[144,128]{1,0:T(1,128)}', space=vmem, size = 0x12000, scoped, tag = 'internal scratch']
  #allocation2 [shape = 'bf16[2,64,64]{2,1,0:T(16,128)(2,1)}', space=vmem, size = 0x8000, scoped, tag = 'scratch operand']
  #allocation3 [shape = 'f32[2,64,1]{2,1,0:T(8,128)}', space=vmem, size = 0x10000, scoped, tag = 'scratch operand']
  #allocation4 [shape = 'f32[2,64,1]{2,1,0:T(8,128)}', space=vmem, size = 0x10000, scoped, tag = 'scratch operand']
  #allocation5 [shape = 'f32[2,64,64]{2,1,0:T(8,128)}', space=vmem, size = 0x10000, scoped, tag = 'scratch operand']
  %s0 = inlined_call_operand.vmem [shape: f32[3,2,2,64,64], index: 0, kind: input, shape index: {}, may-alias: {0,1,2}]
  %s1 = inlined_call_operand.vmem [shape: f32[3,2,2,64,64], index: 1, kind: input, shape index: {}, may-alias: {0,1,2}]
  %s2 = inlined_call_operand.vmem [shape: f32[3,2,2,64,64], index: 2, kind: input, shape index: {}, may-alias: {0,1,2}]
  %s3 = inlined_call_operand.vmem [shape: f32[1,64,64], index: 3, kind: input, shape index: {}, may-alias: {3,5}]
  %s4 = inlined_call_operand.vmem [shape: f32[1,64,64], index: 4, kind: input, shape index: {}, may-alias: {4,6}]
  %s5 = inlined_call_operand.vmem [shape: f32[1,64,64], index: 5, kind: input, shape index: {}, may-alias: {3,5}]
  %s6 = inlined_call_operand.vmem [shape: f32[1,64,64], index: 6, kind: input, shape index: {}, may-alias: {4,6}]
  %s7 = inlined_call_operand.vmem [shape: f32[2,64,128], index: 7, kind: output, shape index: {}]
  %s8 = sld [smem:[#allocation0]]
  $region69: #{vjepa2_rope_attention_forward.4} parent=0
    _
  %s10 = ssub.s32 1, %s8
  %s11 = scalar_select 0, %s10, %s8
  loop: start=0, step=1, limit=4
  $region2: #{vjepa2_rope_attention_forward.4} parent=0 // loop_pre_header
    _
  $region3: #{vjepa2_rope_attention_forward.4} parent=0 // loop_header
    %s13 = sphi 0, %s17
    %p14 = scmp.ge.s32.totalorder %s13, 4
    %s20 = sphi 0, %s46
    %s21 = sphi 0, %s42
    %s22 = sphi 0, %s38
    %s23 = sphi 0, %s34
    %s24 = sphi 0, %s20
    %s25 = sphi 0, %s21
    %s26 = sphi 0, %s22
    %s27 = sphi 0, %s23
    %s28 = sphi 0, %s24
    %s29 = sphi 0, %s25
    %s30 = sphi 0, %s26
    %s31 = sphi 0, %s27
    %s53 = sphi 0, %s55
    %s56 = sphi 0, %s53
    %s57 = sphi 0, %s56
    %s73 = sphi 0, %s57
    %s83 = sphi 0, %s85
    %s86 = sphi 0, %s83
    %s87 = sphi 0, %s86
    %s103 = sphi 0, %s87
    %s113 = sphi 0, %s115
    %s116 = sphi 0, %s113
    %s117 = sphi 0, %s116
    %s133 = sphi 0, %s117
    %s139 = sphi 0, %s141
    %s142 = sphi 0, %s139
    %s143 = sphi 0, %s142
    %s159 = sphi 0, %s143
    %s165 = sphi 0, %s167
    %s168 = sphi 0, %s165
    %s169 = sphi 0, %s168
    %s185 = sphi 0, %s169
    %s191 = sphi 0, %s193
    %s194 = sphi 0, %s191
    %s195 = sphi 0, %s194
    %s211 = sphi 0, %s195
    %s217 = sphi 0, %s219
    %s220 = sphi 0, %s217
    %s221 = sphi 0, %s220
    %s237 = sphi 0, %s221
    %s247 = sphi 0, %s249
    %s250 = sphi 0, %s247
    %s251 = sphi 0, %s250
    %s267 = sphi 0, %s251
  $region4: #{vjepa2_rope_attention_forward.4} parent=0 // loop_header_branch
    %16 = sbr.rel (%p14) target = $region8
  $region5: #{vjepa2_rope_attention_forward.4} parent=0 // loop_body
    %s18 = ssub.s32 %s13, 1
    %s19 = ssub.s32 %s13, 2
    %s32 = sadd.s32 1, %s23
    %p33 = scmp.ge.s32.totalorder %s32, 1
    %s34 = scalar_select %p33, 0, %s32
    %s35 = sadd.s32 1, %s22
    %s36 = scalar_select %p33, %s35, %s22
    %p37 = scmp.ge.s32.totalorder %s36, 1
    %s38 = scalar_select %p37, 0, %s36
    %s39 = sadd.s32 1, %s21
    %s40 = scalar_select %p37, %s39, %s21
    %p41 = scmp.ge.s32.totalorder %s40, 1
    %s42 = scalar_select %p41, 0, %s40
    %s43 = sadd.s32 1, %s20
    %s44 = scalar_select %p41, %s43, %s20
    %p45 = scmp.ge.s32.totalorder %s44, 2
    %s46 = scalar_select %p45, 0, %s44
    %s47 = ssub.s32 %s20, %s46
    %s48 = ssub.s32 %s21, %s42
    %s49 = sor.u32 %s47, %s48
    %s50 = ssub.s32 %s22, %s38
    %s51 = sor.u32 %s49, %s50
    %p52 = scmp.eq.s32.totalorder %s51, 0
    %s54 = sadd.s32 %s53, 1
    %s55 = scalar_select %p52, %s53, %s54
    %p58 = pneg %p52
    %p59 = scmp.eq.s32.totalorder %s13, 1
    %p60 = por %p58, %p59
    %p61 = scmp.ne.s32.totalorder %s53, %s56
    %p62 = scmp.eq.s32.totalorder %s13, 0
    %p63 = por %p61, %p62
    %p64 = scmp.ne.s32.totalorder %s53, %s56
    %p65 = scmp.eq.s32.totalorder %s18, 1
    %p66 = por %p64, %p65
    %p67 = scmp.ne.s32.totalorder %s56, %s57
    %p68 = scmp.eq.s32.totalorder %s18, 0
    %p69 = por %p67, %p68
    %p70 = scmp.ne.s32.totalorder %s56, %s57
    %p71 = scmp.eq.s32.totalorder %s19, 1
    %p72 = por %p70, %p71
    %p74 = scmp.ne.s32.totalorder %s57, %s73
    %p75 = scmp.eq.s32.totalorder %s19, 0
    %p76 = por %p74, %p75
    %s77 = ssub.s32 %s20, %s46
    %s78 = ssub.s32 %s21, %s42
    %s79 = sor.u32 %s77, %s78
    %s80 = ssub.s32 %s23, %s34
    %s81 = sor.u32 %s79, %s80
    %p82 = scmp.eq.s32.totalorder %s81, 0
    %s84 = sadd.s32 %s83, 1
    %s85 = scalar_select %p82, %s83, %s84
    %p88 = pneg %p82
    %p89 = scmp.eq.s32.totalorder %s13, 1
    %p90 = por %p88, %p89
    %p91 = scmp.ne.s32.totalorder %s83, %s86
    %p92 = scmp.eq.s32.totalorder %s13, 0
    %p93 = por %p91, %p92
    %p94 = scmp.ne.s32.totalorder %s83, %s86
    %p95 = scmp.eq.s32.totalorder %s18, 1
    %p96 = por %p94, %p95
    %p97 = scmp.ne.s32.totalorder %s86, %s87
    %p98 = scmp.eq.s32.totalorder %s18, 0
    %p99 = por %p97, %p98
    %p100 = scmp.ne.s32.totalorder %s86, %s87
    %p101 = scmp.eq.s32.totalorder %s19, 1
    %p102 = por %p100, %p101
    %p104 = scmp.ne.s32.totalorder %s87, %s103
    %p105 = scmp.eq.s32.totalorder %s19, 0
    %p106 = por %p104, %p105
    %s107 = ssub.s32 %s20, %s46
    %s108 = ssub.s32 %s21, %s42
    %s109 = sor.u32 %s107, %s108
    %s110 = ssub.s32 %s23, %s34
    %s111 = sor.u32 %s109, %s110
    %p112 = scmp.eq.s32.totalorder %s111, 0
    %s114 = sadd.s32 %s113, 1
    %s115 = scalar_select %p112, %s113, %s114
    %p118 = pneg %p112
    %p119 = scmp.eq.s32.totalorder %s13, 1
    %p120 = por %p118, %p119
    %p121 = scmp.ne.s32.totalorder %s113, %s116
    %p122 = scmp.eq.s32.totalorder %s13, 0
    %p123 = por %p121, %p122
    %p124 = scmp.ne.s32.totalorder %s113, %s116
    %p125 = scmp.eq.s32.totalorder %s18, 1
    %p126 = por %p124, %p125
    %p127 = scmp.ne.s32.totalorder %s116, %s117
    %p128 = scmp.eq.s32.totalorder %s18, 0
    %p129 = por %p127, %p128
    %p130 = scmp.ne.s32.totalorder %s116, %s117
    %p131 = scmp.eq.s32.totalorder %s19, 1
    %p132 = por %p130, %p131
    %p134 = scmp.ne.s32.totalorder %s117, %s133
    %p135 = scmp.eq.s32.totalorder %s19, 0
    %p136 = por %p134, %p135
    %s137 = ssub.s32 %s22, %s38
    %p138 = scmp.eq.s32.totalorder %s137, 0
    %s140 = sadd.s32 %s139, 1
    %s141 = scalar_select %p138, %s139, %s140
    %p144 = pneg %p138
    %p145 = scmp.eq.s32.totalorder %s13, 1
    %p146 = por %p144, %p145
    %p147 = scmp.ne.s32.totalorder %s139, %s142
    %p148 = scmp.eq.s32.totalorder %s13, 0
    %p149 = por %p147, %p148
    %p150 = scmp.ne.s32.totalorder %s139, %s142
    %p151 = scmp.eq.s32.totalorder %s18, 1
    %p152 = por %p150, %p151
    %p153 = scmp.ne.s32.totalorder %s142, %s143
    %p154 = scmp.eq.s32.totalorder %s18, 0
    %p155 = por %p153, %p154
    %p156 = scmp.ne.s32.totalorder %s142, %s143
    %p157 = scmp.eq.s32.totalorder %s19, 1
    %p158 = por %p156, %p157
    %p160 = scmp.ne.s32.totalorder %s143, %s159
    %p161 = scmp.eq.s32.totalorder %s19, 0
    %p162 = por %p160, %p161
    %s163 = ssub.s32 %s22, %s38
    %p164 = scmp.eq.s32.totalorder %s163, 0
    %s166 = sadd.s32 %s165, 1
    %s167 = scalar_select %p164, %s165, %s166
    %p170 = pneg %p164
    %p171 = scmp.eq.s32.totalorder %s13, 1
    %p172 = por %p170, %p171
    %p173 = scmp.ne.s32.totalorder %s165, %s168
    %p174 = scmp.eq.s32.totalorder %s13, 0
    %p175 = por %p173, %p174
    %p176 = scmp.ne.s32.totalorder %s165, %s168
    %p177 = scmp.eq.s32.totalorder %s18, 1
    %p178 = por %p176, %p177
    %p179 = scmp.ne.s32.totalorder %s168, %s169
    %p180 = scmp.eq.s32.totalorder %s18, 0
    %p181 = por %p179, %p180
    %p182 = scmp.ne.s32.totalorder %s168, %s169
    %p183 = scmp.eq.s32.totalorder %s19, 1
    %p184 = por %p182, %p183
    %p186 = scmp.ne.s32.totalorder %s169, %s185
    %p187 = scmp.eq.s32.totalorder %s19, 0
    %p188 = por %p186, %p187
    %s189 = ssub.s32 %s23, %s34
    %p190 = scmp.eq.s32.totalorder %s189, 0
    %s192 = sadd.s32 %s191, 1
    %s193 = scalar_select %p190, %s191, %s192
    %p196 = pneg %p190
    %p197 = scmp.eq.s32.totalorder %s13, 1
    %p198 = por %p196, %p197
    %p199 = scmp.ne.s32.totalorder %s191, %s194
    %p200 = scmp.eq.s32.totalorder %s13, 0
    %p201 = por %p199, %p200
    %p202 = scmp.ne.s32.totalorder %s191, %s194
    %p203 = scmp.eq.s32.totalorder %s18, 1
    %p204 = por %p202, %p203
    %p205 = scmp.ne.s32.totalorder %s194, %s195
    %p206 = scmp.eq.s32.totalorder %s18, 0
    %p207 = por %p205, %p206
    %p208 = scmp.ne.s32.totalorder %s194, %s195
    %p209 = scmp.eq.s32.totalorder %s19, 1
    %p210 = por %p208, %p209
    %p212 = scmp.ne.s32.totalorder %s195, %s211
    %p213 = scmp.eq.s32.totalorder %s19, 0
    %p214 = por %p212, %p213
    %s215 = ssub.s32 %s23, %s34
    %p216 = scmp.eq.s32.totalorder %s215, 0
    %s218 = sadd.s32 %s217, 1
    %s219 = scalar_select %p216, %s217, %s218
    %p222 = pneg %p216
    %p223 = scmp.eq.s32.totalorder %s13, 1
    %p224 = por %p222, %p223
    %p225 = scmp.ne.s32.totalorder %s217, %s220
    %p226 = scmp.eq.s32.totalorder %s13, 0
    %p227 = por %p225, %p226
    %p228 = scmp.ne.s32.totalorder %s217, %s220
    %p229 = scmp.eq.s32.totalorder %s18, 1
    %p230 = por %p228, %p229
    %p231 = scmp.ne.s32.totalorder %s220, %s221
    %p232 = scmp.eq.s32.totalorder %s18, 0
    %p233 = por %p231, %p232
    %p234 = scmp.ne.s32.totalorder %s220, %s221
    %p235 = scmp.eq.s32.totalorder %s19, 1
    %p236 = por %p234, %p235
    %p238 = scmp.ne.s32.totalorder %s221, %s237
    %p239 = scmp.eq.s32.totalorder %s19, 0
    %p240 = por %p238, %p239
    %s241 = ssub.s32 %s20, %s46
    %s242 = ssub.s32 %s22, %s38
    %s243 = sor.u32 %s241, %s242
    %s244 = ssub.s32 %s21, %s42
    %s245 = sor.u32 %s243, %s244
    %p246 = scmp.eq.s32.totalorder %s245, 0
    %s248 = sadd.s32 %s247, 1
    %s249 = scalar_select %p246, %s247, %s248
    %p252 = pneg %p246
    %p253 = scmp.eq.s32.totalorder %s13, 1
    %p254 = por %p252, %p253
    %p255 = scmp.ne.s32.totalorder %s247, %s250
    %p256 = scmp.eq.s32.totalorder %s13, 0
    %p257 = por %p255, %p256
    %p258 = scmp.ne.s32.totalorder %s247, %s250
    %p259 = scmp.eq.s32.totalorder %s18, 1
    %p260 = por %p258, %p259
    %p261 = scmp.ne.s32.totalorder %s250, %s251
    %p262 = scmp.eq.s32.totalorder %s18, 0
    %p263 = por %p261, %p262
    %p264 = scmp.ne.s32.totalorder %s250, %s251
    %p265 = scmp.eq.s32.totalorder %s19, 1
    %p266 = por %p264, %p265
    %p268 = scmp.ne.s32.totalorder %s251, %s267
    %p269 = scmp.eq.s32.totalorder %s19, 0
    %p270 = por %p268, %p269
    %p271 = scmp.le.s32.totalorder 1, %s13
    %p272 = scmp.lt.s32.totalorder %s13, 3
    %p273 = pnand %p271, %p272
    %p274 = pneg %p273
    // Predicated region
    $region9: #{vjepa2_rope_attention_forward.4} parent=5 // pred_check
      _
    $region10: #{vjepa2_rope_attention_forward.4} parent=5 // pred_check_branch
      %276 = sbr.rel (%p273) target = $region12
    $region11: #{vjepa2_rope_attention_forward.4} parent=5 // pred_region
      %s277 = ssub.s32 %s13, 1
      // Predicated region
      $region13: #{vjepa2_rope_attention_forward.4} parent=11 // pred_check
        %p278 = pneg %p155
      $region14: #{vjepa2_rope_attention_forward.4} parent=11 // pred_check_branch
        %280 = sbr.rel (%p278) target = $region16
      $region15: #{vjepa2_rope_attention_forward.4} parent=11 // pred_region
        %s281 = smul.u32 8, %s26
        %p282 = scmp.lt.s32.totalorder %s281, 7
        %s283 = scalar_select %p282, %s281, 7
        %s284 = smul.addr %s283, 8
        %s285 = scalar_lea.vmem %s3, %s284
        %s286 = smul.u32 8, %s26
      $region16: #{vjepa2_rope_attention_forward.4} parent=11 // pred_fallthru
        _
      // Predicated region
      $region17: #{vjepa2_rope_attention_forward.4} parent=11 // pred_check
        %p287 = pneg %p181
      $region18: #{vjepa2_rope_attention_forward.4} parent=11 // pred_check_branch
        %289 = sbr.rel (%p287) target = $region20
      $region19: #{vjepa2_rope_attention_forward.4} parent=11 // pred_region
        %s290 = smul.u32 8, %s26
        %p291 = scmp.lt.s32.totalorder %s290, 7
        %s292 = scalar_select %p291, %s290, 7
        %s293 = smul.addr %s292, 8
        %s294 = scalar_lea.vmem %s4, %s293
        %s295 = smul.u32 8, %s26
      $region20: #{vjepa2_rope_attention_forward.4} parent=11 // pred_fallthru
        _
      // Predicated region
      $region21: #{vjepa2_rope_attention_forward.4} parent=11 // pred_check
        %p296 = pneg %p207
      $region22: #{vjepa2_rope_attention_forward.4} parent=11 // pred_check_branch
        %298 = sbr.rel (%p296) target = $region24
      $region23: #{vjepa2_rope_attention_forward.4} parent=11 // pred_region
        %s299 = smul.u32 8, %s27
        %p300 = scmp.lt.s32.totalorder %s299, 7
        %s301 = scalar_select %p300, %s299, 7
        %s302 = smul.addr %s301, 8
        %s303 = scalar_lea.vmem %s5, %s302
        %s304 = smul.u32 8, %s27
      $region24: #{vjepa2_rope_attention_forward.4} parent=11 // pred_fallthru
        _
      // Predicated region
      $region25: #{vjepa2_rope_attention_forward.4} parent=11 // pred_check
        %p305 = pneg %p233
      $region26: #{vjepa2_rope_attention_forward.4} parent=11 // pred_check_branch
        %307 = sbr.rel (%p305) target = $region28
      $region27: #{vjepa2_rope_attention_forward.4} parent=11 // pred_region
        %s308 = smul.u32 8, %s27
        %p309 = scmp.lt.s32.totalorder %s308, 7
        %s310 = scalar_select %p309, %s308, 7
        %s311 = smul.addr %s310, 8
        %s312 = scalar_lea.vmem %s6, %s311
        %s313 = smul.u32 8, %s27
      $region28: #{vjepa2_rope_attention_forward.4} parent=11 // pred_fallthru
        _
    $region12: #{vjepa2_rope_attention_forward.4} parent=5 // pred_fallthru
      _
    %p314 = scmp.lt.s32.totalorder %s13, 2
    // Predicated region
    $region29: #{vjepa2_rope_attention_forward.4} parent=5 // pred_check
      %p315 = pneg %p314
    $region30: #{vjepa2_rope_attention_forward.4} parent=5 // pred_check_branch
      %317 = sbr.rel (%p315) target = $region32
    $region31: #{vjepa2_rope_attention_forward.4} parent=5 // pred_region
      // Predicated region
      $region33: #{vjepa2_rope_attention_forward.4} parent=31 // pred_check
        %p318 = pneg %p63
      $region34: #{vjepa2_rope_attention_forward.4} parent=31 // pred_check_branch
        %320 = sbr.rel (%p318) target = $region36
      $region35: #{vjepa2_rope_attention_forward.4} parent=31 // pred_region
        %s321 = smul.u32 2, %s21
        %s322 = smul.u32 8, %s22
        %p323 = scmp.lt.s32.totalorder %s20, 1
        %s324 = scalar_select %p323, %s20, 1
        %p325 = scmp.lt.s32.totalorder %s321, 1
        %s326 = scalar_select %p325, %s321, 1
        %p327 = scmp.lt.s32.totalorder %s322, 7
        %s328 = scalar_select %p327, %s322, 7
        %s329 = smul.addr %s326, 8
        %s330 = sadd.s32 %s328, %s329
        %s331 = smul.addr %s324, 16
        %s332 = sadd.s32 %s330, %s331
        %s333 = smul.addr %s332, 8
        %s334 = scalar_lea.vmem %s0, %s333
        %s335 = smul.u32 2, %s21
        %s336 = smul.u32 8, %s22
      $region36: #{vjepa2_rope_attention_forward.4} parent=31 // pred_fallthru
        _
      // Predicated region
      $region37: #{vjepa2_rope_attention_forward.4} parent=31 // pred_check
        %p337 = pneg %p93
      $region38: #{vjepa2_rope_attention_forward.4} parent=31 // pred_check_branch
        %339 = sbr.rel (%p337) target = $region40
      $region39: #{vjepa2_rope_attention_forward.4} parent=31 // pred_region
        %s340 = smul.u32 2, %s21
        %s341 = smul.u32 8, %s23
        %p342 = scmp.lt.s32.totalorder %s20, 1
        %s343 = scalar_select %p342, %s20, 1
        %p344 = scmp.lt.s32.totalorder %s340, 1
        %s345 = scalar_select %p344, %s340, 1
        %p346 = scmp.lt.s32.totalorder %s341, 7
        %s347 = scalar_select %p346, %s341, 7
        %s348 = smul.addr %s345, 8
        %s349 = sadd.s32 %s347, %s348
        %s350 = smul.addr %s343, 16
        %s351 = sadd.s32 %s349, %s350
        %s352 = sadd.s32 %s351, 32
        %s353 = smul.addr %s352, 8
        %s354 = scalar_lea.vmem %s1, %s353
        %s355 = smul.u32 2, %s21
        %s356 = smul.u32 8, %s23
      $region40: #{vjepa2_rope_attention_forward.4} parent=31 // pred_fallthru
        _
      // Predicated region
      $region41: #{vjepa2_rope_attention_forward.4} parent=31 // pred_check
        %p357 = pneg %p123
      $region42: #{vjepa2_rope_attention_forward.4} parent=31 // pred_check_branch
        %359 = sbr.rel (%p357) target = $region44
      $region43: #{vjepa2_rope_attention_forward.4} parent=31 // pred_region
        %s360 = smul.u32 2, %s21
        %s361 = smul.u32 8, %s23
        %p362 = scmp.lt.s32.totalorder %s20, 1
        %s363 = scalar_select %p362, %s20, 1
        %p364 = scmp.lt.s32.totalorder %s360, 1
        %s365 = scalar_select %p364, %s360, 1
        %p366 = scmp.lt.s32.totalorder %s361, 7
        %s367 = scalar_select %p366, %s361, 7
        %s368 = smul.addr %s365, 8
        %s369 = sadd.s32 %s367, %s368
        %s370 = smul.addr %s363, 16
        %s371 = sadd.s32 %s369, %s370
        %s372 = sadd.s32 %s371, 64
        %s373 = smul.addr %s372, 8
        %s374 = scalar_lea.vmem %s2, %s373
        %s375 = smul.u32 2, %s21
        %s376 = smul.u32 8, %s23
      $region44: #{vjepa2_rope_attention_forward.4} parent=31 // pred_fallthru
        _
    $region32: #{vjepa2_rope_attention_forward.4} parent=5 // pred_fallthru
      _
    %p377 = scmp.le.s32.totalorder 1, %s13
    %p378 = scmp.lt.s32.totalorder %s13, 3
    %p379 = pnand %p377, %p378
    %p380 = pneg %p379
    // Predicated region
    $region45: #{vjepa2_rope_attention_forward.4} parent=5 // pred_check
      _
    $region46: #{vjepa2_rope_attention_forward.4} parent=5 // pred_check_branch
      %382 = sbr.rel (%p379) target = $region48
    $region47: #{vjepa2_rope_attention_forward.4} parent=5 // pred_region
      %s383 = ssub.s32 %s13, 1
      %s384 = smul.u32 2, %s25
      %s385 = smul.u32 8, %s26
      %p386 = scmp.lt.s32.totalorder %s24, 1
      %s387 = scalar_select %p386, %s24, 1
      %p388 = scmp.lt.s32.totalorder %s384, 1
      %s389 = scalar_select %p388, %s384, 1
      %p390 = scmp.lt.s32.totalorder %s385, 7
      %s391 = scalar_select %p390, %s385, 7
      %s392 = smul.addr %s389, 8
      %s393 = sadd.s32 %s391, %s392
      %s394 = smul.addr %s387, 16
      %s395 = sadd.s32 %s393, %s394
      %s396 = smul.addr %s395, 8
      %s397 = scalar_lea.vmem %s0, %s396
      %p398 = pneg %p69
      %p399 = pneg %p66
      %s400 = smul.u32 2, %s25
      %s401 = smul.u32 8, %s27
      %p402 = scmp.lt.s32.totalorder %s24, 1
      %s403 = scalar_select %p402, %s24, 1
      %p404 = scmp.lt.s32.totalorder %s400, 1
      %s405 = scalar_select %p404, %s400, 1
      %p406 = scmp.lt.s32.totalorder %s401, 7
      %s407 = scalar_select %p406, %s401, 7
      %s408 = smul.addr %s405, 8
      %s409 = sadd.s32 %s407, %s408
      %s410 = smul.addr %s403, 16
      %s411 = sadd.s32 %s409, %s410
      %s412 = sadd.s32 %s411, 32
      %s413 = smul.addr %s412, 8
      %s414 = scalar_lea.vmem %s1, %s413
      %p415 = pneg %p99
      %p416 = pneg %p96
      %s417 = smul.u32 2, %s25
      %s418 = smul.u32 8, %s27
      %p419 = scmp.lt.s32.totalorder %s24, 1
      %s420 = scalar_select %p419, %s24, 1
      %p421 = scmp.lt.s32.totalorder %s417, 1
      %s422 = scalar_select %p421, %s417, 1
      %p423 = scmp.lt.s32.totalorder %s418, 7
      %s424 = scalar_select %p423, %s418, 7
      %s425 = smul.addr %s422, 8
      %s426 = sadd.s32 %s424, %s425
      %s427 = smul.addr %s420, 16
      %s428 = sadd.s32 %s426, %s427
      %s429 = sadd.s32 %s428, 64
      %s430 = smul.addr %s429, 8
      %s431 = scalar_lea.vmem %s2, %s430
      %p432 = pneg %p129
      %p433 = pneg %p126
      %s434 = smul.u32 8, %s26
      %p435 = scmp.lt.s32.totalorder %s434, 7
      %s436 = scalar_select %p435, %s434, 7
      %s437 = smul.addr %s436, 8
      %s438 = scalar_lea.vmem %s3, %s437
      %p439 = pneg %p155
      %p440 = pneg %p152
      %s441 = smul.u32 8, %s26
      %p442 = scmp.lt.s32.totalorder %s441, 7
      %s443 = scalar_select %p442, %s441, 7
      %s444 = smul.addr %s443, 8
      %s445 = scalar_lea.vmem %s4, %s444
      %p446 = pneg %p181
      %p447 = pneg %p178
      %s448 = smul.u32 8, %s27
      %p449 = scmp.lt.s32.totalorder %s448, 7
      %s450 = scalar_select %p449, %s448, 7
      %s451 = smul.addr %s450, 8
      %s452 = scalar_lea.vmem %s5, %s451
      %p453 = pneg %p207
      %p454 = pneg %p204
      %s455 = smul.u32 8, %s27
      %p456 = scmp.lt.s32.totalorder %s455, 7
      %s457 = scalar_select %p456, %s455, 7
      %s458 = smul.addr %s457, 8
      %s459 = scalar_lea.vmem %s6, %s458
      %p460 = pneg %p233
      %p461 = pneg %p230
      %p462 = pneg %p263
      %p463 = pneg %p260
      %s464 = smul.u32 8, %s26
      %p465 = scmp.lt.s32.totalorder %s24, 1
      %s466 = scalar_select %p465, %s24, 1
      %p467 = scmp.lt.s32.totalorder %s464, 7
      %s468 = scalar_select %p467, %s464, 7
      %p469 = scmp.lt.s32.totalorder %s25, 0
      %s470 = scalar_select %p469, %s25, 0
      %s471 = sadd.s32 %s470, %s468
      %s472 = smul.addr %s466, 8
      %s473 = sadd.s32 %s471, %s472
      %s474 = smul.addr %s473, 8
      %s475 = scalar_lea.vmem %s7, %s474
      %s476 = smul.u32 2, %s25
      %s477 = smul.u32 8, %s26
      %p478 = scmp.lt.s32.totalorder %s24, 1
      %s479 = scalar_select %p478, %s24, 1
      %p480 = scmp.lt.s32.totalorder %s476, 1
      %s481 = scalar_select %p480, %s476, 1
      %p482 = scmp.lt.s32.totalorder %s477, 7
      %s483 = scalar_select %p482, %s477, 7
      %s484 = smul.addr %s481, 8
      %s485 = sadd.s32 %s483, %s484
      %s486 = smul.addr %s479, 16
      %s487 = sadd.s32 %s485, %s486
      %s488 = smul.addr %s487, 8
      %s489 = scalar_lea.vmem %s0, %s488
      %s490 = smul.u32 2, %s25
      %s491 = smul.u32 8, %s26
      %s492 = smul.u32 2, %s25
      %s493 = smul.u32 8, %s27
      %p494 = scmp.lt.s32.totalorder %s24, 1
      %s495 = scalar_select %p494, %s24, 1
      %p496 = scmp.lt.s32.totalorder %s492, 1
      %s497 = scalar_select %p496, %s492, 1
      %p498 = scmp.lt.s32.totalorder %s493, 7
      %s499 = scalar_select %p498, %s493, 7
      %s500 = smul.addr %s497, 8
      %s501 = sadd.s32 %s499, %s500
      %s502 = smul.addr %s495, 16
      %s503 = sadd.s32 %s501, %s502
      %s504 = sadd.s32 %s503, 32
      %s505 = smul.addr %s504, 8
      %s506 = scalar_lea.vmem %s1, %s505
      %s507 = smul.u32 2, %s25
      %s508 = smul.u32 8, %s27
      %s509 = smul.u32 2, %s25
      %s510 = smul.u32 8, %s27
      %p511 = scmp.lt.s32.totalorder %s24, 1
      %s512 = scalar_select %p511, %s24, 1
      %p513 = scmp.lt.s32.totalorder %s509, 1
      %s514 = scalar_select %p513, %s509, 1
      %p515 = scmp.lt.s32.totalorder %s510, 7
      %s516 = scalar_select %p515, %s510, 7
      %s517 = smul.addr %s514, 8
      %s518 = sadd.s32 %s516, %s517
      %s519 = smul.addr %s512, 16
      %s520 = sadd.s32 %s518, %s519
      %s521 = sadd.s32 %s520, 64
      %s522 = smul.addr %s521, 8
      %s523 = scalar_lea.vmem %s2, %s522
      %s524 = smul.u32 2, %s25
      %s525 = smul.u32 8, %s27
      %s526 = smul.u32 8, %s26
      %p527 = scmp.lt.s32.totalorder %s526, 7
      %s528 = scalar_select %p527, %s526, 7
      %s529 = smul.addr %s528, 8
      %s530 = scalar_lea.vmem %s3, %s529
      %s531 = smul.u32 8, %s26
      %s532 = smul.u32 8, %s26
      %p533 = scmp.lt.s32.totalorder %s532, 7
      %s534 = scalar_select %p533, %s532, 7
      %s535 = smul.addr %s534, 8
      %s536 = scalar_lea.vmem %s4, %s535
      %s537 = smul.u32 8, %s26
      %s538 = smul.u32 8, %s27
      %p539 = scmp.lt.s32.totalorder %s538, 7
      %s540 = scalar_select %p539, %s538, 7
      %s541 = smul.addr %s540, 8
      %s542 = scalar_lea.vmem %s5, %s541
      %s543 = smul.u32 8, %s27
      %s544 = smul.u32 8, %s27
      %p545 = scmp.lt.s32.totalorder %s544, 7
      %s546 = scalar_select %p545, %s544, 7
      %s547 = smul.addr %s546, 8
      %s548 = scalar_lea.vmem %s6, %s547
      %s549 = smul.u32 8, %s27
      %s550 = smul.u32 8, %s26
      %p551 = scmp.lt.s32.totalorder %s24, 1
      %s552 = scalar_select %p551, %s24, 1
      %p553 = scmp.lt.s32.totalorder %s550, 7
      %s554 = scalar_select %p553, %s550, 7
      %p555 = scmp.lt.s32.totalorder %s25, 0
      %s556 = scalar_select %p555, %s25, 0
      %s557 = sadd.s32 %s556, %s554
      %s558 = smul.addr %s552, 8
      %s559 = sadd.s32 %s557, %s558
      %s560 = smul.addr %s559, 8
      %s561 = scalar_lea.vmem %s7, %s560
      %s562 = smul.u32 8, %s26
      %p564 = scmp.eq.s32.totalorder %s27, 0
      // Predicated region
      $region49: #{vjepa2_rope_attention_forward.4} parent=47 // pred_check
        %p565 = pneg %p564
      $region50: #{vjepa2_rope_attention_forward.4} parent=47 // pred_check_branch
        %567 = sbr.rel (%p565) target = $region52
      $region51: #{vjepa2_rope_attention_forward.4} parent=47 // pred_region
        %v568 = vld [vmem:[%s489] sm:$0xff]
        %v569 = vld [vmem:[%s489 + $0x8] sm:$0xff]
        %v570 = vld [vmem:[%s489 + $0x10] sm:$0xff]
        %v571 = vld [vmem:[%s489 + $0x18] sm:$0xff]
        %v572 = vld [vmem:[%s489 + $0x20] sm:$0xff]
        %v573 = vld [vmem:[%s489 + $0x28] sm:$0xff]
        %v574 = vld [vmem:[%s489 + $0x30] sm:$0xff]
        %v575 = vld [vmem:[%s489 + $0x38] sm:$0xff]
        %v576 = vld [vmem:[%s489 + $0x40] sm:$0xff]
        %v577 = vld [vmem:[%s489 + $0x48] sm:$0xff]
        %v578 = vld [vmem:[%s489 + $0x50] sm:$0xff]
        %v579 = vld [vmem:[%s489 + $0x58] sm:$0xff]
        %v580 = vld [vmem:[%s489 + $0x60] sm:$0xff]
        %v581 = vld [vmem:[%s489 + $0x68] sm:$0xff]
        %v582 = vld [vmem:[%s489 + $0x70] sm:$0xff]
        %v583 = vld [vmem:[%s489 + $0x78] sm:$0xff]
        %v584 = vld [vmem:[%s530] sm:$0xff]
        %v585 = vld [vmem:[%s530 + $0x8] sm:$0xff]
        %v586 = vld [vmem:[%s530 + $0x10] sm:$0xff]
        %v587 = vld [vmem:[%s530 + $0x18] sm:$0xff]
        %v588 = vld [vmem:[%s530 + $0x20] sm:$0xff]
        %v589 = vld [vmem:[%s530 + $0x28] sm:$0xff]
        %v590 = vld [vmem:[%s530 + $0x30] sm:$0xff]
        %v591 = vld [vmem:[%s530 + $0x38] sm:$0xff]
        %v592 = vld [vmem:[%s536] sm:$0xff]
        %v593 = vld [vmem:[%s536 + $0x8] sm:$0xff]
        %v594 = vld [vmem:[%s536 + $0x10] sm:$0xff]
        %v595 = vld [vmem:[%s536 + $0x18] sm:$0xff]
        %v596 = vld [vmem:[%s536 + $0x20] sm:$0xff]
        %v597 = vld [vmem:[%s536 + $0x28] sm:$0xff]
        %v598 = vld [vmem:[%s536 + $0x30] sm:$0xff]
        %v599 = vld [vmem:[%s536 + $0x38] sm:$0xff]
        %v600 = vlaneseq
        %v601 = vand.u32 %v600, 127
        %vm602 = vcmp.lt.s32.totalorder %v601, 0
        %v603 = vsub.s32 0, %v601
        %v604 = vsel %vm602, %v603, %v601
        %v605 = vshrl.u32 %v604, 1
        %v606 = vand.u32 %v604, 1
        %v607 = vsub.s32 0, %v606
        %v608 = vsel %vm602, %v607, %v606
        %vm609 = vcmp.ne.s32.totalorder %v608, 0
        %vm610 = vcmp.lt.s32.totalorder %v608, 0
        %vm611 = vmand %vm610, %vm609
        %v612 = vadd.s32 %v608, 2
        %v613 = vsel %vm611, %v612, %v608
        %vm614 = vcmp.eq.s32.totalorder %v613, 0
        %vm615 = vcmask 1048064
        %616 = vrot.lane.b32.xlu0 %v568, 64
        %v617 = vpop.permute.xlu0 %616
        %v618 = vsel %vm615, %v617, %v568
        %619 = vrot.lane.b32.xlu0 %v569, 64
        %v620 = vpop.permute.xlu0 %619
        %v621 = vsel %vm615, %v620, %v569
        %622 = vrot.lane.b32.xlu0 %v570, 64
        %v623 = vpop.permute.xlu0 %622
        %v624 = vsel %vm615, %v623, %v570
        %625 = vrot.lane.b32.xlu0 %v571, 64
        %v626 = vpop.permute.xlu0 %625
        %v627 = vsel %vm615, %v626, %v571
        %628 = vrot.lane.b32.xlu0 %v572, 64
        %v629 = vpop.permute.xlu0 %628
        %v630 = vsel %vm615, %v629, %v572
        %631 = vrot.lane.b32.xlu0 %v573, 64
        %v632 = vpop.permute.xlu0 %631
        %v633 = vsel %vm615, %v632, %v573
        %634 = vrot.lane.b32.xlu0 %v574, 64
        %v635 = vpop.permute.xlu0 %634
        %v636 = vsel %vm615, %v635, %v574
        %637 = vrot.lane.b32.xlu0 %v575, 64
        %v638 = vpop.permute.xlu0 %637
        %v639 = vsel %vm615, %v638, %v575
        %640 = vrot.lane.b32.xlu0 %v576, 64
        %v641 = vpop.permute.xlu0 %640
        %v642 = vsel %vm615, %v641, %v576
        %643 = vrot.lane.b32.xlu0 %v577, 64
        %v644 = vpop.permute.xlu0 %643
        %v645 = vsel %vm615, %v644, %v577
        %646 = vrot.lane.b32.xlu0 %v578, 64
        %v647 = vpop.permute.xlu0 %646
        %v648 = vsel %vm615, %v647, %v578
        %649 = vrot.lane.b32.xlu0 %v579, 64
        %v650 = vpop.permute.xlu0 %649
        %v651 = vsel %vm615, %v650, %v579
        %652 = vrot.lane.b32.xlu0 %v580, 64
        %v653 = vpop.permute.xlu0 %652
        %v654 = vsel %vm615, %v653, %v580
        %655 = vrot.lane.b32.xlu0 %v581, 64
        %v656 = vpop.permute.xlu0 %655
        %v657 = vsel %vm615, %v656, %v581
        %658 = vrot.lane.b32.xlu0 %v582, 64
        %v659 = vpop.permute.xlu0 %658
        %v660 = vsel %vm615, %v659, %v582
        %661 = vrot.lane.b32.xlu0 %v583, 64
        %v662 = vpop.permute.xlu0 %661
        %v663 = vsel %vm615, %v662, %v583
        %664 = vrot.lane.b32.xlu0 %v618, 64
        %v665 = vpop.permute.xlu0 %664
        %666 = vrot.lane.b32.xlu0 %v621, 64
        %v667 = vpop.permute.xlu0 %666
        %668 = vrot.lane.b32.xlu0 %v624, 64
        %v669 = vpop.permute.xlu0 %668
        %670 = vrot.lane.b32.xlu0 %v627, 64
        %v671 = vpop.permute.xlu0 %670
        %672 = vrot.lane.b32.xlu0 %v630, 64
        %v673 = vpop.permute.xlu0 %672
        %674 = vrot.lane.b32.xlu0 %v633, 64
        %v675 = vpop.permute.xlu0 %674
        %676 = vrot.lane.b32.xlu0 %v636, 64
        %v677 = vpop.permute.xlu0 %676
        %678 = vrot.lane.b32.xlu0 %v639, 64
        %v679 = vpop.permute.xlu0 %678
        %680 = vrot.lane.b32.xlu0 %v642, 64
        %v681 = vpop.permute.xlu0 %680
        %682 = vrot.lane.b32.xlu0 %v645, 64
        %v683 = vpop.permute.xlu0 %682
        %684 = vrot.lane.b32.xlu0 %v648, 64
        %v685 = vpop.permute.xlu0 %684
        %686 = vrot.lane.b32.xlu0 %v651, 64
        %v687 = vpop.permute.xlu0 %686
        %688 = vrot.lane.b32.xlu0 %v654, 64
        %v689 = vpop.permute.xlu0 %688
        %690 = vrot.lane.b32.xlu0 %v657, 64
        %v691 = vpop.permute.xlu0 %690
        %692 = vrot.lane.b32.xlu0 %v660, 64
        %v693 = vpop.permute.xlu0 %692
        %694 = vrot.lane.b32.xlu0 %v663, 64
        %v695 = vpop.permute.xlu0 %694
        %v696 = vsel %vm615, %v665, %v568
        %v697 = vsel %vm615, %v667, %v569
        %v698 = vsel %vm615, %v669, %v570
        %v699 = vsel %vm615, %v671, %v571
        %v700 = vsel %vm615, %v673, %v572
        %v701 = vsel %vm615, %v675, %v573
        %v702 = vsel %vm615, %v677, %v574
        %v703 = vsel %vm615, %v679, %v575
        %v704 = vsel %vm615, %v681, %v576
        %v705 = vsel %vm615, %v683, %v577
        %v706 = vsel %vm615, %v685, %v578
        %v707 = vsel %vm615, %v687, %v579
        %v708 = vsel %vm615, %v689, %v580
        %v709 = vsel %vm615, %v691, %v581
        %v710 = vsel %vm615, %v693, %v582
        %v711 = vsel %vm615, %v695, %v583
        %728 = vrot.lane.b32.xlu0 %v696, 127
        %v729 = vpop.permute.xlu0 %728
        %730 = vrot.lane.b32.xlu0 %v697, 127
        %v731 = vpop.permute.xlu0 %730
        %732 = vrot.lane.b32.xlu0 %v698, 127
        %v733 = vpop.permute.xlu0 %732
        %734 = vrot.lane.b32.xlu0 %v699, 127
        %v735 = vpop.permute.xlu0 %734
        %736 = vrot.lane.b32.xlu0 %v700, 127
        %v737 = vpop.permute.xlu0 %736
        %738 = vrot.lane.b32.xlu0 %v701, 127
        %v739 = vpop.permute.xlu0 %738
        %740 = vrot.lane.b32.xlu0 %v702, 127
        %v741 = vpop.permute.xlu0 %740
        %742 = vrot.lane.b32.xlu0 %v703, 127
        %v743 = vpop.permute.xlu0 %742
        %744 = vrot.lane.b32.xlu0 %v704, 127
        %v745 = vpop.permute.xlu0 %744
        %746 = vrot.lane.b32.xlu0 %v705, 127
        %v747 = vpop.permute.xlu0 %746
        %748 = vrot.lane.b32.xlu0 %v706, 127
        %v749 = vpop.permute.xlu0 %748
        %750 = vrot.lane.b32.xlu0 %v707, 127
        %v751 = vpop.permute.xlu0 %750
        %752 = vrot.lane.b32.xlu0 %v708, 127
        %v753 = vpop.permute.xlu0 %752
        %754 = vrot.lane.b32.xlu0 %v709, 127
        %v755 = vpop.permute.xlu0 %754
        %756 = vrot.lane.b32.xlu0 %v710, 127
        %v757 = vpop.permute.xlu0 %756
        %758 = vrot.lane.b32.xlu0 %v711, 127
        %v759 = vpop.permute.xlu0 %758
        %776 = vrot.lane.b32.xlu0 %v696, 65
        %v777 = vpop.permute.xlu0 %776
        %778 = vrot.lane.b32.xlu0 %v697, 65
        %v779 = vpop.permute.xlu0 %778
        %780 = vrot.lane.b32.xlu0 %v698, 65
        %v781 = vpop.permute.xlu0 %780
        %782 = vrot.lane.b32.xlu0 %v699, 65
        %v783 = vpop.permute.xlu0 %782
        %784 = vrot.lane.b32.xlu0 %v700, 65
        %v785 = vpop.permute.xlu0 %784
        %786 = vrot.lane.b32.xlu0 %v701, 65
        %v787 = vpop.permute.xlu0 %786
        %788 = vrot.lane.b32.xlu0 %v702, 65
        %v789 = vpop.permute.xlu0 %788
        %790 = vrot.lane.b32.xlu0 %v703, 65
        %v791 = vpop.permute.xlu0 %790
        %792 = vrot.lane.b32.xlu0 %v704, 65
        %v793 = vpop.permute.xlu0 %792
        %794 = vrot.lane.b32.xlu0 %v705, 65
        %v795 = vpop.permute.xlu0 %794
        %796 = vrot.lane.b32.xlu0 %v706, 65
        %v797 = vpop.permute.xlu0 %796
        %798 = vrot.lane.b32.xlu0 %v707, 65
        %v799 = vpop.permute.xlu0 %798
        %800 = vrot.lane.b32.xlu0 %v708, 65
        %v801 = vpop.permute.xlu0 %800
        %802 = vrot.lane.b32.xlu0 %v709, 65
        %v803 = vpop.permute.xlu0 %802
        %804 = vrot.lane.b32.xlu0 %v710, 65
        %v805 = vpop.permute.xlu0 %804
        %806 = vrot.lane.b32.xlu0 %v711, 65
        %v807 = vpop.permute.xlu0 %806
        %v824 = vsel %vm614, %v729, %v777
        %v825 = vsel %vm614, %v731, %v779
        %v826 = vsel %vm614, %v733, %v781
        %v827 = vsel %vm614, %v735, %v783
        %v828 = vsel %vm614, %v737, %v785
        %v829 = vsel %vm614, %v739, %v787
        %v830 = vsel %vm614, %v741, %v789
        %v831 = vsel %vm614, %v743, %v791
        %v832 = vsel %vm614, %v745, %v793
        %v833 = vsel %vm614, %v747, %v795
        %v834 = vsel %vm614, %v749, %v797
        %v835 = vsel %vm614, %v751, %v799
        %v836 = vsel %vm614, %v753, %v801
        %v837 = vsel %vm614, %v755, %v803
        %v838 = vsel %vm614, %v757, %v805
        %v839 = vsel %vm614, %v759, %v807
        %v840 = vmul.f32 %v568, %v584
        %v841 = vmul.f32 %v569, %v585
        %v842 = vmul.f32 %v570, %v586
        %v843 = vmul.f32 %v571, %v587
        %v844 = vmul.f32 %v572, %v588
        %v845 = vmul.f32 %v573, %v589
        %v846 = vmul.f32 %v574, %v590
        %v847 = vmul.f32 %v575, %v591
        %v848 = vmul.f32 %v576, %v584
        %v849 = vmul.f32 %v577, %v585
        %v850 = vmul.f32 %v578, %v586
        %v851 = vmul.f32 %v579, %v587
        %v852 = vmul.f32 %v580, %v588
        %v853 = vmul.f32 %v581, %v589
        %v854 = vmul.f32 %v582, %v590
        %v855 = vmul.f32 %v583, %v591
        %v856 = vmul.f32 %v824, %v592
        %v857 = vmul.f32 %v825, %v593
        %v858 = vmul.f32 %v826, %v594
        %v859 = vmul.f32 %v827, %v595
        %v860 = vmul.f32 %v828, %v596
        %v861 = vmul.f32 %v829, %v597
        %v862 = vmul.f32 %v830, %v598
        %v863 = vmul.f32 %v831, %v599
        %v864 = vmul.f32 %v832, %v592
        %v865 = vmul.f32 %v833, %v593
        %v866 = vmul.f32 %v834, %v594
        %v867 = vmul.f32 %v835, %v595
        %v868 = vmul.f32 %v836, %v596
        %v869 = vmul.f32 %v837, %v597
        %v870 = vmul.f32 %v838, %v598
        %v871 = vmul.f32 %v839, %v599
        %v872 = vadd.f32 %v840, %v856
        %v873 = vadd.f32 %v841, %v857
        %v874 = vadd.f32 %v842, %v858
        %v875 = vadd.f32 %v843, %v859
        %v876 = vadd.f32 %v844, %v860
        %v877 = vadd.f32 %v845, %v861
        %v878 = vadd.f32 %v846, %v862
        %v879 = vadd.f32 %v847, %v863
        %v880 = vadd.f32 %v848, %v864
        %v881 = vadd.f32 %v849, %v865
        %v882 = vadd.f32 %v850, %v866
        %v883 = vadd.f32 %v851, %v867
        %v884 = vadd.f32 %v852, %v868
        %v885 = vadd.f32 %v853, %v869
        %v886 = vadd.f32 %v854, %v870
        %v887 = vadd.f32 %v855, %v871
        %v888 = vmul.f32 %v872, 0.125
        %v889 = vmul.f32 %v873, 0.125
        %v890 = vmul.f32 %v874, 0.125
        %v891 = vmul.f32 %v875, 0.125
        %v892 = vmul.f32 %v876, 0.125
        %v893 = vmul.f32 %v877, 0.125
        %v894 = vmul.f32 %v878, 0.125
        %v895 = vmul.f32 %v879, 0.125
        %v896 = vmul.f32 %v880, 0.125
        %v897 = vmul.f32 %v881, 0.125
        %v898 = vmul.f32 %v882, 0.125
        %v899 = vmul.f32 %v883, 0.125
        %v900 = vmul.f32 %v884, 0.125
        %v901 = vmul.f32 %v885, 0.125
        %v902 = vmul.f32 %v886, 0.125
        %v903 = vmul.f32 %v887, 0.125
        %v904 = vpack.c.bf16 %v889, %v888
        %v905 = vpack.c.bf16 %v891, %v890
        %v906 = vpack.c.bf16 %v893, %v892
        %v907 = vpack.c.bf16 %v895, %v894
        %v908 = vpack.c.bf16 %v897, %v896
        %v909 = vpack.c.bf16 %v899, %v898
        %v910 = vpack.c.bf16 %v901, %v900
        %v911 = vpack.c.bf16 %v903, %v902
        %vm912 = vcmask 523264
        %913 = vst.msk [vmem:[#allocation2] sm:$0xff] %vm912, %v904
        %914 = vst.msk [vmem:[#allocation2 + $0x8] sm:$0xff] %vm912, %v905
        %915 = vst.msk [vmem:[#allocation2 + $0x10] sm:$0xff] %vm912, %v906
        %916 = vst.msk [vmem:[#allocation2 + $0x18] sm:$0xff] %vm912, %v907
        %917 = vst.msk [vmem:[#allocation2 + $0x20] sm:$0xff] %vm912, %v908
        %918 = vst.msk [vmem:[#allocation2 + $0x28] sm:$0xff] %vm912, %v909
        %919 = vst.msk [vmem:[#allocation2 + $0x30] sm:$0xff] %vm912, %v910
        %920 = vst.msk [vmem:[#allocation2 + $0x38] sm:$0xff] %vm912, %v911
        %vm921 = vcmask 7168
        %922 = vst.msk [vmem:[#allocation3] sm:$0xff] %vm921, -inf
        %923 = vst.msk [vmem:[#allocation3 + $0x8] sm:$0xff] %vm921, -inf
        %924 = vst.msk [vmem:[#allocation3 + $0x10] sm:$0xff] %vm921, -inf
        %925 = vst.msk [vmem:[#allocation3 + $0x18] sm:$0xff] %vm921, -inf
        %926 = vst.msk [vmem:[#allocation3 + $0x20] sm:$0xff] %vm921, -inf
        %927 = vst.msk [vmem:[#allocation3 + $0x28] sm:$0xff] %vm921, -inf
        %928 = vst.msk [vmem:[#allocation3 + $0x30] sm:$0xff] %vm921, -inf
        %929 = vst.msk [vmem:[#allocation3 + $0x38] sm:$0xff] %vm921, -inf
        %930 = vst.msk [vmem:[#allocation3 + $0x40] sm:$0xff] %vm921, -inf
        %931 = vst.msk [vmem:[#allocation3 + $0x48] sm:$0xff] %vm921, -inf
        %932 = vst.msk [vmem:[#allocation3 + $0x50] sm:$0xff] %vm921, -inf
        %933 = vst.msk [vmem:[#allocation3 + $0x58] sm:$0xff] %vm921, -inf
        %934 = vst.msk [vmem:[#allocation3 + $0x60] sm:$0xff] %vm921, -inf
        %935 = vst.msk [vmem:[#allocation3 + $0x68] sm:$0xff] %vm921, -inf
        %936 = vst.msk [vmem:[#allocation3 + $0x70] sm:$0xff] %vm921, -inf
        %937 = vst.msk [vmem:[#allocation3 + $0x78] sm:$0xff] %vm921, -inf
        %938 = vst.msk [vmem:[#allocation4] sm:$0xff] %vm921, 0.0
        %939 = vst.msk [vmem:[#allocation4 + $0x8] sm:$0xff] %vm921, 0.0
        %940 = vst.msk [vmem:[#allocation4 + $0x10] sm:$0xff] %vm921, 0.0
        %941 = vst.msk [vmem:[#allocation4 + $0x18] sm:$0xff] %vm921, 0.0
        %942 = vst.msk [vmem:[#allocation4 + $0x20] sm:$0xff] %vm921, 0.0
        %943 = vst.msk [vmem:[#allocation4 + $0x28] sm:$0xff] %vm921, 0.0
        %944 = vst.msk [vmem:[#allocation4 + $0x30] sm:$0xff] %vm921, 0.0
        %945 = vst.msk [vmem:[#allocation4 + $0x38] sm:$0xff] %vm921, 0.0
        %946 = vst.msk [vmem:[#allocation4 + $0x40] sm:$0xff] %vm921, 0.0
        %947 = vst.msk [vmem:[#allocation4 + $0x48] sm:$0xff] %vm921, 0.0
        %948 = vst.msk [vmem:[#allocation4 + $0x50] sm:$0xff] %vm921, 0.0
        %949 = vst.msk [vmem:[#allocation4 + $0x58] sm:$0xff] %vm921, 0.0
        %950 = vst.msk [vmem:[#allocation4 + $0x60] sm:$0xff] %vm921, 0.0
        %951 = vst.msk [vmem:[#allocation4 + $0x68] sm:$0xff] %vm921, 0.0
        %952 = vst.msk [vmem:[#allocation4 + $0x70] sm:$0xff] %vm921, 0.0
        %953 = vst.msk [vmem:[#allocation4 + $0x78] sm:$0xff] %vm921, 0.0
        %954 = vst.msk [vmem:[#allocation5] sm:$0xff] %vm912, 0.0
        %955 = vst.msk [vmem:[#allocation5 + $0x8] sm:$0xff] %vm912, 0.0
        %956 = vst.msk [vmem:[#allocation5 + $0x10] sm:$0xff] %vm912, 0.0
        %957 = vst.msk [vmem:[#allocation5 + $0x18] sm:$0xff] %vm912, 0.0
        %958 = vst.msk [vmem:[#allocation5 + $0x20] sm:$0xff] %vm912, 0.0
        %959 = vst.msk [vmem:[#allocation5 + $0x28] sm:$0xff] %vm912, 0.0
        %960 = vst.msk [vmem:[#allocation5 + $0x30] sm:$0xff] %vm912, 0.0
        %961 = vst.msk [vmem:[#allocation5 + $0x38] sm:$0xff] %vm912, 0.0
        %962 = vst.msk [vmem:[#allocation5 + $0x40] sm:$0xff] %vm912, 0.0
        %963 = vst.msk [vmem:[#allocation5 + $0x48] sm:$0xff] %vm912, 0.0
        %964 = vst.msk [vmem:[#allocation5 + $0x50] sm:$0xff] %vm912, 0.0
        %965 = vst.msk [vmem:[#allocation5 + $0x58] sm:$0xff] %vm912, 0.0
        %966 = vst.msk [vmem:[#allocation5 + $0x60] sm:$0xff] %vm912, 0.0
        %967 = vst.msk [vmem:[#allocation5 + $0x68] sm:$0xff] %vm912, 0.0
        %968 = vst.msk [vmem:[#allocation5 + $0x70] sm:$0xff] %vm912, 0.0
        %969 = vst.msk [vmem:[#allocation5 + $0x78] sm:$0xff] %vm912, 0.0
      $region52: #{vjepa2_rope_attention_forward.4} parent=47 // pred_fallthru
        _
      %v970 = vld [vmem:[%s506] sm:$0xff]
      %v971 = vld [vmem:[%s506 + $0x8] sm:$0xff]
      %v972 = vld [vmem:[%s506 + $0x10] sm:$0xff]
      %v973 = vld [vmem:[%s506 + $0x18] sm:$0xff]
      %v974 = vld [vmem:[%s506 + $0x20] sm:$0xff]
      %v975 = vld [vmem:[%s506 + $0x28] sm:$0xff]
      %v976 = vld [vmem:[%s506 + $0x30] sm:$0xff]
      %v977 = vld [vmem:[%s506 + $0x38] sm:$0xff]
      %v978 = vld [vmem:[%s506 + $0x40] sm:$0xff]
      %v979 = vld [vmem:[%s506 + $0x48] sm:$0xff]
      %v980 = vld [vmem:[%s506 + $0x50] sm:$0xff]
      %v981 = vld [vmem:[%s506 + $0x58] sm:$0xff]
      %v982 = vld [vmem:[%s506 + $0x60] sm:$0xff]
      %v983 = vld [vmem:[%s506 + $0x68] sm:$0xff]
      %v984 = vld [vmem:[%s506 + $0x70] sm:$0xff]
      %v985 = vld [vmem:[%s506 + $0x78] sm:$0xff]
      %v986 = vld [vmem:[%s542] sm:$0xff]
      %v987 = vld [vmem:[%s542 + $0x8] sm:$0xff]
      %v988 = vld [vmem:[%s542 + $0x10] sm:$0xff]
      %v989 = vld [vmem:[%s542 + $0x18] sm:$0xff]
      %v990 = vld [vmem:[%s542 + $0x20] sm:$0xff]
      %v991 = vld [vmem:[%s542 + $0x28] sm:$0xff]
      %v992 = vld [vmem:[%s542 + $0x30] sm:$0xff]
      %v993 = vld [vmem:[%s542 + $0x38] sm:$0xff]
      %v994 = vld [vmem:[%s548] sm:$0xff]
      %v995 = vld [vmem:[%s548 + $0x8] sm:$0xff]
      %v996 = vld [vmem:[%s548 + $0x10] sm:$0xff]
      %v997 = vld [vmem:[%s548 + $0x18] sm:$0xff]
      %v998 = vld [vmem:[%s548 + $0x20] sm:$0xff]
      %v999 = vld [vmem:[%s548 + $0x28] sm:$0xff]
      %v1000 = vld [vmem:[%s548 + $0x30] sm:$0xff]
      %v1001 = vld [vmem:[%s548 + $0x38] sm:$0xff]
      %v1002 = vlaneseq
      %v1003 = vand.u32 %v1002, 127
      %vm1004 = vcmp.lt.s32.totalorder %v1003, 0
      %v1005 = vsub.s32 0, %v1003
      %v1006 = vsel %vm1004, %v1005, %v1003
      %v1007 = vshrl.u32 %v1006, 1
      %v1008 = vand.u32 %v1006, 1
      %v1009 = vsub.s32 0, %v1008
      %v1010 = vsel %vm1004, %v1009, %v1008
      %vm1011 = vcmp.ne.s32.totalorder %v1010, 0
      %vm1012 = vcmp.lt.s32.totalorder %v1010, 0
      %vm1013 = vmand %vm1012, %vm1011
      %v1014 = vadd.s32 %v1010, 2
      %v1015 = vsel %vm1013, %v1014, %v1010
      %vm1016 = vcmp.eq.s32.totalorder %v1015, 0
      %vm1017 = vcmask 1048064
      %1018 = vrot.lane.b32.xlu0 %v970, 64
      %v1019 = vpop.permute.xlu0 %1018
      %v1020 = vsel %vm1017, %v1019, %v970
      %1021 = vrot.lane.b32.xlu0 %v971, 64
      %v1022 = vpop.permute.xlu0 %1021
      %v1023 = vsel %vm1017, %v1022, %v971
      %1024 = vrot.lane.b32.xlu0 %v972, 64
      %v1025 = vpop.permute.xlu0 %1024
      %v1026 = vsel %vm1017, %v1025, %v972
      %1027 = vrot.lane.b32.xlu0 %v973, 64
      %v1028 = vpop.permute.xlu0 %1027
      %v1029 = vsel %vm1017, %v1028, %v973
      %1030 = vrot.lane.b32.xlu0 %v974, 64
      %v1031 = vpop.permute.xlu0 %1030
      %v1032 = vsel %vm1017, %v1031, %v974
      %1033 = vrot.lane.b32.xlu0 %v975, 64
      %v1034 = vpop.permute.xlu0 %1033
      %v1035 = vsel %vm1017, %v1034, %v975
      %1036 = vrot.lane.b32.xlu0 %v976, 64
      %v1037 = vpop.permute.xlu0 %1036
      %v1038 = vsel %vm1017, %v1037, %v976
      %1039 = vrot.lane.b32.xlu0 %v977, 64
      %v1040 = vpop.permute.xlu0 %1039
      %v1041 = vsel %vm1017, %v1040, %v977
      %1042 = vrot.lane.b32.xlu0 %v978, 64
      %v1043 = vpop.permute.xlu0 %1042
      %v1044 = vsel %vm1017, %v1043, %v978
      %1045 = vrot.lane.b32.xlu0 %v979, 64
      %v1046 = vpop.permute.xlu0 %1045
      %v1047 = vsel %vm1017, %v1046, %v979
      %1048 = vrot.lane.b32.xlu0 %v980, 64
      %v1049 = vpop.permute.xlu0 %1048
      %v1050 = vsel %vm1017, %v1049, %v980
      %1051 = vrot.lane.b32.xlu0 %v981, 64
      %v1052 = vpop.permute.xlu0 %1051
      %v1053 = vsel %vm1017, %v1052, %v981
      %1054 = vrot.lane.b32.xlu0 %v982, 64
      %v1055 = vpop.permute.xlu0 %1054
      %v1056 = vsel %vm1017, %v1055, %v982
      %1057 = vrot.lane.b32.xlu0 %v983, 64
      %v1058 = vpop.permute.xlu0 %1057
      %v1059 = vsel %vm1017, %v1058, %v983
      %1060 = vrot.lane.b32.xlu0 %v984, 64
      %v1061 = vpop.permute.xlu0 %1060
      %v1062 = vsel %vm1017, %v1061, %v984
      %1063 = vrot.lane.b32.xlu0 %v985, 64
      %v1064 = vpop.permute.xlu0 %1063
      %v1065 = vsel %vm1017, %v1064, %v985
      %1066 = vrot.lane.b32.xlu0 %v1020, 64
      %v1067 = vpop.permute.xlu0 %1066
      %1068 = vrot.lane.b32.xlu0 %v1023, 64
      %v1069 = vpop.permute.xlu0 %1068
      %1070 = vrot.lane.b32.xlu0 %v1026, 64
      %v1071 = vpop.permute.xlu0 %1070
      %1072 = vrot.lane.b32.xlu0 %v1029, 64
      %v1073 = vpop.permute.xlu0 %1072
      %1074 = vrot.lane.b32.xlu0 %v1032, 64
      %v1075 = vpop.permute.xlu0 %1074
      %1076 = vrot.lane.b32.xlu0 %v1035, 64
      %v1077 = vpop.permute.xlu0 %1076
      %1078 = vrot.lane.b32.xlu0 %v1038, 64
      %v1079 = vpop.permute.xlu0 %1078
      %1080 = vrot.lane.b32.xlu0 %v1041, 64
      %v1081 = vpop.permute.xlu0 %1080
      %1082 = vrot.lane.b32.xlu0 %v1044, 64
      %v1083 = vpop.permute.xlu0 %1082
      %1084 = vrot.lane.b32.xlu0 %v1047, 64
      %v1085 = vpop.permute.xlu0 %1084
      %1086 = vrot.lane.b32.xlu0 %v1050, 64
      %v1087 = vpop.permute.xlu0 %1086
      %1088 = vrot.lane.b32.xlu0 %v1053, 64
      %v1089 = vpop.permute.xlu0 %1088
      %1090 = vrot.lane.b32.xlu0 %v1056, 64
      %v1091 = vpop.permute.xlu0 %1090
      %1092 = vrot.lane.b32.xlu0 %v1059, 64
      %v1093 = vpop.permute.xlu0 %1092
      %1094 = vrot.lane.b32.xlu0 %v1062, 64
      %v1095 = vpop.permute.xlu0 %1094
      %1096 = vrot.lane.b32.xlu0 %v1065, 64
      %v1097 = vpop.permute.xlu0 %1096
      %v1098 = vsel %vm1017, %v1067, %v970
      %v1099 = vsel %vm1017, %v1069, %v971
      %v1100 = vsel %vm1017, %v1071, %v972
      %v1101 = vsel %vm1017, %v1073, %v973
      %v1102 = vsel %vm1017, %v1075, %v974
      %v1103 = vsel %vm1017, %v1077, %v975
      %v1104 = vsel %vm1017, %v1079, %v976
      %v1105 = vsel %vm1017, %v1081, %v977
      %v1106 = vsel %vm1017, %v1083, %v978
      %v1107 = vsel %vm1017, %v1085, %v979
      %v1108 = vsel %vm1017, %v1087, %v980
      %v1109 = vsel %vm1017, %v1089, %v981
      %v1110 = vsel %vm1017, %v1091, %v982
      %v1111 = vsel %vm1017, %v1093, %v983
      %v1112 = vsel %vm1017, %v1095, %v984
      %v1113 = vsel %vm1017, %v1097, %v985
      %1130 = vrot.lane.b32.xlu0 %v1098, 127
      %v1131 = vpop.permute.xlu0 %1130
      %1132 = vrot.lane.b32.xlu0 %v1099, 127
      %v1133 = vpop.permute.xlu0 %1132
      %1134 = vrot.lane.b32.xlu0 %v1100, 127
      %v1135 = vpop.permute.xlu0 %1134
      %1136 = vrot.lane.b32.xlu0 %v1101, 127
      %v1137 = vpop.permute.xlu0 %1136
      %1138 = vrot.lane.b32.xlu0 %v1102, 127
      %v1139 = vpop.permute.xlu0 %1138
      %1140 = vrot.lane.b32.xlu0 %v1103, 127
      %v1141 = vpop.permute.xlu0 %1140
      %1142 = vrot.lane.b32.xlu0 %v1104, 127
      %v1143 = vpop.permute.xlu0 %1142
      %1144 = vrot.lane.b32.xlu0 %v1105, 127
      %v1145 = vpop.permute.xlu0 %1144
      %1146 = vrot.lane.b32.xlu0 %v1106, 127
      %v1147 = vpop.permute.xlu0 %1146
      %1148 = vrot.lane.b32.xlu0 %v1107, 127
      %v1149 = vpop.permute.xlu0 %1148
      %1150 = vrot.lane.b32.xlu0 %v1108, 127
      %v1151 = vpop.permute.xlu0 %1150
      %1152 = vrot.lane.b32.xlu0 %v1109, 127
      %v1153 = vpop.permute.xlu0 %1152
      %1154 = vrot.lane.b32.xlu0 %v1110, 127
      %v1155 = vpop.permute.xlu0 %1154
      %1156 = vrot.lane.b32.xlu0 %v1111, 127
      %v1157 = vpop.permute.xlu0 %1156
      %1158 = vrot.lane.b32.xlu0 %v1112, 127
      %v1159 = vpop.permute.xlu0 %1158
      %1160 = vrot.lane.b32.xlu0 %v1113, 127
      %v1161 = vpop.permute.xlu0 %1160
      %1178 = vrot.lane.b32.xlu0 %v1098, 65
      %v1179 = vpop.permute.xlu0 %1178
      %1180 = vrot.lane.b32.xlu0 %v1099, 65
      %v1181 = vpop.permute.xlu0 %1180
      %1182 = vrot.lane.b32.xlu0 %v1100, 65
      %v1183 = vpop.permute.xlu0 %1182
      %1184 = vrot.lane.b32.xlu0 %v1101, 65
      %v1185 = vpop.permute.xlu0 %1184
      %1186 = vrot.lane.b32.xlu0 %v1102, 65
      %v1187 = vpop.permute.xlu0 %1186
      %1188 = vrot.lane.b32.xlu0 %v1103, 65
      %v1189 = vpop.permute.xlu0 %1188
      %1190 = vrot.lane.b32.xlu0 %v1104, 65
      %v1191 = vpop.permute.xlu0 %1190
      %1192 = vrot.lane.b32.xlu0 %v1105, 65
      %v1193 = vpop.permute.xlu0 %1192
      %1194 = vrot.lane.b32.xlu0 %v1106, 65
      %v1195 = vpop.permute.xlu0 %1194
      %1196 = vrot.lane.b32.xlu0 %v1107, 65
      %v1197 = vpop.permute.xlu0 %1196
      %1198 = vrot.lane.b32.xlu0 %v1108, 65
      %v1199 = vpop.permute.xlu0 %1198
      %1200 = vrot.lane.b32.xlu0 %v1109, 65
      %v1201 = vpop.permute.xlu0 %1200
      %1202 = vrot.lane.b32.xlu0 %v1110, 65
      %v1203 = vpop.permute.xlu0 %1202
      %1204 = vrot.lane.b32.xlu0 %v1111, 65
      %v1205 = vpop.permute.xlu0 %1204
      %1206 = vrot.lane.b32.xlu0 %v1112, 65
      %v1207 = vpop.permute.xlu0 %1206
      %1208 = vrot.lane.b32.xlu0 %v1113, 65
      %v1209 = vpop.permute.xlu0 %1208
      %v1226 = vsel %vm1016, %v1131, %v1179
      %v1227 = vsel %vm1016, %v1133, %v1181
      %v1228 = vsel %vm1016, %v1135, %v1183
      %v1229 = vsel %vm1016, %v1137, %v1185
      %v1230 = vsel %vm1016, %v1139, %v1187
      %v1231 = vsel %vm1016, %v1141, %v1189
      %v1232 = vsel %vm1016, %v1143, %v1191
      %v1233 = vsel %vm1016, %v1145, %v1193
      %v1234 = vsel %vm1016, %v1147, %v1195
      %v1235 = vsel %vm1016, %v1149, %v1197
      %v1236 = vsel %vm1016, %v1151, %v1199
      %v1237 = vsel %vm1016, %v1153, %v1201
      %v1238 = vsel %vm1016, %v1155, %v1203
      %v1239 = vsel %vm1016, %v1157, %v1205
      %v1240 = vsel %vm1016, %v1159, %v1207
      %v1241 = vsel %vm1016, %v1161, %v1209
      %v1242 = vmul.f32 %v970, %v986
      %v1243 = vmul.f32 %v971, %v987
      %v1244 = vmul.f32 %v972, %v988
      %v1245 = vmul.f32 %v973, %v989
      %v1246 = vmul.f32 %v974, %v990
      %v1247 = vmul.f32 %v975, %v991
      %v1248 = vmul.f32 %v976, %v992
      %v1249 = vmul.f32 %v977, %v993
      %v1250 = vmul.f32 %v978, %v986
      %v1251 = vmul.f32 %v979, %v987
      %v1252 = vmul.f32 %v980, %v988
      %v1253 = vmul.f32 %v981, %v989
      %v1254 = vmul.f32 %v982, %v990
      %v1255 = vmul.f32 %v983, %v991
      %v1256 = vmul.f32 %v984, %v992
      %v1257 = vmul.f32 %v985, %v993
      %v1258 = vmul.f32 %v1226, %v994
      %v1259 = vmul.f32 %v1227, %v995
      %v1260 = vmul.f32 %v1228, %v996
      %v1261 = vmul.f32 %v1229, %v997
      %v1262 = vmul.f32 %v1230, %v998
      %v1263 = vmul.f32 %v1231, %v999
      %v1264 = vmul.f32 %v1232, %v1000
      %v1265 = vmul.f32 %v1233, %v1001
      %v1266 = vmul.f32 %v1234, %v994
      %v1267 = vmul.f32 %v1235, %v995
      %v1268 = vmul.f32 %v1236, %v996
      %v1269 = vmul.f32 %v1237, %v997
      %v1270 = vmul.f32 %v1238, %v998
      %v1271 = vmul.f32 %v1239, %v999
      %v1272 = vmul.f32 %v1240, %v1000
      %v1273 = vmul.f32 %v1241, %v1001
      %v1274 = vadd.f32 %v1242, %v1258
      %v1275 = vadd.f32 %v1243, %v1259
      %v1276 = vadd.f32 %v1244, %v1260
      %v1277 = vadd.f32 %v1245, %v1261
      %v1278 = vadd.f32 %v1246, %v1262
      %v1279 = vadd.f32 %v1247, %v1263
      %v1280 = vadd.f32 %v1248, %v1264
      %v1281 = vadd.f32 %v1249, %v1265
      %v1282 = vadd.f32 %v1250, %v1266
      %v1283 = vadd.f32 %v1251, %v1267
      %v1284 = vadd.f32 %v1252, %v1268
      %v1285 = vadd.f32 %v1253, %v1269
      %v1286 = vadd.f32 %v1254, %v1270
      %v1287 = vadd.f32 %v1255, %v1271
      %v1288 = vadd.f32 %v1256, %v1272
      %v1289 = vadd.f32 %v1257, %v1273
      %v1290 = vpack.c.bf16 %v1275, %v1274
      %v1291 = vpack.c.bf16 %v1277, %v1276
      %v1292 = vpack.c.bf16 %v1279, %v1278
      %v1293 = vpack.c.bf16 %v1281, %v1280
      %v1294 = vpack.c.bf16 %v1283, %v1282
      %v1295 = vpack.c.bf16 %v1285, %v1284
      %v1296 = vpack.c.bf16 %v1287, %v1286
      %v1297 = vpack.c.bf16 %v1289, %v1288
      %v1298 = vld [vmem:[%s523] sm:$0xff]
      %v1299 = vld [vmem:[%s523 + $0x8] sm:$0xff]
      %v1300 = vld [vmem:[%s523 + $0x10] sm:$0xff]
      %v1301 = vld [vmem:[%s523 + $0x18] sm:$0xff]
      %v1302 = vld [vmem:[%s523 + $0x20] sm:$0xff]
      %v1303 = vld [vmem:[%s523 + $0x28] sm:$0xff]
      %v1304 = vld [vmem:[%s523 + $0x30] sm:$0xff]
      %v1305 = vld [vmem:[%s523 + $0x38] sm:$0xff]
      %v1306 = vld [vmem:[%s523 + $0x40] sm:$0xff]
      %v1307 = vld [vmem:[%s523 + $0x48] sm:$0xff]
      %v1308 = vld [vmem:[%s523 + $0x50] sm:$0xff]
      %v1309 = vld [vmem:[%s523 + $0x58] sm:$0xff]
      %v1310 = vld [vmem:[%s523 + $0x60] sm:$0xff]
      %v1311 = vld [vmem:[%s523 + $0x68] sm:$0xff]
      %v1312 = vld [vmem:[%s523 + $0x70] sm:$0xff]
      %v1313 = vld [vmem:[%s523 + $0x78] sm:$0xff]
      %v1314 = vpack.c.bf16 %v1299, %v1298
      %v1315 = vpack.c.bf16 %v1301, %v1300
      %v1316 = vpack.c.bf16 %v1303, %v1302
      %v1317 = vpack.c.bf16 %v1305, %v1304
      %v1318 = vpack.c.bf16 %v1307, %v1306
      %v1319 = vpack.c.bf16 %v1309, %v1308
      %v1320 = vpack.c.bf16 %v1311, %v1310
      %v1321 = vpack.c.bf16 %v1313, %v1312
      %v1322 = vld [vmem:[#allocation2] sm:$0xff]
      %v1323 = vld [vmem:[#allocation2 + $0x8] sm:$0xff]
      %v1324 = vld [vmem:[#allocation2 + $0x10] sm:$0xff]
      %v1325 = vld [vmem:[#allocation2 + $0x18] sm:$0xff]
      %v1326 = vld [vmem:[#allocation2 + $0x20] sm:$0xff]
      %v1327 = vld [vmem:[#allocation2 + $0x28] sm:$0xff]
      %v1328 = vld [vmem:[#allocation2 + $0x30] sm:$0xff]
      %v1329 = vld [vmem:[#allocation2 + $0x38] sm:$0xff]
      %vm1330 = vcmask 523264
      %v1332 = vsel %vm1330, %v1322, 0
      %v1335 = vsel %vm1330, %v1323, 0
      %v1338 = vsel %vm1330, %v1324, 0
      %v1341 = vsel %vm1330, %v1325, 0
      %v1344 = vsel %vm1330, %v1290, 0
      %v1347 = vsel %vm1330, %v1291, 0
      %v1350 = vsel %vm1330, %v1292, 0
      %v1353 = vsel %vm1330, %v1293, 0
      %1355 = vmatprep.subr.bf16.mxu0 0
      %1356 = vmatpush1.bf16.xpose.msra.mxu0 %v1344
      %1357 = vmatprep.subr.bf16.mxu0 0
      %1358 = vmatpush1.bf16.xpose.msra.mxu0 %v1347
      %1359 = vmatprep.subr.bf16.mxu0 0
      %1360 = vmatpush1.bf16.xpose.msra.mxu0 %v1350
      %1361 = vmatprep.subr.bf16.mxu0 0
      %1362 = vmatpush1.bf16.xpose.msra.mxu0 %v1353
      %1363 = vmatprep.subr.bf16.mxu0 0
      %1364 = vmatpush1.bf16.xpose.msra.mxu0 0
      %1365 = vmatprep.subr.bf16.mxu0 0
      %1366 = vmatpush1.bf16.xpose.msra.mxu0 0
      %1367 = vmatprep.subr.bf16.mxu0 0
      %1368 = vmatpush1.bf16.xpose.msra.mxu0 0
      %1369 = vmatprep.subr.bf16.mxu0 0
      %1370 = vmatpush1.bf16.xpose.msra.mxu0 0
      %1371 = vmatprep.subr.bf16.mxu0 0
      %1372 = vmatpush1.bf16.xpose.msra.mxu0 0
      %1373 = vmatprep.subr.bf16.mxu0 0
      %1374 = vmatpush1.bf16.xpose.msra.mxu0 0
      %1375 = vmatprep.subr.bf16.mxu0 0
      %1376 = vmatpush1.bf16.xpose.msra.mxu0 0
      %1377 = vmatprep.subr.bf16.mxu0 0
      %1378 = vmatpush1.bf16.xpose.msra.mxu0 0
      %1379 = vmatprep.subr.bf16.mxu0 0
      %1380 = vmatpush1.bf16.xpose.msra.mxu0 0
      %1381 = vmatprep.subr.bf16.mxu0 0
      %1382 = vmatpush1.bf16.xpose.msra.mxu0 0
      %1383 = vmatprep.subr.bf16.mxu0 0
      %1384 = vmatpush1.bf16.xpose.msra.mxu0 0
      %1385 = vmatprep.subr.bf16.mxu0 0
      %1386 = vmatpush1.bf16.xpose.msra.mxu0 0
      %1387 = vmatprep.mubr.bf16.mxu0 0
      %1388 = vmatmul.mubr.bf16.gmra.mrb[0].mxu0 %v1332
      %v1389 = vpop.f32.mrb[0].mxu0
      %v1390 = vadd.f32 0.0, %v1389
      %v1391 = vpop.f32.mrb[0].mxu0
      %v1392 = vpop.f32.mrb[0].mxu0
      %v1393 = vadd.f32 0.0, %v1392
      %v1394 = vpop.f32.mrb[0].mxu0
      %1395 = vmatprep.mubr.bf16.mxu0 0
      %1396 = vmatmul.mubr.bf16.gmra.mrb[0].mxu0 %v1335
      %v1397 = vpop.f32.mrb[0].mxu0
      %v1398 = vadd.f32 0.0, %v1397
      %v1399 = vpop.f32.mrb[0].mxu0
      %v1400 = vpop.f32.mrb[0].mxu0
      %v1401 = vadd.f32 0.0, %v1400
      %v1402 = vpop.f32.mrb[0].mxu0
      %1403 = vmatprep.mubr.bf16.mxu0 0
      %1404 = vmatmul.mubr.bf16.gmra.mrb[0].mxu0 %v1338
      %v1405 = vpop.f32.mrb[0].mxu0
      %v1406 = vadd.f32 0.0, %v1405
      %v1407 = vpop.f32.mrb[0].mxu0
      %v1408 = vpop.f32.mrb[0].mxu0
      %v1409 = vadd.f32 0.0, %v1408
      %v1410 = vpop.f32.mrb[0].mxu0
      %1411 = vmatprep.mubr.bf16.mxu0 0
      %1412 = vmatmul.mubr.bf16.gmra.mrb[0].mxu0 %v1341
      %v1413 = vpop.f32.mrb[0].mxu0
      %v1414 = vadd.f32 0.0, %v1413
      %v1415 = vpop.f32.mrb[0].mxu0
      %v1416 = vpop.f32.mrb[0].mxu0
      %v1417 = vadd.f32 0.0, %v1416
      %v1418 = vpop.f32.mrb[0].mxu0
      %1419 = vdwg.mxu0
      %v1421 = vsel %vm1330, %v1326, 0
      %v1424 = vsel %vm1330, %v1327, 0
      %v1427 = vsel %vm1330, %v1328, 0
      %v1430 = vsel %vm1330, %v1329, 0
      %v1433 = vsel %vm1330, %v1294, 0
      %v1436 = vsel %vm1330, %v1295, 0
      %v1439 = vsel %vm1330, %v1296, 0
      %v1442 = vsel %vm1330, %v1297, 0
      %1444 = vmatprep.subr.bf16.mxu0 0
      %1445 = vmatpush1.bf16.xpose.msra.mxu0 %v1433
      %1446 = vmatprep.subr.bf16.mxu0 0
      %1447 = vmatpush1.bf16.xpose.msra.mxu0 %v1436
      %1448 = vmatprep.subr.bf16.mxu0 0
      %1449 = vmatpush1.bf16.xpose.msra.mxu0 %v1439
      %1450 = vmatprep.subr.bf16.mxu0 0
      %1451 = vmatpush1.bf16.xpose.msra.mxu0 %v1442
      %1452 = vmatprep.subr.bf16.mxu0 0
      %1453 = vmatpush1.bf16.xpose.msra.mxu0 0
      %1454 = vmatprep.subr.bf16.mxu0 0
      %1455 = vmatpush1.bf16.xpose.msra.mxu0 0
      %1456 = vmatprep.subr.bf16.mxu0 0
      %1457 = vmatpush1.bf16.xpose.msra.mxu0 0
      %1458 = vmatprep.subr.bf16.mxu0 0
      %1459 = vmatpush1.bf16.xpose.msra.mxu0 0
      %1460 = vmatprep.subr.bf16.mxu0 0
      %1461 = vmatpush1.bf16.xpose.msra.mxu0 0
      %1462 = vmatprep.subr.bf16.mxu0 0
      %1463 = vmatpush1.bf16.xpose.msra.mxu0 0
      %1464 = vmatprep.subr.bf16.mxu0 0
      %1465 = vmatpush1.bf16.xpose.msra.mxu0 0
      %1466 = vmatprep.subr.bf16.mxu0 0
      %1467 = vmatpush1.bf16.xpose.msra.mxu0 0
      %1468 = vmatprep.subr.bf16.mxu0 0
      %1469 = vmatpush1.bf16.xpose.msra.mxu0 0
      %1470 = vmatprep.subr.bf16.mxu0 0
      %1471 = vmatpush1.bf16.xpose.msra.mxu0 0
      %1472 = vmatprep.subr.bf16.mxu0 0
      %1473 = vmatpush1.bf16.xpose.msra.mxu0 0
      %1474 = vmatprep.subr.bf16.mxu0 0
      %1475 = vmatpush1.bf16.xpose.msra.mxu0 0
      %1476 = vmatprep.mubr.bf16.mxu0 0
      %1477 = vmatmul.mubr.bf16.gmra.mrb[0].mxu0 %v1421
      %v1478 = vpop.f32.mrb[0].mxu0
      %v1479 = vadd.f32 0.0, %v1478
      %v1480 = vpop.f32.mrb[0].mxu0
      %v1481 = vpop.f32.mrb[0].mxu0
      %v1482 = vadd.f32 0.0, %v1481
      %v1483 = vpop.f32.mrb[0].mxu0
      %1484 = vmatprep.mubr.bf16.mxu0 0
      %1485 = vmatmul.mubr.bf16.gmra.mrb[0].mxu0 %v1424
      %v1486 = vpop.f32.mrb[0].mxu0
      %v1487 = vadd.f32 0.0, %v1486
      %v1488 = vpop.f32.mrb[0].mxu0
      %v1489 = vpop.f32.mrb[0].mxu0
      %v1490 = vadd.f32 0.0, %v1489
      %v1491 = vpop.f32.mrb[0].mxu0
      %1492 = vmatprep.mubr.bf16.mxu0 0
      %1493 = vmatmul.mubr.bf16.gmra.mrb[0].mxu0 %v1427
      %v1494 = vpop.f32.mrb[0].mxu0
      %v1495 = vadd.f32 0.0, %v1494
      %v1496 = vpop.f32.mrb[0].mxu0
      %v1497 = vpop.f32.mrb[0].mxu0
      %v1498 = vadd.f32 0.0, %v1497
      %v1499 = vpop.f32.mrb[0].mxu0
      %1500 = vmatprep.mubr.bf16.mxu0 0
      %1501 = vmatmul.mubr.bf16.gmra.mrb[0].mxu0 %v1430
      %v1502 = vpop.f32.mrb[0].mxu0
      %v1503 = vadd.f32 0.0, %v1502
      %v1504 = vpop.f32.mrb[0].mxu0
      %v1505 = vpop.f32.mrb[0].mxu0
      %v1506 = vadd.f32 0.0, %v1505
      %v1507 = vpop.f32.mrb[0].mxu0
      %1508 = vdwg.mxu0
      %v1509 = vld [vmem:[#allocation3] sm:$0xff]
      %v1510 = vld [vmem:[#allocation3 + $0x8] sm:$0xff]
      %v1511 = vld [vmem:[#allocation3 + $0x10] sm:$0xff]
      %v1512 = vld [vmem:[#allocation3 + $0x18] sm:$0xff]
      %v1513 = vld [vmem:[#allocation3 + $0x20] sm:$0xff]
      %v1514 = vld [vmem:[#allocation3 + $0x28] sm:$0xff]
      %v1515 = vld [vmem:[#allocation3 + $0x30] sm:$0xff]
      %v1516 = vld [vmem:[#allocation3 + $0x38] sm:$0xff]
      %v1517 = vld [vmem:[#allocation3 + $0x40] sm:$0xff]
      %v1518 = vld [vmem:[#allocation3 + $0x48] sm:$0xff]
      %v1519 = vld [vmem:[#allocation3 + $0x50] sm:$0xff]
      %v1520 = vld [vmem:[#allocation3 + $0x58] sm:$0xff]
      %v1521 = vld [vmem:[#allocation3 + $0x60] sm:$0xff]
      %v1522 = vld [vmem:[#allocation3 + $0x68] sm:$0xff]
      %v1523 = vld [vmem:[#allocation3 + $0x70] sm:$0xff]
      %v1524 = vld [vmem:[#allocation3 + $0x78] sm:$0xff]
      %v1525 = vsel %vm1330, %v1390, -inf
      %1526 = vmax.xlane.f32.xlu0 %v1525
      %v1527 = vpop.xlane.xlu0 %1526
      %v1528 = vsel %vm1330, %v1393, -inf
      %1529 = vmax.xlane.f32.xlu0 %v1528
      %v1530 = vpop.xlane.xlu0 %1529
      %v1531 = vsel %vm1330, %v1398, -inf
      %1532 = vmax.xlane.f32.xlu0 %v1531
      %v1533 = vpop.xlane.xlu0 %1532
      %v1534 = vsel %vm1330, %v1401, -inf
      %1535 = vmax.xlane.f32.xlu0 %v1534
      %v1536 = vpop.xlane.xlu0 %1535
      %v1537 = vsel %vm1330, %v1406, -inf
      %1538 = vmax.xlane.f32.xlu0 %v1537
      %v1539 = vpop.xlane.xlu0 %1538
      %v1540 = vsel %vm1330, %v1409, -inf
      %1541 = vmax.xlane.f32.xlu0 %v1540
      %v1542 = vpop.xlane.xlu0 %1541
      %v1543 = vsel %vm1330, %v1414, -inf
      %1544 = vmax.xlane.f32.xlu0 %v1543
      %v1545 = vpop.xlane.xlu0 %1544
      %v1546 = vsel %vm1330, %v1417, -inf
      %1547 = vmax.xlane.f32.xlu0 %v1546
      %v1548 = vpop.xlane.xlu0 %1547
      %v1549 = vsel %vm1330, %v1479, -inf
      %1550 = vmax.xlane.f32.xlu0 %v1549
      %v1551 = vpop.xlane.xlu0 %1550
      %v1552 = vsel %vm1330, %v1482, -inf
      %1553 = vmax.xlane.f32.xlu0 %v1552
      %v1554 = vpop.xlane.xlu0 %1553
      %v1555 = vsel %vm1330, %v1487, -inf
      %1556 = vmax.xlane.f32.xlu0 %v1555
      %v1557 = vpop.xlane.xlu0 %1556
      %v1558 = vsel %vm1330, %v1490, -inf
      %1559 = vmax.xlane.f32.xlu0 %v1558
      %v1560 = vpop.xlane.xlu0 %1559
      %v1561 = vsel %vm1330, %v1495, -inf
      %1562 = vmax.xlane.f32.xlu0 %v1561
      %v1563 = vpop.xlane.xlu0 %1562
      %v1564 = vsel %vm1330, %v1498, -inf
      %1565 = vmax.xlane.f32.xlu0 %v1564
      %v1566 = vpop.xlane.xlu0 %1565
      %v1567 = vsel %vm1330, %v1503, -inf
      %1568 = vmax.xlane.f32.xlu0 %v1567
      %v1569 = vpop.xlane.xlu0 %1568
      %v1570 = vsel %vm1330, %v1506, -inf
      %1571 = vmax.xlane.f32.xlu0 %v1570
      %v1572 = vpop.xlane.xlu0 %1571
      %v1573 = vmax.f32 %v1509, %v1527
      %v1574 = vmax.f32 %v1510, %v1530
      %v1575 = vmax.f32 %v1511, %v1533
      %v1576 = vmax.f32 %v1512, %v1536
      %v1577 = vmax.f32 %v1513, %v1539
      %v1578 = vmax.f32 %v1514, %v1542
      %v1579 = vmax.f32 %v1515, %v1545
      %v1580 = vmax.f32 %v1516, %v1548
      %v1581 = vmax.f32 %v1517, %v1551
      %v1582 = vmax.f32 %v1518, %v1554
      %v1583 = vmax.f32 %v1519, %v1557
      %v1584 = vmax.f32 %v1520, %v1560
      %v1585 = vmax.f32 %v1521, %v1563
      %v1586 = vmax.f32 %v1522, %v1566
      %v1587 = vmax.f32 %v1523, %v1569
      %v1588 = vmax.f32 %v1524, %v1572
      %v1589 = vsub.f32 %v1509, %v1573
      %v1590 = vsub.f32 %v1510, %v1574
      %v1591 = vsub.f32 %v1511, %v1575
      %v1592 = vsub.f32 %v1512, %v1576
      %v1593 = vsub.f32 %v1513, %v1577
      %v1594 = vsub.f32 %v1514, %v1578
      %v1595 = vsub.f32 %v1515, %v1579
      %v1596 = vsub.f32 %v1516, %v1580
      %v1597 = vsub.f32 %v1517, %v1581
      %v1598 = vsub.f32 %v1518, %v1582
      %v1599 = vsub.f32 %v1519, %v1583
      %v1600 = vsub.f32 %v1520, %v1584
      %v1601 = vsub.f32 %v1521, %v1585
      %v1602 = vsub.f32 %v1522, %v1586
      %v1603 = vsub.f32 %v1523, %v1587
      %v1604 = vsub.f32 %v1524, %v1588
      %v1605 = vmul.f32 %v1589, 1.442695
      %v1606 = vpow.pop %v1605
      %v1607 = vmul.f32 %v1590, 1.442695
      %v1608 = vpow.pop %v1607
      %v1609 = vmul.f32 %v1591, 1.442695
      %v1610 = vpow.pop %v1609
      %v1611 = vmul.f32 %v1592, 1.442695
      %v1612 = vpow.pop %v1611
      %v1613 = vmul.f32 %v1593, 1.442695
      %v1614 = vpow.pop %v1613
      %v1615 = vmul.f32 %v1594, 1.442695
      %v1616 = vpow.pop %v1615
      %v1617 = vmul.f32 %v1595, 1.442695
      %v1618 = vpow.pop %v1617
      %v1619 = vmul.f32 %v1596, 1.442695
      %v1620 = vpow.pop %v1619
      %v1621 = vmul.f32 %v1597, 1.442695
      %v1622 = vpow.pop %v1621
      %v1623 = vmul.f32 %v1598, 1.442695
      %v1624 = vpow.pop %v1623
      %v1625 = vmul.f32 %v1599, 1.442695
      %v1626 = vpow.pop %v1625
      %v1627 = vmul.f32 %v1600, 1.442695
      %v1628 = vpow.pop %v1627
      %v1629 = vmul.f32 %v1601, 1.442695
      %v1630 = vpow.pop %v1629
      %v1631 = vmul.f32 %v1602, 1.442695
      %v1632 = vpow.pop %v1631
      %v1633 = vmul.f32 %v1603, 1.442695
      %v1634 = vpow.pop %v1633
      %v1635 = vmul.f32 %v1604, 1.442695
      %v1636 = vpow.pop %v1635
      %1638 = vset.pattern.permute.xlu0 0
      %1639 = vperm.xlu0 %1638, %v1573
      %v1640 = vpop.permute.xlu0 %1639
      %1643 = vset.pattern.permute.xlu0 0
      %1644 = vperm.xlu0 %1643, %v1574
      %v1645 = vpop.permute.xlu0 %1644
      %1648 = vset.pattern.permute.xlu0 0
      %1649 = vperm.xlu0 %1648, %v1575
      %v1650 = vpop.permute.xlu0 %1649
      %1653 = vset.pattern.permute.xlu0 0
      %1654 = vperm.xlu0 %1653, %v1576
      %v1655 = vpop.permute.xlu0 %1654
      %1658 = vset.pattern.permute.xlu0 0
      %1659 = vperm.xlu0 %1658, %v1577
      %v1660 = vpop.permute.xlu0 %1659
      %1663 = vset.pattern.permute.xlu0 0
      %1664 = vperm.xlu0 %1663, %v1578
      %v1665 = vpop.permute.xlu0 %1664
      %1668 = vset.pattern.permute.xlu0 0
      %1669 = vperm.xlu0 %1668, %v1579
      %v1670 = vpop.permute.xlu0 %1669
      %1673 = vset.pattern.permute.xlu0 0
      %1674 = vperm.xlu0 %1673, %v1580
      %v1675 = vpop.permute.xlu0 %1674
      %1678 = vset.pattern.permute.xlu0 0
      %1679 = vperm.xlu0 %1678, %v1581
      %v1680 = vpop.permute.xlu0 %1679
      %1683 = vset.pattern.permute.xlu0 0
      %1684 = vperm.xlu0 %1683, %v1582
      %v1685 = vpop.permute.xlu0 %1684
      %1688 = vset.pattern.permute.xlu0 0
      %1689 = vperm.xlu0 %1688, %v1583
      %v1690 = vpop.permute.xlu0 %1689
      %1693 = vset.pattern.permute.xlu0 0
      %1694 = vperm.xlu0 %1693, %v1584
      %v1695 = vpop.permute.xlu0 %1694
      %1698 = vset.pattern.permute.xlu0 0
      %1699 = vperm.xlu0 %1698, %v1585
      %v1700 = vpop.permute.xlu0 %1699
      %1703 = vset.pattern.permute.xlu0 0
      %1704 = vperm.xlu0 %1703, %v1586
      %v1705 = vpop.permute.xlu0 %1704
      %1708 = vset.pattern.permute.xlu0 0
      %1709 = vperm.xlu0 %1708, %v1587
      %v1710 = vpop.permute.xlu0 %1709
      %1713 = vset.pattern.permute.xlu0 0
      %1714 = vperm.xlu0 %1713, %v1588
      %v1715 = vpop.permute.xlu0 %1714
      %v1717 = vsub.f32 %v1390, %v1640
      %v1718 = vsub.f32 %v1393, %v1645
      %v1719 = vsub.f32 %v1398, %v1650
      %v1720 = vsub.f32 %v1401, %v1655
      %v1721 = vsub.f32 %v1406, %v1660
      %v1722 = vsub.f32 %v1409, %v1665
      %v1723 = vsub.f32 %v1414, %v1670
      %v1724 = vsub.f32 %v1417, %v1675
      %v1725 = vsub.f32 %v1479, %v1680
      %v1726 = vsub.f32 %v1482, %v1685
      %v1727 = vsub.f32 %v1487, %v1690
      %v1728 = vsub.f32 %v1490, %v1695
      %v1729 = vsub.f32 %v1495, %v1700
      %v1730 = vsub.f32 %v1498, %v1705
      %v1731 = vsub.f32 %v1503, %v1710
      %v1732 = vsub.f32 %v1506, %v1715
      %v1733 = vmul.f32 %v1717, 1.442695
      %v1734 = vpow.pop %v1733
      %v1735 = vmul.f32 %v1718, 1.442695
      %v1736 = vpow.pop %v1735
      %v1737 = vmul.f32 %v1719, 1.442695
      %v1738 = vpow.pop %v1737
      %v1739 = vmul.f32 %v1720, 1.442695
      %v1740 = vpow.pop %v1739
      %v1741 = vmul.f32 %v1721, 1.442695
      %v1742 = vpow.pop %v1741
      %v1743 = vmul.f32 %v1722, 1.442695
      %v1744 = vpow.pop %v1743
      %v1745 = vmul.f32 %v1723, 1.442695
      %v1746 = vpow.pop %v1745
      %v1747 = vmul.f32 %v1724, 1.442695
      %v1748 = vpow.pop %v1747
      %v1749 = vmul.f32 %v1725, 1.442695
      %v1750 = vpow.pop %v1749
      %v1751 = vmul.f32 %v1726, 1.442695
      %v1752 = vpow.pop %v1751
      %v1753 = vmul.f32 %v1727, 1.442695
      %v1754 = vpow.pop %v1753
      %v1755 = vmul.f32 %v1728, 1.442695
      %v1756 = vpow.pop %v1755
      %v1757 = vmul.f32 %v1729, 1.442695
      %v1758 = vpow.pop %v1757
      %v1759 = vmul.f32 %v1730, 1.442695
      %v1760 = vpow.pop %v1759
      %v1761 = vmul.f32 %v1731, 1.442695
      %v1762 = vpow.pop %v1761
      %v1763 = vmul.f32 %v1732, 1.442695
      %v1764 = vpow.pop %v1763
      %v1765 = vld [vmem:[#allocation4] sm:$0xff]
      %v1766 = vld [vmem:[#allocation4 + $0x8] sm:$0xff]
      %v1767 = vld [vmem:[#allocation4 + $0x10] sm:$0xff]
      %v1768 = vld [vmem:[#allocation4 + $0x18] sm:$0xff]
      %v1769 = vld [vmem:[#allocation4 + $0x20] sm:$0xff]
      %v1770 = vld [vmem:[#allocation4 + $0x28] sm:$0xff]
      %v1771 = vld [vmem:[#allocation4 + $0x30] sm:$0xff]
      %v1772 = vld [vmem:[#allocation4 + $0x38] sm:$0xff]
      %v1773 = vld [vmem:[#allocation4 + $0x40] sm:$0xff]
      %v1774 = vld [vmem:[#allocation4 + $0x48] sm:$0xff]
      %v1775 = vld [vmem:[#allocation4 + $0x50] sm:$0xff]
      %v1776 = vld [vmem:[#allocation4 + $0x58] sm:$0xff]
      %v1777 = vld [vmem:[#allocation4 + $0x60] sm:$0xff]
      %v1778 = vld [vmem:[#allocation4 + $0x68] sm:$0xff]
      %v1779 = vld [vmem:[#allocation4 + $0x70] sm:$0xff]
      %v1780 = vld [vmem:[#allocation4 + $0x78] sm:$0xff]
      %v1781 = vmul.f32 %v1606, %v1765
      %v1782 = vmul.f32 %v1608, %v1766
      %v1783 = vmul.f32 %v1610, %v1767
      %v1784 = vmul.f32 %v1612, %v1768
      %v1785 = vmul.f32 %v1614, %v1769
      %v1786 = vmul.f32 %v1616, %v1770
      %v1787 = vmul.f32 %v1618, %v1771
      %v1788 = vmul.f32 %v1620, %v1772
      %v1789 = vmul.f32 %v1622, %v1773
      %v1790 = vmul.f32 %v1624, %v1774
      %v1791 = vmul.f32 %v1626, %v1775
      %v1792 = vmul.f32 %v1628, %v1776
      %v1793 = vmul.f32 %v1630, %v1777
      %v1794 = vmul.f32 %v1632, %v1778
      %v1795 = vmul.f32 %v1634, %v1779
      %v1796 = vmul.f32 %v1636, %v1780
      %v1797 = vsel %vm1330, %v1734, 0.0
      %1798 = vadd.xlane.f32.xlu0 %v1797
      %v1799 = vpop.xlane.xlu0 %1798
      %v1800 = vsel %vm1330, %v1736, 0.0
      %1801 = vadd.xlane.f32.xlu0 %v1800
      %v1802 = vpop.xlane.xlu0 %1801
      %v1803 = vsel %vm1330, %v1738, 0.0
      %1804 = vadd.xlane.f32.xlu0 %v1803
      %v1805 = vpop.xlane.xlu0 %1804
      %v1806 = vsel %vm1330, %v1740, 0.0
      %1807 = vadd.xlane.f32.xlu0 %v1806
      %v1808 = vpop.xlane.xlu0 %1807
      %v1809 = vsel %vm1330, %v1742, 0.0
      %1810 = vadd.xlane.f32.xlu0 %v1809
      %v1811 = vpop.xlane.xlu0 %1810
      %v1812 = vsel %vm1330, %v1744, 0.0
      %1813 = vadd.xlane.f32.xlu0 %v1812
      %v1814 = vpop.xlane.xlu0 %1813
      %v1815 = vsel %vm1330, %v1746, 0.0
      %1816 = vadd.xlane.f32.xlu0 %v1815
      %v1817 = vpop.xlane.xlu0 %1816
      %v1818 = vsel %vm1330, %v1748, 0.0
      %1819 = vadd.xlane.f32.xlu0 %v1818
      %v1820 = vpop.xlane.xlu0 %1819
      %v1821 = vsel %vm1330, %v1750, 0.0
      %1822 = vadd.xlane.f32.xlu0 %v1821
      %v1823 = vpop.xlane.xlu0 %1822
      %v1824 = vsel %vm1330, %v1752, 0.0
      %1825 = vadd.xlane.f32.xlu0 %v1824
      %v1826 = vpop.xlane.xlu0 %1825
      %v1827 = vsel %vm1330, %v1754, 0.0
      %1828 = vadd.xlane.f32.xlu0 %v1827
      %v1829 = vpop.xlane.xlu0 %1828
      %v1830 = vsel %vm1330, %v1756, 0.0
      %1831 = vadd.xlane.f32.xlu0 %v1830
      %v1832 = vpop.xlane.xlu0 %1831
      %v1833 = vsel %vm1330, %v1758, 0.0
      %1834 = vadd.xlane.f32.xlu0 %v1833
      %v1835 = vpop.xlane.xlu0 %1834
      %v1836 = vsel %vm1330, %v1760, 0.0
      %1837 = vadd.xlane.f32.xlu0 %v1836
      %v1838 = vpop.xlane.xlu0 %1837
      %v1839 = vsel %vm1330, %v1762, 0.0
      %1840 = vadd.xlane.f32.xlu0 %v1839
      %v1841 = vpop.xlane.xlu0 %1840
      %v1842 = vsel %vm1330, %v1764, 0.0
      %1843 = vadd.xlane.f32.xlu0 %v1842
      %v1844 = vpop.xlane.xlu0 %1843
      %v1845 = vadd.f32 %v1781, %v1799
      %v1846 = vadd.f32 %v1782, %v1802
      %v1847 = vadd.f32 %v1783, %v1805
      %v1848 = vadd.f32 %v1784, %v1808
      %v1849 = vadd.f32 %v1785, %v1811
      %v1850 = vadd.f32 %v1786, %v1814
      %v1851 = vadd.f32 %v1787, %v1817
      %v1852 = vadd.f32 %v1788, %v1820
      %v1853 = vadd.f32 %v1789, %v1823
      %v1854 = vadd.f32 %v1790, %v1826
      %v1855 = vadd.f32 %v1791, %v1829
      %v1856 = vadd.f32 %v1792, %v1832
      %v1857 = vadd.f32 %v1793, %v1835
      %v1858 = vadd.f32 %v1794, %v1838
      %v1859 = vadd.f32 %v1795, %v1841
      %v1860 = vadd.f32 %v1796, %v1844
      %vm1861 = vcmask 7168
      %1862 = vst.msk [vmem:[#allocation4] sm:$0xff] %vm1861, %v1845
      %1863 = vst.msk [vmem:[#allocation4 + $0x8] sm:$0xff] %vm1861, %v1846
      %1864 = vst.msk [vmem:[#allocation4 + $0x10] sm:$0xff] %vm1861, %v1847
      %1865 = vst.msk [vmem:[#allocation4 + $0x18] sm:$0xff] %vm1861, %v1848
      %1866 = vst.msk [vmem:[#allocation4 + $0x20] sm:$0xff] %vm1861, %v1849
      %1867 = vst.msk [vmem:[#allocation4 + $0x28] sm:$0xff] %vm1861, %v1850
      %1868 = vst.msk [vmem:[#allocation4 + $0x30] sm:$0xff] %vm1861, %v1851
      %1869 = vst.msk [vmem:[#allocation4 + $0x38] sm:$0xff] %vm1861, %v1852
      %1870 = vst.msk [vmem:[#allocation4 + $0x40] sm:$0xff] %vm1861, %v1853
      %1871 = vst.msk [vmem:[#allocation4 + $0x48] sm:$0xff] %vm1861, %v1854
      %1872 = vst.msk [vmem:[#allocation4 + $0x50] sm:$0xff] %vm1861, %v1855
      %1873 = vst.msk [vmem:[#allocation4 + $0x58] sm:$0xff] %vm1861, %v1856
      %1874 = vst.msk [vmem:[#allocation4 + $0x60] sm:$0xff] %vm1861, %v1857
      %1875 = vst.msk [vmem:[#allocation4 + $0x68] sm:$0xff] %vm1861, %v1858
      %1876 = vst.msk [vmem:[#allocation4 + $0x70] sm:$0xff] %vm1861, %v1859
      %1877 = vst.msk [vmem:[#allocation4 + $0x78] sm:$0xff] %vm1861, %v1860
      %v1878 = vpack.c.bf16 %v1736, %v1734
      %v1879 = vpack.c.bf16 %v1740, %v1738
      %v1880 = vpack.c.bf16 %v1744, %v1742
      %v1881 = vpack.c.bf16 %v1748, %v1746
      %v1882 = vpack.c.bf16 %v1752, %v1750
      %v1883 = vpack.c.bf16 %v1756, %v1754
      %v1884 = vpack.c.bf16 %v1760, %v1758
      %v1885 = vpack.c.bf16 %v1764, %v1762
      %v1887 = vsel %vm1330, %v1878, 0
      %v1890 = vsel %vm1330, %v1879, 0
      %v1893 = vsel %vm1330, %v1880, 0
      %v1896 = vsel %vm1330, %v1881, 0
      %1898 = vmatprep.subr.bf16.mxu0 0
      %1899 = vmatpush1.bf16.msra.mxu0 %v1314
      %1900 = vmatprep.subr.bf16.mxu0 0
      %1901 = vmatpush1.bf16.msra.mxu0 %v1315
      %1902 = vmatprep.subr.bf16.mxu0 0
      %1903 = vmatpush1.bf16.msra.mxu0 %v1316
      %1904 = vmatprep.subr.bf16.mxu0 0
      %1905 = vmatpush1.bf16.msra.mxu0 %v1317
      %1906 = vmatprep.subr.bf16.mxu0 0
      %1907 = vmatpush1.bf16.msra.mxu0 0
      %1908 = vmatprep.subr.bf16.mxu0 0
      %1909 = vmatpush1.bf16.msra.mxu0 0
      %1910 = vmatprep.subr.bf16.mxu0 0
      %1911 = vmatpush1.bf16.msra.mxu0 0
      %1912 = vmatprep.subr.bf16.mxu0 0
      %1913 = vmatpush1.bf16.msra.mxu0 0
      %1914 = vmatprep.subr.bf16.mxu0 0
      %1915 = vmatpush1.bf16.msra.mxu0 0
      %1916 = vmatprep.subr.bf16.mxu0 0
      %1917 = vmatpush1.bf16.msra.mxu0 0
      %1918 = vmatprep.subr.bf16.mxu0 0
      %1919 = vmatpush1.bf16.msra.mxu0 0
      %1920 = vmatprep.subr.bf16.mxu0 0
      %1921 = vmatpush1.bf16.msra.mxu0 0
      %1922 = vmatprep.subr.bf16.mxu0 0
      %1923 = vmatpush1.bf16.msra.mxu0 0
      %1924 = vmatprep.subr.bf16.mxu0 0
      %1925 = vmatpush1.bf16.msra.mxu0 0
      %1926 = vmatprep.subr.bf16.mxu0 0
      %1927 = vmatpush1.bf16.msra.mxu0 0
      %1928 = vmatprep.subr.bf16.mxu0 0
      %1929 = vmatpush1.bf16.msra.mxu0 0
      %1930 = vmatprep.mubr.bf16.mxu0 0
      %1931 = vmatmul.mubr.bf16.gmra.mrb[0].mxu0 %v1887
      %v1932 = vpop.f32.mrb[0].mxu0
      %v1933 = vadd.f32 0.0, %v1932
      %v1934 = vpop.f32.mrb[0].mxu0
      %v1935 = vpop.f32.mrb[0].mxu0
      %v1936 = vadd.f32 0.0, %v1935
      %v1937 = vpop.f32.mrb[0].mxu0
      %1938 = vmatprep.mubr.bf16.mxu0 0
      %1939 = vmatmul.mubr.bf16.gmra.mrb[0].mxu0 %v1890
      %v1940 = vpop.f32.mrb[0].mxu0
      %v1941 = vadd.f32 0.0, %v1940
      %v1942 = vpop.f32.mrb[0].mxu0
      %v1943 = vpop.f32.mrb[0].mxu0
      %v1944 = vadd.f32 0.0, %v1943
      %v1945 = vpop.f32.mrb[0].mxu0
      %1946 = vmatprep.mubr.bf16.mxu0 0
      %1947 = vmatmul.mubr.bf16.gmra.mrb[0].mxu0 %v1893
      %v1948 = vpop.f32.mrb[0].mxu0
      %v1949 = vadd.f32 0.0, %v1948
      %v1950 = vpop.f32.mrb[0].mxu0
      %v1951 = vpop.f32.mrb[0].mxu0
      %v1952 = vadd.f32 0.0, %v1951
      %v1953 = vpop.f32.mrb[0].mxu0
      %1954 = vmatprep.mubr.bf16.mxu0 0
      %1955 = vmatmul.mubr.bf16.gmra.mrb[0].mxu0 %v1896
      %v1956 = vpop.f32.mrb[0].mxu0
      %v1957 = vadd.f32 0.0, %v1956
      %v1958 = vpop.f32.mrb[0].mxu0
      %v1959 = vpop.f32.mrb[0].mxu0
      %v1960 = vadd.f32 0.0, %v1959
      %v1961 = vpop.f32.mrb[0].mxu0
      %1962 = vdwg.mxu0
      %v1964 = vsel %vm1330, %v1882, 0
      %v1967 = vsel %vm1330, %v1883, 0
      %v1970 = vsel %vm1330, %v1884, 0
      %v1973 = vsel %vm1330, %v1885, 0
      %1975 = vmatprep.subr.bf16.mxu0 0
      %1976 = vmatpush1.bf16.msra.mxu0 %v1318
      %1977 = vmatprep.subr.bf16.mxu0 0
      %1978 = vmatpush1.bf16.msra.mxu0 %v1319
      %1979 = vmatprep.subr.bf16.mxu0 0
      %1980 = vmatpush1.bf16.msra.mxu0 %v1320
      %1981 = vmatprep.subr.bf16.mxu0 0
      %1982 = vmatpush1.bf16.msra.mxu0 %v1321
      %1983 = vmatprep.subr.bf16.mxu0 0
      %1984 = vmatpush1.bf16.msra.mxu0 0
      %1985 = vmatprep.subr.bf16.mxu0 0
      %1986 = vmatpush1.bf16.msra.mxu0 0
      %1987 = vmatprep.subr.bf16.mxu0 0
      %1988 = vmatpush1.bf16.msra.mxu0 0
      %1989 = vmatprep.subr.bf16.mxu0 0
      %1990 = vmatpush1.bf16.msra.mxu0 0
      %1991 = vmatprep.subr.bf16.mxu0 0
      %1992 = vmatpush1.bf16.msra.mxu0 0
      %1993 = vmatprep.subr.bf16.mxu0 0
      %1994 = vmatpush1.bf16.msra.mxu0 0
      %1995 = vmatprep.subr.bf16.mxu0 0
      %1996 = vmatpush1.bf16.msra.mxu0 0
      %1997 = vmatprep.subr.bf16.mxu0 0
      %1998 = vmatpush1.bf16.msra.mxu0 0
      %1999 = vmatprep.subr.bf16.mxu0 0
      %2000 = vmatpush1.bf16.msra.mxu0 0
      %2001 = vmatprep.subr.bf16.mxu0 0
      %2002 = vmatpush1.bf16.msra.mxu0 0
      %2003 = vmatprep.subr.bf16.mxu0 0
      %2004 = vmatpush1.bf16.msra.mxu0 0
      %2005 = vmatprep.subr.bf16.mxu0 0
      %2006 = vmatpush1.bf16.msra.mxu0 0
      %2007 = vmatprep.mubr.bf16.mxu0 0
      %2008 = vmatmul.mubr.bf16.gmra.mrb[0].mxu0 %v1964
      %v2009 = vpop.f32.mrb[0].mxu0
      %v2010 = vadd.f32 0.0, %v2009
      %v2011 = vpop.f32.mrb[0].mxu0
      %v2012 = vpop.f32.mrb[0].mxu0
      %v2013 = vadd.f32 0.0, %v2012
      %v2014 = vpop.f32.mrb[0].mxu0
      %2015 = vmatprep.mubr.bf16.mxu0 0
      %2016 = vmatmul.mubr.bf16.gmra.mrb[0].mxu0 %v1967
      %v2017 = vpop.f32.mrb[0].mxu0
      %v2018 = vadd.f32 0.0, %v2017
      %v2019 = vpop.f32.mrb[0].mxu0
      %v2020 = vpop.f32.mrb[0].mxu0
      %v2021 = vadd.f32 0.0, %v2020
      %v2022 = vpop.f32.mrb[0].mxu0
      %2023 = vmatprep.mubr.bf16.mxu0 0
      %2024 = vmatmul.mubr.bf16.gmra.mrb[0].mxu0 %v1970
      %v2025 = vpop.f32.mrb[0].mxu0
      %v2026 = vadd.f32 0.0, %v2025
      %v2027 = vpop.f32.mrb[0].mxu0
      %v2028 = vpop.f32.mrb[0].mxu0
      %v2029 = vadd.f32 0.0, %v2028
      %v2030 = vpop.f32.mrb[0].mxu0
      %2031 = vmatprep.mubr.bf16.mxu0 0
      %2032 = vmatmul.mubr.bf16.gmra.mrb[0].mxu0 %v1973
      %v2033 = vpop.f32.mrb[0].mxu0
      %v2034 = vadd.f32 0.0, %v2033
      %v2035 = vpop.f32.mrb[0].mxu0
      %v2036 = vpop.f32.mrb[0].mxu0
      %v2037 = vadd.f32 0.0, %v2036
      %v2038 = vpop.f32.mrb[0].mxu0
      %2039 = vdwg.mxu0
      %v2040 = vld [vmem:[#allocation5] sm:$0xff]
      %v2041 = vld [vmem:[#allocation5 + $0x8] sm:$0xff]
      %v2042 = vld [vmem:[#allocation5 + $0x10] sm:$0xff]
      %v2043 = vld [vmem:[#allocation5 + $0x18] sm:$0xff]
      %v2044 = vld [vmem:[#allocation5 + $0x20] sm:$0xff]
      %v2045 = vld [vmem:[#allocation5 + $0x28] sm:$0xff]
      %v2046 = vld [vmem:[#allocation5 + $0x30] sm:$0xff]
      %v2047 = vld [vmem:[#allocation5 + $0x38] sm:$0xff]
      %v2048 = vld [vmem:[#allocation5 + $0x40] sm:$0xff]
      %v2049 = vld [vmem:[#allocation5 + $0x48] sm:$0xff]
      %v2050 = vld [vmem:[#allocation5 + $0x50] sm:$0xff]
      %v2051 = vld [vmem:[#allocation5 + $0x58] sm:$0xff]
      %v2052 = vld [vmem:[#allocation5 + $0x60] sm:$0xff]
      %v2053 = vld [vmem:[#allocation5 + $0x68] sm:$0xff]
      %v2054 = vld [vmem:[#allocation5 + $0x70] sm:$0xff]
      %v2055 = vld [vmem:[#allocation5 + $0x78] sm:$0xff]
      %2057 = vset.pattern.permute.xlu0 0
      %2058 = vperm.xlu0 %2057, %v1606
      %v2059 = vpop.permute.xlu0 %2058
      %2062 = vset.pattern.permute.xlu0 0
      %2063 = vperm.xlu0 %2062, %v1608
      %v2064 = vpop.permute.xlu0 %2063
      %2067 = vset.pattern.permute.xlu0 0
      %2068 = vperm.xlu0 %2067, %v1610
      %v2069 = vpop.permute.xlu0 %2068
      %2072 = vset.pattern.permute.xlu0 0
      %2073 = vperm.xlu0 %2072, %v1612
      %v2074 = vpop.permute.xlu0 %2073
      %2077 = vset.pattern.permute.xlu0 0
      %2078 = vperm.xlu0 %2077, %v1614
      %v2079 = vpop.permute.xlu0 %2078
      %2082 = vset.pattern.permute.xlu0 0
      %2083 = vperm.xlu0 %2082, %v1616
      %v2084 = vpop.permute.xlu0 %2083
      %2087 = vset.pattern.permute.xlu0 0
      %2088 = vperm.xlu0 %2087, %v1618
      %v2089 = vpop.permute.xlu0 %2088
      %2092 = vset.pattern.permute.xlu0 0
      %2093 = vperm.xlu0 %2092, %v1620
      %v2094 = vpop.permute.xlu0 %2093
      %2097 = vset.pattern.permute.xlu0 0
      %2098 = vperm.xlu0 %2097, %v1622
      %v2099 = vpop.permute.xlu0 %2098
      %2102 = vset.pattern.permute.xlu0 0
      %2103 = vperm.xlu0 %2102, %v1624
      %v2104 = vpop.permute.xlu0 %2103
      %2107 = vset.pattern.permute.xlu0 0
      %2108 = vperm.xlu0 %2107, %v1626
      %v2109 = vpop.permute.xlu0 %2108
      %2112 = vset.pattern.permute.xlu0 0
      %2113 = vperm.xlu0 %2112, %v1628
      %v2114 = vpop.permute.xlu0 %2113
      %2117 = vset.pattern.permute.xlu0 0
      %2118 = vperm.xlu0 %2117, %v1630
      %v2119 = vpop.permute.xlu0 %2118
      %2122 = vset.pattern.permute.xlu0 0
      %2123 = vperm.xlu0 %2122, %v1632
      %v2124 = vpop.permute.xlu0 %2123
      %2127 = vset.pattern.permute.xlu0 0
      %2128 = vperm.xlu0 %2127, %v1634
      %v2129 = vpop.permute.xlu0 %2128
      %2132 = vset.pattern.permute.xlu0 0
      %2133 = vperm.xlu0 %2132, %v1636
      %v2134 = vpop.permute.xlu0 %2133
      %v2136 = vmul.f32 %v2059, %v2040
      %v2137 = vmul.f32 %v2064, %v2041
      %v2138 = vmul.f32 %v2069, %v2042
      %v2139 = vmul.f32 %v2074, %v2043
      %v2140 = vmul.f32 %v2079, %v2044
      %v2141 = vmul.f32 %v2084, %v2045
      %v2142 = vmul.f32 %v2089, %v2046
      %v2143 = vmul.f32 %v2094, %v2047
      %v2144 = vmul.f32 %v2099, %v2048
      %v2145 = vmul.f32 %v2104, %v2049
      %v2146 = vmul.f32 %v2109, %v2050
      %v2147 = vmul.f32 %v2114, %v2051
      %v2148 = vmul.f32 %v2119, %v2052
      %v2149 = vmul.f32 %v2124, %v2053
      %v2150 = vmul.f32 %v2129, %v2054
      %v2151 = vmul.f32 %v2134, %v2055
      %v2152 = vadd.f32 %v2136, %v1933
      %v2153 = vadd.f32 %v2137, %v1936
      %v2154 = vadd.f32 %v2138, %v1941
      %v2155 = vadd.f32 %v2139, %v1944
      %v2156 = vadd.f32 %v2140, %v1949
      %v2157 = vadd.f32 %v2141, %v1952
      %v2158 = vadd.f32 %v2142, %v1957
      %v2159 = vadd.f32 %v2143, %v1960
      %v2160 = vadd.f32 %v2144, %v2010
      %v2161 = vadd.f32 %v2145, %v2013
      %v2162 = vadd.f32 %v2146, %v2018
      %v2163 = vadd.f32 %v2147, %v2021
      %v2164 = vadd.f32 %v2148, %v2026
      %v2165 = vadd.f32 %v2149, %v2029
      %v2166 = vadd.f32 %v2150, %v2034
      %v2167 = vadd.f32 %v2151, %v2037
      %2168 = vst.msk [vmem:[#allocation5] sm:$0xff] %vm1330, %v2152
      %2169 = vst.msk [vmem:[#allocation5 + $0x8] sm:$0xff] %vm1330, %v2153
      %2170 = vst.msk [vmem:[#allocation5 + $0x10] sm:$0xff] %vm1330, %v2154
      %2171 = vst.msk [vmem:[#allocation5 + $0x18] sm:$0xff] %vm1330, %v2155
      %2172 = vst.msk [vmem:[#allocation5 + $0x20] sm:$0xff] %vm1330, %v2156
      %2173 = vst.msk [vmem:[#allocation5 + $0x28] sm:$0xff] %vm1330, %v2157
      %2174 = vst.msk [vmem:[#allocation5 + $0x30] sm:$0xff] %vm1330, %v2158
      %2175 = vst.msk [vmem:[#allocation5 + $0x38] sm:$0xff] %vm1330, %v2159
      %2176 = vst.msk [vmem:[#allocation5 + $0x40] sm:$0xff] %vm1330, %v2160
      %2177 = vst.msk [vmem:[#allocation5 + $0x48] sm:$0xff] %vm1330, %v2161
      %2178 = vst.msk [vmem:[#allocation5 + $0x50] sm:$0xff] %vm1330, %v2162
      %2179 = vst.msk [vmem:[#allocation5 + $0x58] sm:$0xff] %vm1330, %v2163
      %2180 = vst.msk [vmem:[#allocation5 + $0x60] sm:$0xff] %vm1330, %v2164
      %2181 = vst.msk [vmem:[#allocation5 + $0x68] sm:$0xff] %vm1330, %v2165
      %2182 = vst.msk [vmem:[#allocation5 + $0x70] sm:$0xff] %vm1330, %v2166
      %2183 = vst.msk [vmem:[#allocation5 + $0x78] sm:$0xff] %vm1330, %v2167
      %2184 = vst.msk [vmem:[#allocation3] sm:$0xff] %vm1861, %v1573
      %2185 = vst.msk [vmem:[#allocation3 + $0x8] sm:$0xff] %vm1861, %v1574
      %2186 = vst.msk [vmem:[#allocation3 + $0x10] sm:$0xff] %vm1861, %v1575
      %2187 = vst.msk [vmem:[#allocation3 + $0x18] sm:$0xff] %vm1861, %v1576
      %2188 = vst.msk [vmem:[#allocation3 + $0x20] sm:$0xff] %vm1861, %v1577
      %2189 = vst.msk [vmem:[#allocation3 + $0x28] sm:$0xff] %vm1861, %v1578
      %2190 = vst.msk [vmem:[#allocation3 + $0x30] sm:$0xff] %vm1861, %v1579
      %2191 = vst.msk [vmem:[#allocation3 + $0x38] sm:$0xff] %vm1861, %v1580
      %2192 = vst.msk [vmem:[#allocation3 + $0x40] sm:$0xff] %vm1861, %v1581
      %2193 = vst.msk [vmem:[#allocation3 + $0x48] sm:$0xff] %vm1861, %v1582
      %2194 = vst.msk [vmem:[#allocation3 + $0x50] sm:$0xff] %vm1861, %v1583
      %2195 = vst.msk [vmem:[#allocation3 + $0x58] sm:$0xff] %vm1861, %v1584
      %2196 = vst.msk [vmem:[#allocation3 + $0x60] sm:$0xff] %vm1861, %v1585
      %2197 = vst.msk [vmem:[#allocation3 + $0x68] sm:$0xff] %vm1861, %v1586
      %2198 = vst.msk [vmem:[#allocation3 + $0x70] sm:$0xff] %vm1861, %v1587
      %2199 = vst.msk [vmem:[#allocation3 + $0x78] sm:$0xff] %vm1861, %v1588
      // Predicated region
      $region53: #{vjepa2_rope_attention_forward.4} parent=47 // pred_check
        %p2200 = pneg %p564
      $region54: #{vjepa2_rope_attention_forward.4} parent=47 // pred_check_branch
        %2202 = sbr.rel (%p2200) target = $region56
      $region55: #{vjepa2_rope_attention_forward.4} parent=47 // pred_region
        %v2203 = vld [vmem:[#allocation4] sm:$0xff]
        %v2204 = vld [vmem:[#allocation4 + $0x8] sm:$0xff]
        %v2205 = vld [vmem:[#allocation4 + $0x10] sm:$0xff]
        %v2206 = vld [vmem:[#allocation4 + $0x18] sm:$0xff]
        %v2207 = vld [vmem:[#allocation4 + $0x20] sm:$0xff]
        %v2208 = vld [vmem:[#allocation4 + $0x28] sm:$0xff]
        %v2209 = vld [vmem:[#allocation4 + $0x30] sm:$0xff]
        %v2210 = vld [vmem:[#allocation4 + $0x38] sm:$0xff]
        %v2211 = vld [vmem:[#allocation4 + $0x40] sm:$0xff]
        %v2212 = vld [vmem:[#allocation4 + $0x48] sm:$0xff]
        %v2213 = vld [vmem:[#allocation4 + $0x50] sm:$0xff]
        %v2214 = vld [vmem:[#allocation4 + $0x58] sm:$0xff]
        %v2215 = vld [vmem:[#allocation4 + $0x60] sm:$0xff]
        %v2216 = vld [vmem:[#allocation4 + $0x68] sm:$0xff]
        %v2217 = vld [vmem:[#allocation4 + $0x70] sm:$0xff]
        %v2218 = vld [vmem:[#allocation4 + $0x78] sm:$0xff]
        %v2219 = vrcp.pop %v2203
        %v2220 = vrcp.pop %v2204
        %v2221 = vrcp.pop %v2205
        %v2222 = vrcp.pop %v2206
        %v2223 = vrcp.pop %v2207
        %v2224 = vrcp.pop %v2208
        %v2225 = vrcp.pop %v2209
        %v2226 = vrcp.pop %v2210
        %v2227 = vrcp.pop %v2211
        %v2228 = vrcp.pop %v2212
        %v2229 = vrcp.pop %v2213
        %v2230 = vrcp.pop %v2214
        %v2231 = vrcp.pop %v2215
        %v2232 = vrcp.pop %v2216
        %v2233 = vrcp.pop %v2217
        %v2234 = vrcp.pop %v2218
        %v2235 = vld [vmem:[#allocation5] sm:$0xff]
        %v2236 = vld [vmem:[#allocation5 + $0x8] sm:$0xff]
        %v2237 = vld [vmem:[#allocation5 + $0x10] sm:$0xff]
        %v2238 = vld [vmem:[#allocation5 + $0x18] sm:$0xff]
        %v2239 = vld [vmem:[#allocation5 + $0x20] sm:$0xff]
        %v2240 = vld [vmem:[#allocation5 + $0x28] sm:$0xff]
        %v2241 = vld [vmem:[#allocation5 + $0x30] sm:$0xff]
        %v2242 = vld [vmem:[#allocation5 + $0x38] sm:$0xff]
        %2244 = vset.pattern.permute.xlu0 0
        %2245 = vperm.xlu0 %2244, %v2219
        %v2246 = vpop.permute.xlu0 %2245
        %2249 = vset.pattern.permute.xlu0 0
        %2250 = vperm.xlu0 %2249, %v2220
        %v2251 = vpop.permute.xlu0 %2250
        %2254 = vset.pattern.permute.xlu0 0
        %2255 = vperm.xlu0 %2254, %v2221
        %v2256 = vpop.permute.xlu0 %2255
        %2259 = vset.pattern.permute.xlu0 0
        %2260 = vperm.xlu0 %2259, %v2222
        %v2261 = vpop.permute.xlu0 %2260
        %2264 = vset.pattern.permute.xlu0 0
        %2265 = vperm.xlu0 %2264, %v2223
        %v2266 = vpop.permute.xlu0 %2265
        %2269 = vset.pattern.permute.xlu0 0
        %2270 = vperm.xlu0 %2269, %v2224
        %v2271 = vpop.permute.xlu0 %2270
        %2274 = vset.pattern.permute.xlu0 0
        %2275 = vperm.xlu0 %2274, %v2225
        %v2276 = vpop.permute.xlu0 %2275
        %2279 = vset.pattern.permute.xlu0 0
        %2280 = vperm.xlu0 %2279, %v2226
        %v2281 = vpop.permute.xlu0 %2280
        %v2283 = vmul.f32 %v2235, %v2246
        %v2284 = vmul.f32 %v2236, %v2251
        %v2285 = vmul.f32 %v2237, %v2256
        %v2286 = vmul.f32 %v2238, %v2261
        %v2287 = vmul.f32 %v2239, %v2266
        %v2288 = vmul.f32 %v2240, %v2271
        %v2289 = vmul.f32 %v2241, %v2276
        %v2290 = vmul.f32 %v2242, %v2281
        %2291 = vst.msk [vmem:[%s561] sm:$0xff] %vm1330, %v2283
        %2292 = vst.msk [vmem:[%s561 + $0x8] sm:$0xff] %vm1330, %v2284
        %2293 = vst.msk [vmem:[%s561 + $0x10] sm:$0xff] %vm1330, %v2285
        %2294 = vst.msk [vmem:[%s561 + $0x18] sm:$0xff] %vm1330, %v2286
        %2295 = vst.msk [vmem:[%s561 + $0x20] sm:$0xff] %vm1330, %v2287
        %2296 = vst.msk [vmem:[%s561 + $0x28] sm:$0xff] %vm1330, %v2288
        %2297 = vst.msk [vmem:[%s561 + $0x30] sm:$0xff] %vm1330, %v2289
        %2298 = vst.msk [vmem:[%s561 + $0x38] sm:$0xff] %vm1330, %v2290
        %s2299 = scalar_lea.vmem [#allocation5], 64
        %v2300 = vld [vmem:[%s2299] sm:$0xff]
        %v2301 = vld [vmem:[%s2299 + $0x8] sm:$0xff]
        %v2302 = vld [vmem:[%s2299 + $0x10] sm:$0xff]
        %v2303 = vld [vmem:[%s2299 + $0x18] sm:$0xff]
        %v2304 = vld [vmem:[%s2299 + $0x20] sm:$0xff]
        %v2305 = vld [vmem:[%s2299 + $0x28] sm:$0xff]
        %v2306 = vld [vmem:[%s2299 + $0x30] sm:$0xff]
        %v2307 = vld [vmem:[%s2299 + $0x38] sm:$0xff]
        %2309 = vset.pattern.permute.xlu0 0
        %2310 = vperm.xlu0 %2309, %v2227
        %v2311 = vpop.permute.xlu0 %2310
        %2314 = vset.pattern.permute.xlu0 0
        %2315 = vperm.xlu0 %2314, %v2228
        %v2316 = vpop.permute.xlu0 %2315
        %2319 = vset.pattern.permute.xlu0 0
        %2320 = vperm.xlu0 %2319, %v2229
        %v2321 = vpop.permute.xlu0 %2320
        %2324 = vset.pattern.permute.xlu0 0
        %2325 = vperm.xlu0 %2324, %v2230
        %v2326 = vpop.permute.xlu0 %2325
        %2329 = vset.pattern.permute.xlu0 0
        %2330 = vperm.xlu0 %2329, %v2231
        %v2331 = vpop.permute.xlu0 %2330
        %2334 = vset.pattern.permute.xlu0 0
        %2335 = vperm.xlu0 %2334, %v2232
        %v2336 = vpop.permute.xlu0 %2335
        %2339 = vset.pattern.permute.xlu0 0
        %2340 = vperm.xlu0 %2339, %v2233
        %v2341 = vpop.permute.xlu0 %2340
        %2344 = vset.pattern.permute.xlu0 0
        %2345 = vperm.xlu0 %2344, %v2234
        %v2346 = vpop.permute.xlu0 %2345
        %v2348 = vmul.f32 %v2300, %v2311
        %v2349 = vmul.f32 %v2301, %v2316
        %v2350 = vmul.f32 %v2302, %v2321
        %v2351 = vmul.f32 %v2303, %v2326
        %v2352 = vmul.f32 %v2304, %v2331
        %v2353 = vmul.f32 %v2305, %v2336
        %v2354 = vmul.f32 %v2306, %v2341
        %v2355 = vmul.f32 %v2307, %v2346
        %2364 = vrot.lane.b32.xlu0 %v2348, 64
        %v2365 = vpop.permute.xlu0 %2364
        %2366 = vrot.lane.b32.xlu0 %v2349, 64
        %v2367 = vpop.permute.xlu0 %2366
        %2368 = vrot.lane.b32.xlu0 %v2350, 64
        %v2369 = vpop.permute.xlu0 %2368
        %2370 = vrot.lane.b32.xlu0 %v2351, 64
        %v2371 = vpop.permute.xlu0 %2370
        %2372 = vrot.lane.b32.xlu0 %v2352, 64
        %v2373 = vpop.permute.xlu0 %2372
        %2374 = vrot.lane.b32.xlu0 %v2353, 64
        %v2375 = vpop.permute.xlu0 %2374
        %2376 = vrot.lane.b32.xlu0 %v2354, 64
        %v2377 = vpop.permute.xlu0 %2376
        %2378 = vrot.lane.b32.xlu0 %v2355, 64
        %v2379 = vpop.permute.xlu0 %2378
        %2388 = vst.msk [vmem:[%s561] sm:$0xff] %vm1017, %v2365
        %2389 = vst.msk [vmem:[%s561 + $0x8] sm:$0xff] %vm1017, %v2367
        %2390 = vst.msk [vmem:[%s561 + $0x10] sm:$0xff] %vm1017, %v2369
        %2391 = vst.msk [vmem:[%s561 + $0x18] sm:$0xff] %vm1017, %v2371
        %2392 = vst.msk [vmem:[%s561 + $0x20] sm:$0xff] %vm1017, %v2373
        %2393 = vst.msk [vmem:[%s561 + $0x28] sm:$0xff] %vm1017, %v2375
        %2394 = vst.msk [vmem:[%s561 + $0x30] sm:$0xff] %vm1017, %v2377
        %2395 = vst.msk [vmem:[%s561 + $0x38] sm:$0xff] %vm1017, %v2379
      $region56: #{vjepa2_rope_attention_forward.4} parent=47 // pred_fallthru
        _
      %s2396 = smul.u32 8, %s26
      %p2397 = scmp.lt.s32.totalorder %s24, 1
      %s2398 = scalar_select %p2397, %s24, 1
      %p2399 = scmp.lt.s32.totalorder %s2396, 7
      %s2400 = scalar_select %p2399, %s2396, 7
      %p2401 = scmp.lt.s32.totalorder %s25, 0
      %s2402 = scalar_select %p2401, %s25, 0
      %s2403 = sadd.s32 %s2402, %s2400
      %s2404 = smul.addr %s2398, 8
      %s2405 = sadd.s32 %s2403, %s2404
      %s2406 = smul.addr %s2405, 8
      %s2407 = scalar_lea.vmem %s7, %s2406
      // Predicated region
      $region57: #{vjepa2_rope_attention_forward.4} parent=47 // pred_check
        %p2408 = pneg %p260
      $region58: #{vjepa2_rope_attention_forward.4} parent=47 // pred_check_branch
        %2410 = sbr.rel (%p2408) target = $region60
      $region59: #{vjepa2_rope_attention_forward.4} parent=47 // pred_region
        %s2411 = smul.u32 8, %s26
      $region60: #{vjepa2_rope_attention_forward.4} parent=47 // pred_fallthru
        _
    $region48: #{vjepa2_rope_attention_forward.4} parent=5 // pred_fallthru
      _
    %p2412 = scmp.le.s32.totalorder 2, %s13
    // Predicated region
    $region61: #{vjepa2_rope_attention_forward.4} parent=5 // pred_check
      %p2413 = pneg %p2412
    $region62: #{vjepa2_rope_attention_forward.4} parent=5 // pred_check_branch
      %2415 = sbr.rel (%p2413) target = $region64
    $region63: #{vjepa2_rope_attention_forward.4} parent=5 // pred_region
      %s2416 = ssub.s32 %s13, 2
      // Predicated region
      $region65: #{vjepa2_rope_attention_forward.4} parent=63 // pred_check
        %p2417 = pneg %p266
      $region66: #{vjepa2_rope_attention_forward.4} parent=63 // pred_check_branch
        %2419 = sbr.rel (%p2417) target = $region68
      $region67: #{vjepa2_rope_attention_forward.4} parent=63 // pred_region
        %s2420 = smul.u32 8, %s30
        %p2421 = scmp.lt.s32.totalorder %s28, 1
        %s2422 = scalar_select %p2421, %s28, 1
        %p2423 = scmp.lt.s32.totalorder %s2420, 7
        %s2424 = scalar_select %p2423, %s2420, 7
        %p2425 = scmp.lt.s32.totalorder %s29, 0
        %s2426 = scalar_select %p2425, %s29, 0
        %s2427 = sadd.s32 %s2426, %s2424
        %s2428 = smul.addr %s2422, 8
        %s2429 = sadd.s32 %s2427, %s2428
        %s2430 = smul.addr %s2429, 8
        %s2431 = scalar_lea.vmem %s7, %s2430
      $region68: #{vjepa2_rope_attention_forward.4} parent=63 // pred_fallthru
        _
    $region64: #{vjepa2_rope_attention_forward.4} parent=5 // pred_fallthru
      _
  $region6: #{vjepa2_rope_attention_forward.4} parent=0 // loop_footer
    %s17 = sadd.s32 1, %s13
  $region7: #{vjepa2_rope_attention_forward.4} parent=0 // loop_footer_branch
    %12 = sbr.rel target = $region3
  $region8: #{vjepa2_rope_attention_forward.4} parent=0 // loop_exit
    _

</llo_original>
